<compile_context>
chip_gen: v5e
topology: v5e:2x2
jax: 0.10.0
libtpu: 0.0.40
codegen_flags: <defaults>
</compile_context>

<pallas_src>
import numpy as np
import jax
import jax.numpy as jnp
from jax import lax
from jax.experimental import pallas as pl
from jax.experimental.pallas import tpu as pltpu

# ----------------------------- model config ---------------------------------
FILTER_SIZES = [2, 3, 4]
N_FILTERS    = 16          # n_filters (scaled down from 100 for a small demo)
VOCAB_DIM    = 50
EMBED_DIM    = 16
HIDDEN_DIM   = 32
OUTPUT_DIM   = 5
SEQ_LEN      = 12
BATCH        = 8

KMAX     = max(FILTER_SIZES)
# Padding so that every filter's valid conv windows fit inside one shared
# KMAX-wide unfold of the padded sequence (taps stored at the start of the
# KMAX window, zero-extended).
PAD_CONV = max(max(K // 2, KMAX - K + K // 2) for K in FILTER_SIZES)   # = 3
W_CONV   = SEQ_LEN + 2 * PAD_CONV - KMAX + 1                           # = 15
NF_TOT   = len(FILTER_SIZES) * N_FILTERS                               # = 48
L_FEAT   = NF_TOT + 2 * HIDDEN_DIM                                     # = 112
L_HID    = L_FEAT // 2                                                 # = 56


# ----------------------------- fused Pallas kernel ---------------------------
def cnn_bilstm_fused_kernel(ids_ref, emb_ref, cw_ref, cb_ref,
                            wih_ref, whh_ref, lb_ref,
                            w1_ref, b1_ref, w2_ref, b2_ref,
                            out_ref, xpad_sc):
    S, B, E, H, F = SEQ_LEN, BATCH, EMBED_DIM, HIDDEN_DIM, N_FILTERS
    V = VOCAB_DIM

    # ---- embedding gather as an exact one-hot matmul --------------------
    ids = ids_ref[...]                                            # (S*B, 1) i32
    onehot = (lax.broadcasted_iota(jnp.int32, (S * B, V), 1) == ids
              ).astype(jnp.float32)                               # (S*B, V)
    x = jnp.dot(onehot, emb_ref[...],
                preferred_element_type=jnp.float32)               # (S*B, E)

    # ---- CNN branch: zero-pad in time, unfold, ONE matmul ----------------
    xpad_sc[...] = jnp.zeros_like(xpad_sc)
    xpad_sc[PAD_CONV * B:(PAD_CONV + S) * B, :] = x               # rows aligned to 8
    u = jnp.concatenate(
        [xpad_sc[i * B:(i + W_CONV) * B, :] for i in range(KMAX)],
        axis=1)                                                   # (W*B, KMAX*E)
    conv = jnp.dot(u, cw_ref[...],
                   preferred_element_type=jnp.float32)            # (W*B, 3F)

    # max-pool over each filter's valid time windows, + bias, tanh
    parts = []
    for m, K in enumerate(FILTER_SIZES):
        p = K // 2
        w_lo = PAD_CONV - p
        w_hi = PAD_CONV + S + p - K          # inclusive
        bank = conv[:, m * F:(m + 1) * F]    # (W*B, F)
        acc = bank[w_lo * B:(w_lo + 1) * B, :]
        for w in range(w_lo + 1, w_hi + 1):
            acc = jnp.maximum(acc, bank[w * B:(w + 1) * B, :])
        parts.append(acc)
    cnn_x = jnp.tanh(jnp.concatenate(parts, axis=1) + cb_ref[...])   # (B, 3F)

    # ---- BiLSTM: hoisted input projection, fused fwd/bwd recurrence ------
    # gx holds the input contribution + bias for both directions: (S*B, 8H)
    gx = jnp.dot(x, wih_ref[...],
                 preferred_element_type=jnp.float32) + lb_ref[...]

    h_f = jnp.zeros((B, H), jnp.float32)
    c_f = jnp.zeros((B, H), jnp.float32)
    h_b = jnp.zeros((B, H), jnp.float32)
    c_b = jnp.zeros((B, H), jnp.float32)
    hf_list = [None] * S
    hb_list = [None] * S

    for t in range(S):                       # fully unrolled (S is static & tiny)
        tb = S - 1 - t                       # backward direction's time index
        gx_t = jnp.concatenate(
            [gx[t * B:(t + 1) * B, 0:4 * H],
             gx[tb * B:(tb + 1) * B, 4 * H:8 * H]], axis=1)       # (B, 8H)
        gates = gx_t + jnp.dot(
            jnp.concatenate([h_f, h_b], axis=1), whh_ref[...],
            preferred_element_type=jnp.float32)                   # (B, 8H)

        i_f = jax.nn.sigmoid(gates[:, 0 * H:1 * H])
        f_f = jax.nn.sigmoid(gates[:, 1 * H:2 * H])
        g_f = jnp.tanh(      gates[:, 2 * H:3 * H])
        o_f = jax.nn.sigmoid(gates[:, 3 * H:4 * H])
        i_b = jax.nn.sigmoid(gates[:, 4 * H:5 * H])
        f_b = jax.nn.sigmoid(gates[:, 5 * H:6 * H])
        g_b = jnp.tanh(      gates[:, 6 * H:7 * H])
        o_b = jax.nn.sigmoid(gates[:, 7 * H:8 * H])

        c_f = f_f * c_f + i_f * g_f
        h_f = o_f * jnp.tanh(c_f)
        c_b = f_b * c_b + i_b * g_b
        h_b = o_b * jnp.tanh(c_b)

        hf_list[t] = h_f
        hb_list[tb] = h_b                    # in-kernel reversal via indexing

    # ---- attention over time (VPU/lane reductions, no N=1 matmul) --------
    # merged_state = cat(hidden[-1] (backward final), hidden[-2] (forward final))
    merged = jnp.concatenate([h_b, h_f], axis=1)                  # (B, 2H)
    hs_list = [jnp.concatenate([hf_list[t], hb_list[t]], axis=1)  # (B, 2H)
               for t in range(S)]
    score_cols = [jnp.sum(hs_list[t] * merged, axis=1, keepdims=True)
                  for t in range(S)]                              # each (B, 1)
    scores = jnp.concatenate(score_cols, axis=1)                  # (B, S)
    smax = jnp.max(scores, axis=1, keepdims=True)
    e = jnp.exp(scores - smax)
    den = jnp.sum(e, axis=1, keepdims=True)
    wgt = e * pl.reciprocal(den, approx=True)                     # softmax (B, S)

    attn = hs_list[0] * wgt[:, 0:1]
    for t in range(1, S):
        attn = attn + hs_list[t] * wgt[:, t:t + 1]                # (B, 2H)

    # ---- MLP head --------------------------------------------------------
    feat = jnp.concatenate([cnn_x, attn], axis=1)                 # (B, 3F + 2H)
    h1 = jnp.dot(jnp.tanh(feat), w1_ref[...],
                 preferred_element_type=jnp.float32) + b1_ref[...]
    out_ref[...] = jnp.dot(jnp.tanh(h1), w2_ref[...],
                           preferred_element_type=jnp.float32) + b2_ref[...]


# ----------------------------- wrapper ---------------------------------------
def _full_spec(shape):
    return pl.BlockSpec(shape, lambda i, _s=shape: (0,) * len(_s))


def cnn_bilstm_forward(token_ids, packed):
    """token_ids: (seq_len, batch) int32 -> logits (batch, output_dim)."""
    S, B = token_ids.shape
    E, H, F = EMBED_DIM, HIDDEN_DIM, N_FILTERS
    ids_flat = token_ids.reshape(S * B, 1).astype(jnp.int32)

    return pl.pallas_call(
        cnn_bilstm_fused_kernel,
        out_shape=jax.ShapeDtypeStruct((B, OUTPUT_DIM), jnp.float32),
        grid=(1,),
        in_specs=[
            _full_spec((S * B, 1)),                 # token ids
            _full_spec((VOCAB_DIM, E)),             # embedding table
            _full_spec((KMAX * E, NF_TOT)),         # packed conv weight
            _full_spec((1, NF_TOT)),                # packed conv bias
            _full_spec((E, 8 * H)),                 # W_ih (fwd|bwd)
            _full_spec((2 * H, 8 * H)),             # W_hh block-diag (fwd|bwd)
            _full_spec((1, 8 * H)),                 # lstm bias (fwd|bwd)
            _full_spec((L_FEAT, L_HID)),            # hidden2label1 weight
            _full_spec((1, L_HID)),                 # hidden2label1 bias
            _full_spec((L_HID, OUTPUT_DIM)),        # hidden2label2 weight
            _full_spec((1, OUTPUT_DIM)),            # hidden2label2 bias
        ],
        out_specs=_full_spec((B, OUTPUT_DIM)),
        scratch_shapes=[
            pltpu.VMEM(((S + 2 * PAD_CONV) * B, E), jnp.float32),  # padded x
        ],
        compiler_params=pltpu.CompilerParams(
            dimension_semantics=("arbitrary",)),
    )(ids_flat, packed["emb"], packed["conv_w"], packed["conv_b"],
      packed["wih"], packed["whh"], packed["lstm_b"],
      packed["w1"], packed["b1"], packed["w2"], packed["b2"])


# ------------------- parameter packing (done once, outside kernel) -----------
def pack_params(p):
    E, H, F = EMBED_DIM, HIDDEN_DIM, N_FILTERS
    # conv: taps placed at the start of a KMAX window, zero-extended; banks
    # concatenated along the output-channel axis -> (KMAX*E, 3F).
    blocks = []
    for K, w in zip(FILTER_SIZES, p["conv_w"]):          # w: (K, E, F)
        if K < KMAX:
            w = jnp.concatenate(
                [w, jnp.zeros((KMAX - K, E, F), w.dtype)], axis=0)
        blocks.append(w.reshape(KMAX * E, F))
    packed = {
        "emb":    p["embed"],
        "conv_w": jnp.concatenate(blocks, axis=1),                       # (KMAX*E, 3F)
        "conv_b": jnp.concatenate(p["conv_b"], axis=1),                  # (1, 3F)
        "wih":    jnp.concatenate([p["wih_f"], p["wih_b"]], axis=1),     # (E, 8H)
        "whh":    jnp.concatenate([
            jnp.concatenate([p["whh_f"], jnp.zeros_like(p["whh_f"])], axis=1),
            jnp.concatenate([jnp.zeros_like(p["whh_b"]), p["whh_b"]], axis=1),
        ], axis=0),                                                      # (2H, 8H)
        "lstm_b": jnp.concatenate([p["b_f"], p["b_b"]], axis=1),         # (1, 8H)
        "w1": p["w1t"], "b1": p["b1"], "w2": p["w2t"], "b2": p["b2"],
    }
    return packed


# ----------------------------- pure-JAX reference ----------------------------
def reference_forward(token_ids, params):
    embed = jnp.take(params["embed"], token_ids, axis=0)
    x_bf = jnp.transpose(embed, (1, 0, 2))
    S = token_ids.shape[0]
    cnn_feats = []
    for K, w, b in zip(FILTER_SIZES, params["conv_w"], params["conv_b"]):
        pad = K // 2
        xp = jnp.pad(x_bf, ((0, 0), (pad, pad), (0, 0)))
        L_out = S + 2 * pad - K + 1
        acc = sum(jnp.einsum("ble,ef->blf", xp[:, k:k + L_out, :], w[k])
                  for k in range(K)) + b
        cnn_feats.append(jnp.tanh(jnp.max(acc, axis=1)))
    cnn_x = jnp.concatenate(cnn_feats, axis=1)

    H = HIDDEN_DIM

    def run_dir(x, wih_t, whh_t, bias):
        def step(carry, xt):
            h, c = carry
            gates = xt @ wih_t + h @ whh_t + bias
            i = jax.nn.sigmoid(gates[:, :H])
            f = jax.nn.sigmoid(gates[:, H:2 * H])
            g = jnp.tanh(gates[:, 2 * H:3 * H])
            o = jax.nn.sigmoid(gates[:, 3 * H:])
            c = f * c + i * g
            h = o * jnp.tanh(c)
            return (h, c), h
        z = jnp.zeros((x.shape[1], H), jnp.float32)
        (hf, _), hs = lax.scan(step, (z, z), x)
        return hs, hf

    hs_f, hfin_f = run_dir(embed, params["wih_f"], params["whh_f"], params["b_f"])
    hs_b_rev, hfin_b = run_dir(embed[::-1], params["wih_b"], params["whh_b"],
                               params["b_b"])
    hs_b = hs_b_rev[::-1]
    out = jnp.concatenate([hs_f, hs_b], axis=2)
    merged = jnp.concatenate([hfin_b, hfin_f], axis=1)
    lo = jnp.transpose(out, (1, 0, 2))
    scores = jnp.einsum("bsh,bh->bs", lo, merged)
    w = jax.nn.softmax(scores, axis=1)
    attn = jnp.einsum("bsh,bs->bh", lo, w)
    feat = jnp.concatenate([cnn_x, attn], axis=1)
    h1 = jnp.tanh(feat) @ params["w1t"] + params["b1"]
    return jnp.tanh(h1) @ params["w2t"] + params["b2"]


# ----------------------------- parameters ------------------------------------
def init_params(key):
    ks = jax.random.split(key, 32)
    H, E = HIDDEN_DIM, EMBED_DIM
    L, L2 = L_FEAT, L_HID
    p = {}
    p["embed"] = 0.1 * jax.random.normal(ks[0], (VOCAB_DIM, E), jnp.float32)
    p["conv_w"], p["conv_b"] = [], []
    for i, K in enumerate(FILTER_SIZES):
        s = 1.0 / np.sqrt(K * E)
        # kernel layout (K, E, F)  ==  W_pt[f, 0, k, e] -> [k, e, f]
        p["conv_w"].append(s * jax.random.normal(ks[1 + i], (K, E, N_FILTERS),
                                                 jnp.float32))
        p["conv_b"].append(s * jax.random.normal(ks[4 + i], (1, N_FILTERS),
                                                 jnp.float32))
    sh = 1.0 / np.sqrt(H)
    # stored transposed: W_ih^T (E, 4H), W_hh^T (H, 4H); bias = b_ih + b_hh
    p["wih_f"] = sh * jax.random.normal(ks[8], (E, 4 * H), jnp.float32)
    p["whh_f"] = sh * jax.random.normal(ks[9], (H, 4 * H), jnp.float32)
    p["b_f"]   = sh * jax.random.normal(ks[10], (1, 4 * H), jnp.float32)
    p["wih_b"] = sh * jax.random.normal(ks[11], (E, 4 * H), jnp.float32)
    p["whh_b"] = sh * jax.random.normal(ks[12], (H, 4 * H), jnp.float32)
    p["b_b"]   = sh * jax.random.normal(ks[13], (1, 4 * H), jnp.float32)
    s1 = 1.0 / np.sqrt(L)
    p["w1t"] = s1 * jax.random.normal(ks[14], (L, L2), jnp.float32)
    p["b1"]  = s1 * jax.random.normal(ks[15], (1, L2), jnp.float32)
    s2 = 1.0 / np.sqrt(L2)
    p["w2t"] = s2 * jax.random.normal(ks[16], (L2, OUTPUT_DIM), jnp.float32)
    p["b2"]  = s2 * jax.random.normal(ks[17], (1, OUTPUT_DIM), jnp.float32)
    return p


# ----------------------------- main -------------------------------------------
if __name__ == "__main__":
    key = jax.random.PRNGKey(0)
    k_inp, k_par = jax.random.split(key)
    token_ids = jax.random.randint(k_inp, (SEQ_LEN, BATCH), 0, VOCAB_DIM,
                                   dtype=jnp.int32)
    params = init_params(k_par)
    packed = pack_params(params)          # one-time weight packing (outside kernel)

    logits = jax.block_until_ready(cnn_bilstm_forward(token_ids, packed))
    ref = jax.block_until_ready(reference_forward(token_ids, params))

    assert logits.shape == (BATCH, OUTPUT_DIM)
    np.testing.assert_allclose(np.asarray(logits), np.asarray(ref),
                               rtol=5e-3, atol=5e-3)
    print("KERNEL_OK")
</pallas_src>

<mosaic_0001>
module attributes {stable_mosaic.version = 11 : i64} {
  func.func @cnn_bilstm_fused_kernel(%arg0: i32, %arg1: memref<96x1xi32, #tpu.memory_space<vmem>>, %arg2: memref<50x16xf32, #tpu.memory_space<vmem>>, %arg3: memref<64x48xf32, #tpu.memory_space<vmem>>, %arg4: memref<1x48xf32, #tpu.memory_space<vmem>>, %arg5: memref<16x256xf32, #tpu.memory_space<vmem>>, %arg6: memref<64x256xf32, #tpu.memory_space<vmem>>, %arg7: memref<1x256xf32, #tpu.memory_space<vmem>>, %arg8: memref<112x56xf32, #tpu.memory_space<vmem>>, %arg9: memref<1x56xf32, #tpu.memory_space<vmem>>, %arg10: memref<56x5xf32, #tpu.memory_space<vmem>>, %arg11: memref<1x5xf32, #tpu.memory_space<vmem>>, %arg12: memref<8x5xf32, #tpu.memory_space<vmem>>, %arg13: memref<144x16xf32, #tpu.memory_space<vmem>>) attributes {dimension_semantics = [#tpu.dimension_semantics<arbitrary>], iteration_bounds = array<i64: 1>, scalar_prefetch = 0 : i64, scratch_operands = 1 : i64, tpu.core_type = #tpu.core_type<tc>, window_params = [{pipeline_mode = #tpu.pipeline_mode<synchronous>, transform_indices = @transform_0, window_bounds = array<i64: 96, 1>}, {pipeline_mode = #tpu.pipeline_mode<synchronous>, transform_indices = @transform_1, window_bounds = array<i64: 50, 16>}, {pipeline_mode = #tpu.pipeline_mode<synchronous>, transform_indices = @transform_2, window_bounds = array<i64: 64, 48>}, {pipeline_mode = #tpu.pipeline_mode<synchronous>, transform_indices = @transform_3, window_bounds = array<i64: 1, 48>}, {pipeline_mode = #tpu.pipeline_mode<synchronous>, transform_indices = @transform_4, window_bounds = array<i64: 16, 256>}, {pipeline_mode = #tpu.pipeline_mode<synchronous>, transform_indices = @transform_5, window_bounds = array<i64: 64, 256>}, {pipeline_mode = #tpu.pipeline_mode<synchronous>, transform_indices = @transform_6, window_bounds = array<i64: 1, 256>}, {pipeline_mode = #tpu.pipeline_mode<synchronous>, transform_indices = @transform_7, window_bounds = array<i64: 112, 56>}, {pipeline_mode = #tpu.pipeline_mode<synchronous>, transform_indices = @transform_8, window_bounds = array<i64: 1, 56>}, {pipeline_mode = #tpu.pipeline_mode<synchronous>, transform_indices = @transform_9, window_bounds = array<i64: 56, 5>}, {pipeline_mode = #tpu.pipeline_mode<synchronous>, transform_indices = @transform_10, window_bounds = array<i64: 1, 5>}, {pipeline_mode = #tpu.pipeline_mode<synchronous>, transform_indices = @transform_11, window_bounds = array<i64: 8, 5>}]} {
    %c0 = arith.constant 0 : index
    %c0_0 = arith.constant 0 : index
    %0 = vector.load %arg1[%c0, %c0_0] : memref<96x1xi32, #tpu.memory_space<vmem>>, vector<96x1xi32>
    %1 = tpu.iota {dimensions = array<i32: 1>} : vector<96x50xi32>
    %2 = vector.broadcast %0 : vector<96x1xi32> to vector<96x50xi32>
    %3 = arith.cmpi eq, %1, %2 : vector<96x50xi32>
    %4 = arith.extui %3 : vector<96x50xi1> to vector<96x50xi32>
    %5 = arith.sitofp %4 : vector<96x50xi32> to vector<96x50xf32>
    %c0_1 = arith.constant 0 : index
    %c0_2 = arith.constant 0 : index
    %6 = vector.load %arg2[%c0_1, %c0_2] : memref<50x16xf32, #tpu.memory_space<vmem>>, vector<50x16xf32>
    %cst = arith.constant dense<0.000000e+00> : vector<96x16xf32>
    %7 = tpu.matmul %5, %6, %cst {dimension_numbers = #tpu.dot_dimension_numbers<[1], [0], [0], [1], [0, 0, 1, 1], [], []>} : vector<96x50xf32>, vector<50x16xf32>, vector<96x16xf32> -> vector<96x16xf32>
    %cst_3 = arith.constant 0.000000e+00 : f32
    %8 = vector.broadcast %cst_3 : f32 to vector<144x16xf32>
    %c0_4 = arith.constant 0 : index
    %c0_5 = arith.constant 0 : index
    %9 = vector.load %arg13[%c0_4, %c0_5] : memref<144x16xf32, #tpu.memory_space<vmem>>, vector<144x16xf32>
    tpu.vector_store %arg13[%c0_4, %c0_5], %8 {strides = array<i32>} : memref<144x16xf32, #tpu.memory_space<vmem>>, vector<144x16xf32>,
    %c24 = arith.constant 24 : index
    %c0_6 = arith.constant 0 : index
    %10 = vector.load %arg13[%c24, %c0_6] : memref<144x16xf32, #tpu.memory_space<vmem>>, vector<96x16xf32>
    tpu.vector_store %arg13[%c24, %c0_6], %7 {strides = array<i32>} : memref<144x16xf32, #tpu.memory_space<vmem>>, vector<96x16xf32>,
    %c0_7 = arith.constant 0 : index
    %c0_8 = arith.constant 0 : index
    %11 = vector.load %arg13[%c0_7, %c0_8] : memref<144x16xf32, #tpu.memory_space<vmem>>, vector<120x16xf32>
    %c8 = arith.constant 8 : index
    %c0_9 = arith.constant 0 : index
    %12 = vector.load %arg13[%c8, %c0_9] : memref<144x16xf32, #tpu.memory_space<vmem>>, vector<120x16xf32>
    %c16 = arith.constant 16 : index
    %c0_10 = arith.constant 0 : index
    %13 = vector.load %arg13[%c16, %c0_10] : memref<144x16xf32, #tpu.memory_space<vmem>>, vector<120x16xf32>
    %c24_11 = arith.constant 24 : index
    %c0_12 = arith.constant 0 : index
    %14 = vector.load %arg13[%c24_11, %c0_12] : memref<144x16xf32, #tpu.memory_space<vmem>>, vector<120x16xf32>
    %15 = tpu.concatenate %11, %12, %13, %14 in 1 : vector<120x16xf32>, vector<120x16xf32>, vector<120x16xf32>, vector<120x16xf32> -> vector<120x64xf32>
    %c0_13 = arith.constant 0 : index
    %c0_14 = arith.constant 0 : index
    %16 = vector.load %arg3[%c0_13, %c0_14] : memref<64x48xf32, #tpu.memory_space<vmem>>, vector<64x48xf32>
    %cst_15 = arith.constant dense<0.000000e+00> : vector<120x48xf32>
    %17 = tpu.matmul %15, %16, %cst_15 {dimension_numbers = #tpu.dot_dimension_numbers<[1], [0], [0], [1], [0, 0, 1, 1], [], []>} : vector<120x64xf32>, vector<64x48xf32>, vector<120x48xf32> -> vector<120x48xf32>
    %18 = vector.extract_strided_slice %17 {offsets = [0, 0], sizes = [120, 16], strides = [1, 1]} : vector<120x48xf32> to vector<120x16xf32>
    %19 = vector.extract_strided_slice %18 {offsets = [16, 0], sizes = [8, 16], strides = [1, 1]} : vector<120x16xf32> to vector<8x16xf32>
    %20 = vector.extract_strided_slice %18 {offsets = [24, 0], sizes = [8, 16], strides = [1, 1]} : vector<120x16xf32> to vector<8x16xf32>
    %21 = arith.maximumf %19, %20 : vector<8x16xf32>
    %22 = vector.extract_strided_slice %18 {offsets = [32, 0], sizes = [8, 16], strides = [1, 1]} : vector<120x16xf32> to vector<8x16xf32>
    %23 = arith.maximumf %21, %22 : vector<8x16xf32>
    %24 = vector.extract_strided_slice %18 {offsets = [40, 0], sizes = [8, 16], strides = [1, 1]} : vector<120x16xf32> to vector<8x16xf32>
    %25 = arith.maximumf %23, %24 : vector<8x16xf32>
    %26 = vector.extract_strided_slice %18 {offsets = [48, 0], sizes = [8, 16], strides = [1, 1]} : vector<120x16xf32> to vector<8x16xf32>
    %27 = arith.maximumf %25, %26 : vector<8x16xf32>
    %28 = vector.extract_strided_slice %18 {offsets = [56, 0], sizes = [8, 16], strides = [1, 1]} : vector<120x16xf32> to vector<8x16xf32>
    %29 = arith.maximumf %27, %28 : vector<8x16xf32>
    %30 = vector.extract_strided_slice %18 {offsets = [64, 0], sizes = [8, 16], strides = [1, 1]} : vector<120x16xf32> to vector<8x16xf32>
    %31 = arith.maximumf %29, %30 : vector<8x16xf32>
    %32 = vector.extract_strided_slice %18 {offsets = [72, 0], sizes = [8, 16], strides = [1, 1]} : vector<120x16xf32> to vector<8x16xf32>
    %33 = arith.maximumf %31, %32 : vector<8x16xf32>
    %34 = vector.extract_strided_slice %18 {offsets = [80, 0], sizes = [8, 16], strides = [1, 1]} : vector<120x16xf32> to vector<8x16xf32>
    %35 = arith.maximumf %33, %34 : vector<8x16xf32>
    %36 = vector.extract_strided_slice %18 {offsets = [88, 0], sizes = [8, 16], strides = [1, 1]} : vector<120x16xf32> to vector<8x16xf32>
    %37 = arith.maximumf %35, %36 : vector<8x16xf32>
    %38 = vector.extract_strided_slice %18 {offsets = [96, 0], sizes = [8, 16], strides = [1, 1]} : vector<120x16xf32> to vector<8x16xf32>
    %39 = arith.maximumf %37, %38 : vector<8x16xf32>
    %40 = vector.extract_strided_slice %18 {offsets = [104, 0], sizes = [8, 16], strides = [1, 1]} : vector<120x16xf32> to vector<8x16xf32>
    %41 = arith.maximumf %39, %40 : vector<8x16xf32>
    %42 = vector.extract_strided_slice %18 {offsets = [112, 0], sizes = [8, 16], strides = [1, 1]} : vector<120x16xf32> to vector<8x16xf32>
    %43 = arith.maximumf %41, %42 : vector<8x16xf32>
    %44 = vector.extract_strided_slice %17 {offsets = [0, 16], sizes = [120, 16], strides = [1, 1]} : vector<120x48xf32> to vector<120x16xf32>
    %45 = vector.extract_strided_slice %44 {offsets = [16, 0], sizes = [8, 16], strides = [1, 1]} : vector<120x16xf32> to vector<8x16xf32>
    %46 = vector.extract_strided_slice %44 {offsets = [24, 0], sizes = [8, 16], strides = [1, 1]} : vector<120x16xf32> to vector<8x16xf32>
    %47 = arith.maximumf %45, %46 : vector<8x16xf32>
    %48 = vector.extract_strided_slice %44 {offsets = [32, 0], sizes = [8, 16], strides = [1, 1]} : vector<120x16xf32> to vector<8x16xf32>
    %49 = arith.maximumf %47, %48 : vector<8x16xf32>
    %50 = vector.extract_strided_slice %44 {offsets = [40, 0], sizes = [8, 16], strides = [1, 1]} : vector<120x16xf32> to vector<8x16xf32>
    %51 = arith.maximumf %49, %50 : vector<8x16xf32>
    %52 = vector.extract_strided_slice %44 {offsets = [48, 0], sizes = [8, 16], strides = [1, 1]} : vector<120x16xf32> to vector<8x16xf32>
    %53 = arith.maximumf %51, %52 : vector<8x16xf32>
    %54 = vector.extract_strided_slice %44 {offsets = [56, 0], sizes = [8, 16], strides = [1, 1]} : vector<120x16xf32> to vector<8x16xf32>
    %55 = arith.maximumf %53, %54 : vector<8x16xf32>
    %56 = vector.extract_strided_slice %44 {offsets = [64, 0], sizes = [8, 16], strides = [1, 1]} : vector<120x16xf32> to vector<8x16xf32>
    %57 = arith.maximumf %55, %56 : vector<8x16xf32>
    %58 = vector.extract_strided_slice %44 {offsets = [72, 0], sizes = [8, 16], strides = [1, 1]} : vector<120x16xf32> to vector<8x16xf32>
    %59 = arith.maximumf %57, %58 : vector<8x16xf32>
    %60 = vector.extract_strided_slice %44 {offsets = [80, 0], sizes = [8, 16], strides = [1, 1]} : vector<120x16xf32> to vector<8x16xf32>
    %61 = arith.maximumf %59, %60 : vector<8x16xf32>
    %62 = vector.extract_strided_slice %44 {offsets = [88, 0], sizes = [8, 16], strides = [1, 1]} : vector<120x16xf32> to vector<8x16xf32>
    %63 = arith.maximumf %61, %62 : vector<8x16xf32>
    %64 = vector.extract_strided_slice %44 {offsets = [96, 0], sizes = [8, 16], strides = [1, 1]} : vector<120x16xf32> to vector<8x16xf32>
    %65 = arith.maximumf %63, %64 : vector<8x16xf32>
    %66 = vector.extract_strided_slice %44 {offsets = [104, 0], sizes = [8, 16], strides = [1, 1]} : vector<120x16xf32> to vector<8x16xf32>
    %67 = arith.maximumf %65, %66 : vector<8x16xf32>
    %68 = vector.extract_strided_slice %17 {offsets = [0, 32], sizes = [120, 16], strides = [1, 1]} : vector<120x48xf32> to vector<120x16xf32>
    %69 = vector.extract_strided_slice %68 {offsets = [8, 0], sizes = [8, 16], strides = [1, 1]} : vector<120x16xf32> to vector<8x16xf32>
    %70 = vector.extract_strided_slice %68 {offsets = [16, 0], sizes = [8, 16], strides = [1, 1]} : vector<120x16xf32> to vector<8x16xf32>
    %71 = arith.maximumf %69, %70 : vector<8x16xf32>
    %72 = vector.extract_strided_slice %68 {offsets = [24, 0], sizes = [8, 16], strides = [1, 1]} : vector<120x16xf32> to vector<8x16xf32>
    %73 = arith.maximumf %71, %72 : vector<8x16xf32>
    %74 = vector.extract_strided_slice %68 {offsets = [32, 0], sizes = [8, 16], strides = [1, 1]} : vector<120x16xf32> to vector<8x16xf32>
    %75 = arith.maximumf %73, %74 : vector<8x16xf32>
    %76 = vector.extract_strided_slice %68 {offsets = [40, 0], sizes = [8, 16], strides = [1, 1]} : vector<120x16xf32> to vector<8x16xf32>
    %77 = arith.maximumf %75, %76 : vector<8x16xf32>
    %78 = vector.extract_strided_slice %68 {offsets = [48, 0], sizes = [8, 16], strides = [1, 1]} : vector<120x16xf32> to vector<8x16xf32>
    %79 = arith.maximumf %77, %78 : vector<8x16xf32>
    %80 = vector.extract_strided_slice %68 {offsets = [56, 0], sizes = [8, 16], strides = [1, 1]} : vector<120x16xf32> to vector<8x16xf32>
    %81 = arith.maximumf %79, %80 : vector<8x16xf32>
    %82 = vector.extract_strided_slice %68 {offsets = [64, 0], sizes = [8, 16], strides = [1, 1]} : vector<120x16xf32> to vector<8x16xf32>
    %83 = arith.maximumf %81, %82 : vector<8x16xf32>
    %84 = vector.extract_strided_slice %68 {offsets = [72, 0], sizes = [8, 16], strides = [1, 1]} : vector<120x16xf32> to vector<8x16xf32>
    %85 = arith.maximumf %83, %84 : vector<8x16xf32>
    %86 = vector.extract_strided_slice %68 {offsets = [80, 0], sizes = [8, 16], strides = [1, 1]} : vector<120x16xf32> to vector<8x16xf32>
    %87 = arith.maximumf %85, %86 : vector<8x16xf32>
    %88 = vector.extract_strided_slice %68 {offsets = [88, 0], sizes = [8, 16], strides = [1, 1]} : vector<120x16xf32> to vector<8x16xf32>
    %89 = arith.maximumf %87, %88 : vector<8x16xf32>
    %90 = vector.extract_strided_slice %68 {offsets = [96, 0], sizes = [8, 16], strides = [1, 1]} : vector<120x16xf32> to vector<8x16xf32>
    %91 = arith.maximumf %89, %90 : vector<8x16xf32>
    %92 = vector.extract_strided_slice %68 {offsets = [104, 0], sizes = [8, 16], strides = [1, 1]} : vector<120x16xf32> to vector<8x16xf32>
    %93 = arith.maximumf %91, %92 : vector<8x16xf32>
    %94 = tpu.concatenate %43, %67, %93 in 1 : vector<8x16xf32>, vector<8x16xf32>, vector<8x16xf32> -> vector<8x48xf32>
    %c0_16 = arith.constant 0 : index
    %c0_17 = arith.constant 0 : index
    %95 = vector.load %arg4[%c0_16, %c0_17] : memref<1x48xf32, #tpu.memory_space<vmem>>, vector<1x48xf32>
    %96 = vector.broadcast %95 : vector<1x48xf32> to vector<8x48xf32>
    %97 = arith.addf %94, %96 : vector<8x48xf32>
    %98 = math.tanh %97 : vector<8x48xf32>
    %c0_18 = arith.constant 0 : index
    %c0_19 = arith.constant 0 : index
    %99 = vector.load %arg5[%c0_18, %c0_19] : memref<16x256xf32, #tpu.memory_space<vmem>>, vector<16x256xf32>
    %cst_20 = arith.constant dense<0.000000e+00> : vector<96x256xf32>
    %100 = tpu.matmul %7, %99, %cst_20 {dimension_numbers = #tpu.dot_dimension_numbers<[1], [0], [0], [1], [0, 0, 1, 1], [], []>} : vector<96x16xf32>, vector<16x256xf32>, vector<96x256xf32> -> vector<96x256xf32>
    %c0_21 = arith.constant 0 : index
    %c0_22 = arith.constant 0 : index
    %101 = vector.load %arg7[%c0_21, %c0_22] : memref<1x256xf32, #tpu.memory_space<vmem>>, vector<1x256xf32>
    %102 = vector.broadcast %101 : vector<1x256xf32> to vector<96x256xf32>
    %103 = arith.addf %100, %102 : vector<96x256xf32>
    %cst_23 = arith.constant 0.000000e+00 : f32
    %104 = vector.broadcast %cst_23 : f32 to vector<8x32xf32>
    %cst_24 = arith.constant 0.000000e+00 : f32
    %105 = vector.broadcast %cst_24 : f32 to vector<8x32xf32>
    %cst_25 = arith.constant 0.000000e+00 : f32
    %106 = vector.broadcast %cst_25 : f32 to vector<8x32xf32>
    %cst_26 = arith.constant 0.000000e+00 : f32
    %107 = vector.broadcast %cst_26 : f32 to vector<8x32xf32>
    %108 = vector.extract_strided_slice %103 {offsets = [0, 0], sizes = [8, 128], strides = [1, 1]} : vector<96x256xf32> to vector<8x128xf32>
    %109 = vector.extract_strided_slice %103 {offsets = [88, 128], sizes = [8, 128], strides = [1, 1]} : vector<96x256xf32> to vector<8x128xf32>
    %110 = tpu.concatenate %108, %109 in 1 : vector<8x128xf32>, vector<8x128xf32> -> vector<8x256xf32>
    %111 = tpu.concatenate %104, %106 in 1 : vector<8x32xf32>, vector<8x32xf32> -> vector<8x64xf32>
    %c0_27 = arith.constant 0 : index
    %c0_28 = arith.constant 0 : index
    %112 = vector.load %arg6[%c0_27, %c0_28] : memref<64x256xf32, #tpu.memory_space<vmem>>, vector<64x256xf32>
    %cst_29 = arith.constant dense<0.000000e+00> : vector<8x256xf32>
    %113 = tpu.matmul %111, %112, %cst_29 {dimension_numbers = #tpu.dot_dimension_numbers<[1], [0], [0], [1], [0, 0, 1, 1], [], []>} : vector<8x64xf32>, vector<64x256xf32>, vector<8x256xf32> -> vector<8x256xf32>
    %114 = arith.addf %110, %113 : vector<8x256xf32>
    %115 = vector.extract_strided_slice %114 {offsets = [0, 0], sizes = [8, 32], strides = [1, 1]} : vector<8x256xf32> to vector<8x32xf32>
    %116 = arith.negf %115 : vector<8x32xf32>
    %117 = math.exp %116 : vector<8x32xf32>
    %cst_30 = arith.constant 1.000000e+00 : f32
    %118 = vector.broadcast %cst_30 : f32 to vector<8x32xf32>
    %119 = arith.addf %118, %117 : vector<8x32xf32>
    %120 = arith.divf %118, %119 : vector<8x32xf32>
    %121 = vector.extract_strided_slice %114 {offsets = [0, 32], sizes = [8, 32], strides = [1, 1]} : vector<8x256xf32> to vector<8x32xf32>
    %122 = arith.negf %121 : vector<8x32xf32>
    %123 = math.exp %122 : vector<8x32xf32>
    %cst_31 = arith.constant 1.000000e+00 : f32
    %124 = vector.broadcast %cst_31 : f32 to vector<8x32xf32>
    %125 = arith.addf %124, %123 : vector<8x32xf32>
    %126 = arith.divf %124, %125 : vector<8x32xf32>
    %127 = vector.extract_strided_slice %114 {offsets = [0, 64], sizes = [8, 32], strides = [1, 1]} : vector<8x256xf32> to vector<8x32xf32>
    %128 = math.tanh %127 : vector<8x32xf32>
    %129 = vector.extract_strided_slice %114 {offsets = [0, 96], sizes = [8, 32], strides = [1, 1]} : vector<8x256xf32> to vector<8x32xf32>
    %130 = arith.negf %129 : vector<8x32xf32>
    %131 = math.exp %130 : vector<8x32xf32>
    %cst_32 = arith.constant 1.000000e+00 : f32
    %132 = vector.broadcast %cst_32 : f32 to vector<8x32xf32>
    %133 = arith.addf %132, %131 : vector<8x32xf32>
    %134 = arith.divf %132, %133 : vector<8x32xf32>
    %135 = vector.extract_strided_slice %114 {offsets = [0, 128], sizes = [8, 32], strides = [1, 1]} : vector<8x256xf32> to vector<8x32xf32>
    %136 = arith.negf %135 : vector<8x32xf32>
    %137 = math.exp %136 : vector<8x32xf32>
    %cst_33 = arith.constant 1.000000e+00 : f32
    %138 = vector.broadcast %cst_33 : f32 to vector<8x32xf32>
    %139 = arith.addf %138, %137 : vector<8x32xf32>
    %140 = arith.divf %138, %139 : vector<8x32xf32>
    %141 = vector.extract_strided_slice %114 {offsets = [0, 160], sizes = [8, 32], strides = [1, 1]} : vector<8x256xf32> to vector<8x32xf32>
    %142 = arith.negf %141 : vector<8x32xf32>
    %143 = math.exp %142 : vector<8x32xf32>
    %cst_34 = arith.constant 1.000000e+00 : f32
    %144 = vector.broadcast %cst_34 : f32 to vector<8x32xf32>
    %145 = arith.addf %144, %143 : vector<8x32xf32>
    %146 = arith.divf %144, %145 : vector<8x32xf32>
    %147 = vector.extract_strided_slice %114 {offsets = [0, 192], sizes = [8, 32], strides = [1, 1]} : vector<8x256xf32> to vector<8x32xf32>
    %148 = math.tanh %147 : vector<8x32xf32>
    %149 = vector.extract_strided_slice %114 {offsets = [0, 224], sizes = [8, 32], strides = [1, 1]} : vector<8x256xf32> to vector<8x32xf32>
    %150 = arith.negf %149 : vector<8x32xf32>
    %151 = math.exp %150 : vector<8x32xf32>
    %cst_35 = arith.constant 1.000000e+00 : f32
    %152 = vector.broadcast %cst_35 : f32 to vector<8x32xf32>
    %153 = arith.addf %152, %151 : vector<8x32xf32>
    %154 = arith.divf %152, %153 : vector<8x32xf32>
    %155 = arith.mulf %126, %105 : vector<8x32xf32>
    %156 = arith.mulf %120, %128 : vector<8x32xf32>
    %157 = arith.addf %155, %156 : vector<8x32xf32>
    %158 = math.tanh %157 : vector<8x32xf32>
    %159 = arith.mulf %134, %158 : vector<8x32xf32>
    %160 = arith.mulf %146, %107 : vector<8x32xf32>
    %161 = arith.mulf %140, %148 : vector<8x32xf32>
    %162 = arith.addf %160, %161 : vector<8x32xf32>
    %163 = math.tanh %162 : vector<8x32xf32>
    %164 = arith.mulf %154, %163 : vector<8x32xf32>
    %165 = vector.extract_strided_slice %103 {offsets = [8, 0], sizes = [8, 128], strides = [1, 1]} : vector<96x256xf32> to vector<8x128xf32>
    %166 = vector.extract_strided_slice %103 {offsets = [80, 128], sizes = [8, 128], strides = [1, 1]} : vector<96x256xf32> to vector<8x128xf32>
    %167 = tpu.concatenate %165, %166 in 1 : vector<8x128xf32>, vector<8x128xf32> -> vector<8x256xf32>
    %168 = tpu.concatenate %159, %164 in 1 : vector<8x32xf32>, vector<8x32xf32> -> vector<8x64xf32>
    %c0_36 = arith.constant 0 : index
    %c0_37 = arith.constant 0 : index
    %169 = vector.load %arg6[%c0_36, %c0_37] : memref<64x256xf32, #tpu.memory_space<vmem>>, vector<64x256xf32>
    %cst_38 = arith.constant dense<0.000000e+00> : vector<8x256xf32>
    %170 = tpu.matmul %168, %169, %cst_38 {dimension_numbers = #tpu.dot_dimension_numbers<[1], [0], [0], [1], [0, 0, 1, 1], [], []>} : vector<8x64xf32>, vector<64x256xf32>, vector<8x256xf32> -> vector<8x256xf32>
    %171 = arith.addf %167, %170 : vector<8x256xf32>
    %172 = vector.extract_strided_slice %171 {offsets = [0, 0], sizes = [8, 32], strides = [1, 1]} : vector<8x256xf32> to vector<8x32xf32>
    %173 = arith.negf %172 : vector<8x32xf32>
    %174 = math.exp %173 : vector<8x32xf32>
    %cst_39 = arith.constant 1.000000e+00 : f32
    %175 = vector.broadcast %cst_39 : f32 to vector<8x32xf32>
    %176 = arith.addf %175, %174 : vector<8x32xf32>
    %177 = arith.divf %175, %176 : vector<8x32xf32>
    %178 = vector.extract_strided_slice %171 {offsets = [0, 32], sizes = [8, 32], strides = [1, 1]} : vector<8x256xf32> to vector<8x32xf32>
    %179 = arith.negf %178 : vector<8x32xf32>
    %180 = math.exp %179 : vector<8x32xf32>
    %cst_40 = arith.constant 1.000000e+00 : f32
    %181 = vector.broadcast %cst_40 : f32 to vector<8x32xf32>
    %182 = arith.addf %181, %180 : vector<8x32xf32>
    %183 = arith.divf %181, %182 : vector<8x32xf32>
    %184 = vector.extract_strided_slice %171 {offsets = [0, 64], sizes = [8, 32], strides = [1, 1]} : vector<8x256xf32> to vector<8x32xf32>
    %185 = math.tanh %184 : vector<8x32xf32>
    %186 = vector.extract_strided_slice %171 {offsets = [0, 96], sizes = [8, 32], strides = [1, 1]} : vector<8x256xf32> to vector<8x32xf32>
    %187 = arith.negf %186 : vector<8x32xf32>
    %188 = math.exp %187 : vector<8x32xf32>
    %cst_41 = arith.constant 1.000000e+00 : f32
    %189 = vector.broadcast %cst_41 : f32 to vector<8x32xf32>
    %190 = arith.addf %189, %188 : vector<8x32xf32>
    %191 = arith.divf %189, %190 : vector<8x32xf32>
    %192 = vector.extract_strided_slice %171 {offsets = [0, 128], sizes = [8, 32], strides = [1, 1]} : vector<8x256xf32> to vector<8x32xf32>
    %193 = arith.negf %192 : vector<8x32xf32>
    %194 = math.exp %193 : vector<8x32xf32>
    %cst_42 = arith.constant 1.000000e+00 : f32
    %195 = vector.broadcast %cst_42 : f32 to vector<8x32xf32>
    %196 = arith.addf %195, %194 : vector<8x32xf32>
    %197 = arith.divf %195, %196 : vector<8x32xf32>
    %198 = vector.extract_strided_slice %171 {offsets = [0, 160], sizes = [8, 32], strides = [1, 1]} : vector<8x256xf32> to vector<8x32xf32>
    %199 = arith.negf %198 : vector<8x32xf32>
    %200 = math.exp %199 : vector<8x32xf32>
    %cst_43 = arith.constant 1.000000e+00 : f32
    %201 = vector.broadcast %cst_43 : f32 to vector<8x32xf32>
    %202 = arith.addf %201, %200 : vector<8x32xf32>
    %203 = arith.divf %201, %202 : vector<8x32xf32>
    %204 = vector.extract_strided_slice %171 {offsets = [0, 192], sizes = [8, 32], strides = [1, 1]} : vector<8x256xf32> to vector<8x32xf32>
    %205 = math.tanh %204 : vector<8x32xf32>
    %206 = vector.extract_strided_slice %171 {offsets = [0, 224], sizes = [8, 32], strides = [1, 1]} : vector<8x256xf32> to vector<8x32xf32>
    %207 = arith.negf %206 : vector<8x32xf32>
    %208 = math.exp %207 : vector<8x32xf32>
    %cst_44 = arith.constant 1.000000e+00 : f32
    %209 = vector.broadcast %cst_44 : f32 to vector<8x32xf32>
    %210 = arith.addf %209, %208 : vector<8x32xf32>
    %211 = arith.divf %209, %210 : vector<8x32xf32>
    %212 = arith.mulf %183, %157 : vector<8x32xf32>
    %213 = arith.mulf %177, %185 : vector<8x32xf32>
    %214 = arith.addf %212, %213 : vector<8x32xf32>
    %215 = math.tanh %214 : vector<8x32xf32>
    %216 = arith.mulf %191, %215 : vector<8x32xf32>
    %217 = arith.mulf %203, %162 : vector<8x32xf32>
    %218 = arith.mulf %197, %205 : vector<8x32xf32>
    %219 = arith.addf %217, %218 : vector<8x32xf32>
    %220 = math.tanh %219 : vector<8x32xf32>
    %221 = arith.mulf %211, %220 : vector<8x32xf32>
    %222 = vector.extract_strided_slice %103 {offsets = [16, 0], sizes = [8, 128], strides = [1, 1]} : vector<96x256xf32> to vector<8x128xf32>
    %223 = vector.extract_strided_slice %103 {offsets = [72, 128], sizes = [8, 128], strides = [1, 1]} : vector<96x256xf32> to vector<8x128xf32>
    %224 = tpu.concatenate %222, %223 in 1 : vector<8x128xf32>, vector<8x128xf32> -> vector<8x256xf32>
    %225 = tpu.concatenate %216, %221 in 1 : vector<8x32xf32>, vector<8x32xf32> -> vector<8x64xf32>
    %c0_45 = arith.constant 0 : index
    %c0_46 = arith.constant 0 : index
    %226 = vector.load %arg6[%c0_45, %c0_46] : memref<64x256xf32, #tpu.memory_space<vmem>>, vector<64x256xf32>
    %cst_47 = arith.constant dense<0.000000e+00> : vector<8x256xf32>
    %227 = tpu.matmul %225, %226, %cst_47 {dimension_numbers = #tpu.dot_dimension_numbers<[1], [0], [0], [1], [0, 0, 1, 1], [], []>} : vector<8x64xf32>, vector<64x256xf32>, vector<8x256xf32> -> vector<8x256xf32>
    %228 = arith.addf %224, %227 : vector<8x256xf32>
    %229 = vector.extract_strided_slice %228 {offsets = [0, 0], sizes = [8, 32], strides = [1, 1]} : vector<8x256xf32> to vector<8x32xf32>
    %230 = arith.negf %229 : vector<8x32xf32>
    %231 = math.exp %230 : vector<8x32xf32>
    %cst_48 = arith.constant 1.000000e+00 : f32
    %232 = vector.broadcast %cst_48 : f32 to vector<8x32xf32>
    %233 = arith.addf %232, %231 : vector<8x32xf32>
    %234 = arith.divf %232, %233 : vector<8x32xf32>
    %235 = vector.extract_strided_slice %228 {offsets = [0, 32], sizes = [8, 32], strides = [1, 1]} : vector<8x256xf32> to vector<8x32xf32>
    %236 = arith.negf %235 : vector<8x32xf32>
    %237 = math.exp %236 : vector<8x32xf32>
    %cst_49 = arith.constant 1.000000e+00 : f32
    %238 = vector.broadcast %cst_49 : f32 to vector<8x32xf32>
    %239 = arith.addf %238, %237 : vector<8x32xf32>
    %240 = arith.divf %238, %239 : vector<8x32xf32>
    %241 = vector.extract_strided_slice %228 {offsets = [0, 64], sizes = [8, 32], strides = [1, 1]} : vector<8x256xf32> to vector<8x32xf32>
    %242 = math.tanh %241 : vector<8x32xf32>
    %243 = vector.extract_strided_slice %228 {offsets = [0, 96], sizes = [8, 32], strides = [1, 1]} : vector<8x256xf32> to vector<8x32xf32>
    %244 = arith.negf %243 : vector<8x32xf32>
    %245 = math.exp %244 : vector<8x32xf32>
    %cst_50 = arith.constant 1.000000e+00 : f32
    %246 = vector.broadcast %cst_50 : f32 to vector<8x32xf32>
    %247 = arith.addf %246, %245 : vector<8x32xf32>
    %248 = arith.divf %246, %247 : vector<8x32xf32>
    %249 = vector.extract_strided_slice %228 {offsets = [0, 128], sizes = [8, 32], strides = [1, 1]} : vector<8x256xf32> to vector<8x32xf32>
    %250 = arith.negf %249 : vector<8x32xf32>
    %251 = math.exp %250 : vector<8x32xf32>
    %cst_51 = arith.constant 1.000000e+00 : f32
    %252 = vector.broadcast %cst_51 : f32 to vector<8x32xf32>
    %253 = arith.addf %252, %251 : vector<8x32xf32>
    %254 = arith.divf %252, %253 : vector<8x32xf32>
    %255 = vector.extract_strided_slice %228 {offsets = [0, 160], sizes = [8, 32], strides = [1, 1]} : vector<8x256xf32> to vector<8x32xf32>
    %256 = arith.negf %255 : vector<8x32xf32>
    %257 = math.exp %256 : vector<8x32xf32>
    %cst_52 = arith.constant 1.000000e+00 : f32
    %258 = vector.broadcast %cst_52 : f32 to vector<8x32xf32>
    %259 = arith.addf %258, %257 : vector<8x32xf32>
    %260 = arith.divf %258, %259 : vector<8x32xf32>
    %261 = vector.extract_strided_slice %228 {offsets = [0, 192], sizes = [8, 32], strides = [1, 1]} : vector<8x256xf32> to vector<8x32xf32>
    %262 = math.tanh %261 : vector<8x32xf32>
    %263 = vector.extract_strided_slice %228 {offsets = [0, 224], sizes = [8, 32], strides = [1, 1]} : vector<8x256xf32> to vector<8x32xf32>
    %264 = arith.negf %263 : vector<8x32xf32>
    %265 = math.exp %264 : vector<8x32xf32>
    %cst_53 = arith.constant 1.000000e+00 : f32
    %266 = vector.broadcast %cst_53 : f32 to vector<8x32xf32>
    %267 = arith.addf %266, %265 : vector<8x32xf32>
    %268 = arith.divf %266, %267 : vector<8x32xf32>
    %269 = arith.mulf %240, %214 : vector<8x32xf32>
    %270 = arith.mulf %234, %242 : vector<8x32xf32>
    %271 = arith.addf %269, %270 : vector<8x32xf32>
    %272 = math.tanh %271 : vector<8x32xf32>
    %273 = arith.mulf %248, %272 : vector<8x32xf32>
    %274 = arith.mulf %260, %219 : vector<8x32xf32>
    %275 = arith.mulf %254, %262 : vector<8x32xf32>
    %276 = arith.addf %274, %275 : vector<8x32xf32>
    %277 = math.tanh %276 : vector<8x32xf32>
    %278 = arith.mulf %268, %277 : vector<8x32xf32>
    %279 = vector.extract_strided_slice %103 {offsets = [24, 0], sizes = [8, 128], strides = [1, 1]} : vector<96x256xf32> to vector<8x128xf32>
    %280 = vector.extract_strided_slice %103 {offsets = [64, 128], sizes = [8, 128], strides = [1, 1]} : vector<96x256xf32> to vector<8x128xf32>
    %281 = tpu.concatenate %279, %280 in 1 : vector<8x128xf32>, vector<8x128xf32> -> vector<8x256xf32>
    %282 = tpu.concatenate %273, %278 in 1 : vector<8x32xf32>, vector<8x32xf32> -> vector<8x64xf32>
    %c0_54 = arith.constant 0 : index
    %c0_55 = arith.constant 0 : index
    %283 = vector.load %arg6[%c0_54, %c0_55] : memref<64x256xf32, #tpu.memory_space<vmem>>, vector<64x256xf32>
    %cst_56 = arith.constant dense<0.000000e+00> : vector<8x256xf32>
    %284 = tpu.matmul %282, %283, %cst_56 {dimension_numbers = #tpu.dot_dimension_numbers<[1], [0], [0], [1], [0, 0, 1, 1], [], []>} : vector<8x64xf32>, vector<64x256xf32>, vector<8x256xf32> -> vector<8x256xf32>
    %285 = arith.addf %281, %284 : vector<8x256xf32>
    %286 = vector.extract_strided_slice %285 {offsets = [0, 0], sizes = [8, 32], strides = [1, 1]} : vector<8x256xf32> to vector<8x32xf32>
    %287 = arith.negf %286 : vector<8x32xf32>
    %288 = math.exp %287 : vector<8x32xf32>
    %cst_57 = arith.constant 1.000000e+00 : f32
    %289 = vector.broadcast %cst_57 : f32 to vector<8x32xf32>
    %290 = arith.addf %289, %288 : vector<8x32xf32>
    %291 = arith.divf %289, %290 : vector<8x32xf32>
    %292 = vector.extract_strided_slice %285 {offsets = [0, 32], sizes = [8, 32], strides = [1, 1]} : vector<8x256xf32> to vector<8x32xf32>
    %293 = arith.negf %292 : vector<8x32xf32>
    %294 = math.exp %293 : vector<8x32xf32>
    %cst_58 = arith.constant 1.000000e+00 : f32
    %295 = vector.broadcast %cst_58 : f32 to vector<8x32xf32>
    %296 = arith.addf %295, %294 : vector<8x32xf32>
    %297 = arith.divf %295, %296 : vector<8x32xf32>
    %298 = vector.extract_strided_slice %285 {offsets = [0, 64], sizes = [8, 32], strides = [1, 1]} : vector<8x256xf32> to vector<8x32xf32>
    %299 = math.tanh %298 : vector<8x32xf32>
    %300 = vector.extract_strided_slice %285 {offsets = [0, 96], sizes = [8, 32], strides = [1, 1]} : vector<8x256xf32> to vector<8x32xf32>
    %301 = arith.negf %300 : vector<8x32xf32>
    %302 = math.exp %301 : vector<8x32xf32>
    %cst_59 = arith.constant 1.000000e+00 : f32
    %303 = vector.broadcast %cst_59 : f32 to vector<8x32xf32>
    %304 = arith.addf %303, %302 : vector<8x32xf32>
    %305 = arith.divf %303, %304 : vector<8x32xf32>
    %306 = vector.extract_strided_slice %285 {offsets = [0, 128], sizes = [8, 32], strides = [1, 1]} : vector<8x256xf32> to vector<8x32xf32>
    %307 = arith.negf %306 : vector<8x32xf32>
    %308 = math.exp %307 : vector<8x32xf32>
    %cst_60 = arith.constant 1.000000e+00 : f32
    %309 = vector.broadcast %cst_60 : f32 to vector<8x32xf32>
    %310 = arith.addf %309, %308 : vector<8x32xf32>
    %311 = arith.divf %309, %310 : vector<8x32xf32>
    %312 = vector.extract_strided_slice %285 {offsets = [0, 160], sizes = [8, 32], strides = [1, 1]} : vector<8x256xf32> to vector<8x32xf32>
    %313 = arith.negf %312 : vector<8x32xf32>
    %314 = math.exp %313 : vector<8x32xf32>
    %cst_61 = arith.constant 1.000000e+00 : f32
    %315 = vector.broadcast %cst_61 : f32 to vector<8x32xf32>
    %316 = arith.addf %315, %314 : vector<8x32xf32>
    %317 = arith.divf %315, %316 : vector<8x32xf32>
    %318 = vector.extract_strided_slice %285 {offsets = [0, 192], sizes = [8, 32], strides = [1, 1]} : vector<8x256xf32> to vector<8x32xf32>
    %319 = math.tanh %318 : vector<8x32xf32>
    %320 = vector.extract_strided_slice %285 {offsets = [0, 224], sizes = [8, 32], strides = [1, 1]} : vector<8x256xf32> to vector<8x32xf32>
    %321 = arith.negf %320 : vector<8x32xf32>
    %322 = math.exp %321 : vector<8x32xf32>
    %cst_62 = arith.constant 1.000000e+00 : f32
    %323 = vector.broadcast %cst_62 : f32 to vector<8x32xf32>
    %324 = arith.addf %323, %322 : vector<8x32xf32>
    %325 = arith.divf %323, %324 : vector<8x32xf32>
    %326 = arith.mulf %297, %271 : vector<8x32xf32>
    %327 = arith.mulf %291, %299 : vector<8x32xf32>
    %328 = arith.addf %326, %327 : vector<8x32xf32>
    %329 = math.tanh %328 : vector<8x32xf32>
    %330 = arith.mulf %305, %329 : vector<8x32xf32>
    %331 = arith.mulf %317, %276 : vector<8x32xf32>
    %332 = arith.mulf %311, %319 : vector<8x32xf32>
    %333 = arith.addf %331, %332 : vector<8x32xf32>
    %334 = math.tanh %333 : vector<8x32xf32>
    %335 = arith.mulf %325, %334 : vector<8x32xf32>
    %336 = vector.extract_strided_slice %103 {offsets = [32, 0], sizes = [8, 128], strides = [1, 1]} : vector<96x256xf32> to vector<8x128xf32>
    %337 = vector.extract_strided_slice %103 {offsets = [56, 128], sizes = [8, 128], strides = [1, 1]} : vector<96x256xf32> to vector<8x128xf32>
    %338 = tpu.concatenate %336, %337 in 1 : vector<8x128xf32>, vector<8x128xf32> -> vector<8x256xf32>
    %339 = tpu.concatenate %330, %335 in 1 : vector<8x32xf32>, vector<8x32xf32> -> vector<8x64xf32>
    %c0_63 = arith.constant 0 : index
    %c0_64 = arith.constant 0 : index
    %340 = vector.load %arg6[%c0_63, %c0_64] : memref<64x256xf32, #tpu.memory_space<vmem>>, vector<64x256xf32>
    %cst_65 = arith.constant dense<0.000000e+00> : vector<8x256xf32>
    %341 = tpu.matmul %339, %340, %cst_65 {dimension_numbers = #tpu.dot_dimension_numbers<[1], [0], [0], [1], [0, 0, 1, 1], [], []>} : vector<8x64xf32>, vector<64x256xf32>, vector<8x256xf32> -> vector<8x256xf32>
    %342 = arith.addf %338, %341 : vector<8x256xf32>
    %343 = vector.extract_strided_slice %342 {offsets = [0, 0], sizes = [8, 32], strides = [1, 1]} : vector<8x256xf32> to vector<8x32xf32>
    %344 = arith.negf %343 : vector<8x32xf32>
    %345 = math.exp %344 : vector<8x32xf32>
    %cst_66 = arith.constant 1.000000e+00 : f32
    %346 = vector.broadcast %cst_66 : f32 to vector<8x32xf32>
    %347 = arith.addf %346, %345 : vector<8x32xf32>
    %348 = arith.divf %346, %347 : vector<8x32xf32>
    %349 = vector.extract_strided_slice %342 {offsets = [0, 32], sizes = [8, 32], strides = [1, 1]} : vector<8x256xf32> to vector<8x32xf32>
    %350 = arith.negf %349 : vector<8x32xf32>
    %351 = math.exp %350 : vector<8x32xf32>
    %cst_67 = arith.constant 1.000000e+00 : f32
    %352 = vector.broadcast %cst_67 : f32 to vector<8x32xf32>
    %353 = arith.addf %352, %351 : vector<8x32xf32>
    %354 = arith.divf %352, %353 : vector<8x32xf32>
    %355 = vector.extract_strided_slice %342 {offsets = [0, 64], sizes = [8, 32], strides = [1, 1]} : vector<8x256xf32> to vector<8x32xf32>
    %356 = math.tanh %355 : vector<8x32xf32>
    %357 = vector.extract_strided_slice %342 {offsets = [0, 96], sizes = [8, 32], strides = [1, 1]} : vector<8x256xf32> to vector<8x32xf32>
    %358 = arith.negf %357 : vector<8x32xf32>
    %359 = math.exp %358 : vector<8x32xf32>
    %cst_68 = arith.constant 1.000000e+00 : f32
    %360 = vector.broadcast %cst_68 : f32 to vector<8x32xf32>
    %361 = arith.addf %360, %359 : vector<8x32xf32>
    %362 = arith.divf %360, %361 : vector<8x32xf32>
    %363 = vector.extract_strided_slice %342 {offsets = [0, 128], sizes = [8, 32], strides = [1, 1]} : vector<8x256xf32> to vector<8x32xf32>
    %364 = arith.negf %363 : vector<8x32xf32>
    %365 = math.exp %364 : vector<8x32xf32>
    %cst_69 = arith.constant 1.000000e+00 : f32
    %366 = vector.broadcast %cst_69 : f32 to vector<8x32xf32>
    %367 = arith.addf %366, %365 : vector<8x32xf32>
    %368 = arith.divf %366, %367 : vector<8x32xf32>
    %369 = vector.extract_strided_slice %342 {offsets = [0, 160], sizes = [8, 32], strides = [1, 1]} : vector<8x256xf32> to vector<8x32xf32>
    %370 = arith.negf %369 : vector<8x32xf32>
    %371 = math.exp %370 : vector<8x32xf32>
    %cst_70 = arith.constant 1.000000e+00 : f32
    %372 = vector.broadcast %cst_70 : f32 to vector<8x32xf32>
    %373 = arith.addf %372, %371 : vector<8x32xf32>
    %374 = arith.divf %372, %373 : vector<8x32xf32>
    %375 = vector.extract_strided_slice %342 {offsets = [0, 192], sizes = [8, 32], strides = [1, 1]} : vector<8x256xf32> to vector<8x32xf32>
    %376 = math.tanh %375 : vector<8x32xf32>
    %377 = vector.extract_strided_slice %342 {offsets = [0, 224], sizes = [8, 32], strides = [1, 1]} : vector<8x256xf32> to vector<8x32xf32>
    %378 = arith.negf %377 : vector<8x32xf32>
    %379 = math.exp %378 : vector<8x32xf32>
    %cst_71 = arith.constant 1.000000e+00 : f32
    %380 = vector.broadcast %cst_71 : f32 to vector<8x32xf32>
    %381 = arith.addf %380, %379 : vector<8x32xf32>
    %382 = arith.divf %380, %381 : vector<8x32xf32>
    %383 = arith.mulf %354, %328 : vector<8x32xf32>
    %384 = arith.mulf %348, %356 : vector<8x32xf32>
    %385 = arith.addf %383, %384 : vector<8x32xf32>
    %386 = math.tanh %385 : vector<8x32xf32>
    %387 = arith.mulf %362, %386 : vector<8x32xf32>
    %388 = arith.mulf %374, %333 : vector<8x32xf32>
    %389 = arith.mulf %368, %376 : vector<8x32xf32>
    %390 = arith.addf %388, %389 : vector<8x32xf32>
    %391 = math.tanh %390 : vector<8x32xf32>
    %392 = arith.mulf %382, %391 : vector<8x32xf32>
    %393 = vector.extract_strided_slice %103 {offsets = [40, 0], sizes = [8, 128], strides = [1, 1]} : vector<96x256xf32> to vector<8x128xf32>
    %394 = vector.extract_strided_slice %103 {offsets = [48, 128], sizes = [8, 128], strides = [1, 1]} : vector<96x256xf32> to vector<8x128xf32>
    %395 = tpu.concatenate %393, %394 in 1 : vector<8x128xf32>, vector<8x128xf32> -> vector<8x256xf32>
    %396 = tpu.concatenate %387, %392 in 1 : vector<8x32xf32>, vector<8x32xf32> -> vector<8x64xf32>
    %c0_72 = arith.constant 0 : index
    %c0_73 = arith.constant 0 : index
    %397 = vector.load %arg6[%c0_72, %c0_73] : memref<64x256xf32, #tpu.memory_space<vmem>>, vector<64x256xf32>
    %cst_74 = arith.constant dense<0.000000e+00> : vector<8x256xf32>
    %398 = tpu.matmul %396, %397, %cst_74 {dimension_numbers = #tpu.dot_dimension_numbers<[1], [0], [0], [1], [0, 0, 1, 1], [], []>} : vector<8x64xf32>, vector<64x256xf32>, vector<8x256xf32> -> vector<8x256xf32>
    %399 = arith.addf %395, %398 : vector<8x256xf32>
    %400 = vector.extract_strided_slice %399 {offsets = [0, 0], sizes = [8, 32], strides = [1, 1]} : vector<8x256xf32> to vector<8x32xf32>
    %401 = arith.negf %400 : vector<8x32xf32>
    %402 = math.exp %401 : vector<8x32xf32>
    %cst_75 = arith.constant 1.000000e+00 : f32
    %403 = vector.broadcast %cst_75 : f32 to vector<8x32xf32>
    %404 = arith.addf %403, %402 : vector<8x32xf32>
    %405 = arith.divf %403, %404 : vector<8x32xf32>
    %406 = vector.extract_strided_slice %399 {offsets = [0, 32], sizes = [8, 32], strides = [1, 1]} : vector<8x256xf32> to vector<8x32xf32>
    %407 = arith.negf %406 : vector<8x32xf32>
    %408 = math.exp %407 : vector<8x32xf32>
    %cst_76 = arith.constant 1.000000e+00 : f32
    %409 = vector.broadcast %cst_76 : f32 to vector<8x32xf32>
    %410 = arith.addf %409, %408 : vector<8x32xf32>
    %411 = arith.divf %409, %410 : vector<8x32xf32>
    %412 = vector.extract_strided_slice %399 {offsets = [0, 64], sizes = [8, 32], strides = [1, 1]} : vector<8x256xf32> to vector<8x32xf32>
    %413 = math.tanh %412 : vector<8x32xf32>
    %414 = vector.extract_strided_slice %399 {offsets = [0, 96], sizes = [8, 32], strides = [1, 1]} : vector<8x256xf32> to vector<8x32xf32>
    %415 = arith.negf %414 : vector<8x32xf32>
    %416 = math.exp %415 : vector<8x32xf32>
    %cst_77 = arith.constant 1.000000e+00 : f32
    %417 = vector.broadcast %cst_77 : f32 to vector<8x32xf32>
    %418 = arith.addf %417, %416 : vector<8x32xf32>
    %419 = arith.divf %417, %418 : vector<8x32xf32>
    %420 = vector.extract_strided_slice %399 {offsets = [0, 128], sizes = [8, 32], strides = [1, 1]} : vector<8x256xf32> to vector<8x32xf32>
    %421 = arith.negf %420 : vector<8x32xf32>
    %422 = math.exp %421 : vector<8x32xf32>
    %cst_78 = arith.constant 1.000000e+00 : f32
    %423 = vector.broadcast %cst_78 : f32 to vector<8x32xf32>
    %424 = arith.addf %423, %422 : vector<8x32xf32>
    %425 = arith.divf %423, %424 : vector<8x32xf32>
    %426 = vector.extract_strided_slice %399 {offsets = [0, 160], sizes = [8, 32], strides = [1, 1]} : vector<8x256xf32> to vector<8x32xf32>
    %427 = arith.negf %426 : vector<8x32xf32>
    %428 = math.exp %427 : vector<8x32xf32>
    %cst_79 = arith.constant 1.000000e+00 : f32
    %429 = vector.broadcast %cst_79 : f32 to vector<8x32xf32>
    %430 = arith.addf %429, %428 : vector<8x32xf32>
    %431 = arith.divf %429, %430 : vector<8x32xf32>
    %432 = vector.extract_strided_slice %399 {offsets = [0, 192], sizes = [8, 32], strides = [1, 1]} : vector<8x256xf32> to vector<8x32xf32>
    %433 = math.tanh %432 : vector<8x32xf32>
    %434 = vector.extract_strided_slice %399 {offsets = [0, 224], sizes = [8, 32], strides = [1, 1]} : vector<8x256xf32> to vector<8x32xf32>
    %435 = arith.negf %434 : vector<8x32xf32>
    %436 = math.exp %435 : vector<8x32xf32>
    %cst_80 = arith.constant 1.000000e+00 : f32
    %437 = vector.broadcast %cst_80 : f32 to vector<8x32xf32>
    %438 = arith.addf %437, %436 : vector<8x32xf32>
    %439 = arith.divf %437, %438 : vector<8x32xf32>
    %440 = arith.mulf %411, %385 : vector<8x32xf32>
    %441 = arith.mulf %405, %413 : vector<8x32xf32>
    %442 = arith.addf %440, %441 : vector<8x32xf32>
    %443 = math.tanh %442 : vector<8x32xf32>
    %444 = arith.mulf %419, %443 : vector<8x32xf32>
    %445 = arith.mulf %431, %390 : vector<8x32xf32>
    %446 = arith.mulf %425, %433 : vector<8x32xf32>
    %447 = arith.addf %445, %446 : vector<8x32xf32>
    %448 = math.tanh %447 : vector<8x32xf32>
    %449 = arith.mulf %439, %448 : vector<8x32xf32>
    %450 = vector.extract_strided_slice %103 {offsets = [48, 0], sizes = [8, 128], strides = [1, 1]} : vector<96x256xf32> to vector<8x128xf32>
    %451 = vector.extract_strided_slice %103 {offsets = [40, 128], sizes = [8, 128], strides = [1, 1]} : vector<96x256xf32> to vector<8x128xf32>
    %452 = tpu.concatenate %450, %451 in 1 : vector<8x128xf32>, vector<8x128xf32> -> vector<8x256xf32>
    %453 = tpu.concatenate %444, %449 in 1 : vector<8x32xf32>, vector<8x32xf32> -> vector<8x64xf32>
    %c0_81 = arith.constant 0 : index
    %c0_82 = arith.constant 0 : index
    %454 = vector.load %arg6[%c0_81, %c0_82] : memref<64x256xf32, #tpu.memory_space<vmem>>, vector<64x256xf32>
    %cst_83 = arith.constant dense<0.000000e+00> : vector<8x256xf32>
    %455 = tpu.matmul %453, %454, %cst_83 {dimension_numbers = #tpu.dot_dimension_numbers<[1], [0], [0], [1], [0, 0, 1, 1], [], []>} : vector<8x64xf32>, vector<64x256xf32>, vector<8x256xf32> -> vector<8x256xf32>
    %456 = arith.addf %452, %455 : vector<8x256xf32>
    %457 = vector.extract_strided_slice %456 {offsets = [0, 0], sizes = [8, 32], strides = [1, 1]} : vector<8x256xf32> to vector<8x32xf32>
    %458 = arith.negf %457 : vector<8x32xf32>
    %459 = math.exp %458 : vector<8x32xf32>
    %cst_84 = arith.constant 1.000000e+00 : f32
    %460 = vector.broadcast %cst_84 : f32 to vector<8x32xf32>
    %461 = arith.addf %460, %459 : vector<8x32xf32>
    %462 = arith.divf %460, %461 : vector<8x32xf32>
    %463 = vector.extract_strided_slice %456 {offsets = [0, 32], sizes = [8, 32], strides = [1, 1]} : vector<8x256xf32> to vector<8x32xf32>
    %464 = arith.negf %463 : vector<8x32xf32>
    %465 = math.exp %464 : vector<8x32xf32>
    %cst_85 = arith.constant 1.000000e+00 : f32
    %466 = vector.broadcast %cst_85 : f32 to vector<8x32xf32>
    %467 = arith.addf %466, %465 : vector<8x32xf32>
    %468 = arith.divf %466, %467 : vector<8x32xf32>
    %469 = vector.extract_strided_slice %456 {offsets = [0, 64], sizes = [8, 32], strides = [1, 1]} : vector<8x256xf32> to vector<8x32xf32>
    %470 = math.tanh %469 : vector<8x32xf32>
    %471 = vector.extract_strided_slice %456 {offsets = [0, 96], sizes = [8, 32], strides = [1, 1]} : vector<8x256xf32> to vector<8x32xf32>
    %472 = arith.negf %471 : vector<8x32xf32>
    %473 = math.exp %472 : vector<8x32xf32>
    %cst_86 = arith.constant 1.000000e+00 : f32
    %474 = vector.broadcast %cst_86 : f32 to vector<8x32xf32>
    %475 = arith.addf %474, %473 : vector<8x32xf32>
    %476 = arith.divf %474, %475 : vector<8x32xf32>
    %477 = vector.extract_strided_slice %456 {offsets = [0, 128], sizes = [8, 32], strides = [1, 1]} : vector<8x256xf32> to vector<8x32xf32>
    %478 = arith.negf %477 : vector<8x32xf32>
    %479 = math.exp %478 : vector<8x32xf32>
    %cst_87 = arith.constant 1.000000e+00 : f32
    %480 = vector.broadcast %cst_87 : f32 to vector<8x32xf32>
    %481 = arith.addf %480, %479 : vector<8x32xf32>
    %482 = arith.divf %480, %481 : vector<8x32xf32>
    %483 = vector.extract_strided_slice %456 {offsets = [0, 160], sizes = [8, 32], strides = [1, 1]} : vector<8x256xf32> to vector<8x32xf32>
    %484 = arith.negf %483 : vector<8x32xf32>
    %485 = math.exp %484 : vector<8x32xf32>
    %cst_88 = arith.constant 1.000000e+00 : f32
    %486 = vector.broadcast %cst_88 : f32 to vector<8x32xf32>
    %487 = arith.addf %486, %485 : vector<8x32xf32>
    %488 = arith.divf %486, %487 : vector<8x32xf32>
    %489 = vector.extract_strided_slice %456 {offsets = [0, 192], sizes = [8, 32], strides = [1, 1]} : vector<8x256xf32> to vector<8x32xf32>
    %490 = math.tanh %489 : vector<8x32xf32>
    %491 = vector.extract_strided_slice %456 {offsets = [0, 224], sizes = [8, 32], strides = [1, 1]} : vector<8x256xf32> to vector<8x32xf32>
    %492 = arith.negf %491 : vector<8x32xf32>
    %493 = math.exp %492 : vector<8x32xf32>
    %cst_89 = arith.constant 1.000000e+00 : f32
    %494 = vector.broadcast %cst_89 : f32 to vector<8x32xf32>
    %495 = arith.addf %494, %493 : vector<8x32xf32>
    %496 = arith.divf %494, %495 : vector<8x32xf32>
    %497 = arith.mulf %468, %442 : vector<8x32xf32>
    %498 = arith.mulf %462, %470 : vector<8x32xf32>
    %499 = arith.addf %497, %498 : vector<8x32xf32>
    %500 = math.tanh %499 : vector<8x32xf32>
    %501 = arith.mulf %476, %500 : vector<8x32xf32>
    %502 = arith.mulf %488, %447 : vector<8x32xf32>
    %503 = arith.mulf %482, %490 : vector<8x32xf32>
    %504 = arith.addf %502, %503 : vector<8x32xf32>
    %505 = math.tanh %504 : vector<8x32xf32>
    %506 = arith.mulf %496, %505 : vector<8x32xf32>
    %507 = vector.extract_strided_slice %103 {offsets = [56, 0], sizes = [8, 128], strides = [1, 1]} : vector<96x256xf32> to vector<8x128xf32>
    %508 = vector.extract_strided_slice %103 {offsets = [32, 128], sizes = [8, 128], strides = [1, 1]} : vector<96x256xf32> to vector<8x128xf32>
    %509 = tpu.concatenate %507, %508 in 1 : vector<8x128xf32>, vector<8x128xf32> -> vector<8x256xf32>
    %510 = tpu.concatenate %501, %506 in 1 : vector<8x32xf32>, vector<8x32xf32> -> vector<8x64xf32>
    %c0_90 = arith.constant 0 : index
    %c0_91 = arith.constant 0 : index
    %511 = vector.load %arg6[%c0_90, %c0_91] : memref<64x256xf32, #tpu.memory_space<vmem>>, vector<64x256xf32>
    %cst_92 = arith.constant dense<0.000000e+00> : vector<8x256xf32>
    %512 = tpu.matmul %510, %511, %cst_92 {dimension_numbers = #tpu.dot_dimension_numbers<[1], [0], [0], [1], [0, 0, 1, 1], [], []>} : vector<8x64xf32>, vector<64x256xf32>, vector<8x256xf32> -> vector<8x256xf32>
    %513 = arith.addf %509, %512 : vector<8x256xf32>
    %514 = vector.extract_strided_slice %513 {offsets = [0, 0], sizes = [8, 32], strides = [1, 1]} : vector<8x256xf32> to vector<8x32xf32>
    %515 = arith.negf %514 : vector<8x32xf32>
    %516 = math.exp %515 : vector<8x32xf32>
    %cst_93 = arith.constant 1.000000e+00 : f32
    %517 = vector.broadcast %cst_93 : f32 to vector<8x32xf32>
    %518 = arith.addf %517, %516 : vector<8x32xf32>
    %519 = arith.divf %517, %518 : vector<8x32xf32>
    %520 = vector.extract_strided_slice %513 {offsets = [0, 32], sizes = [8, 32], strides = [1, 1]} : vector<8x256xf32> to vector<8x32xf32>
    %521 = arith.negf %520 : vector<8x32xf32>
    %522 = math.exp %521 : vector<8x32xf32>
    %cst_94 = arith.constant 1.000000e+00 : f32
    %523 = vector.broadcast %cst_94 : f32 to vector<8x32xf32>
    %524 = arith.addf %523, %522 : vector<8x32xf32>
    %525 = arith.divf %523, %524 : vector<8x32xf32>
    %526 = vector.extract_strided_slice %513 {offsets = [0, 64], sizes = [8, 32], strides = [1, 1]} : vector<8x256xf32> to vector<8x32xf32>
    %527 = math.tanh %526 : vector<8x32xf32>
    %528 = vector.extract_strided_slice %513 {offsets = [0, 96], sizes = [8, 32], strides = [1, 1]} : vector<8x256xf32> to vector<8x32xf32>
    %529 = arith.negf %528 : vector<8x32xf32>
    %530 = math.exp %529 : vector<8x32xf32>
    %cst_95 = arith.constant 1.000000e+00 : f32
    %531 = vector.broadcast %cst_95 : f32 to vector<8x32xf32>
    %532 = arith.addf %531, %530 : vector<8x32xf32>
    %533 = arith.divf %531, %532 : vector<8x32xf32>
    %534 = vector.extract_strided_slice %513 {offsets = [0, 128], sizes = [8, 32], strides = [1, 1]} : vector<8x256xf32> to vector<8x32xf32>
    %535 = arith.negf %534 : vector<8x32xf32>
    %536 = math.exp %535 : vector<8x32xf32>
    %cst_96 = arith.constant 1.000000e+00 : f32
    %537 = vector.broadcast %cst_96 : f32 to vector<8x32xf32>
    %538 = arith.addf %537, %536 : vector<8x32xf32>
    %539 = arith.divf %537, %538 : vector<8x32xf32>
    %540 = vector.extract_strided_slice %513 {offsets = [0, 160], sizes = [8, 32], strides = [1, 1]} : vector<8x256xf32> to vector<8x32xf32>
    %541 = arith.negf %540 : vector<8x32xf32>
    %542 = math.exp %541 : vector<8x32xf32>
    %cst_97 = arith.constant 1.000000e+00 : f32
    %543 = vector.broadcast %cst_97 : f32 to vector<8x32xf32>
    %544 = arith.addf %543, %542 : vector<8x32xf32>
    %545 = arith.divf %543, %544 : vector<8x32xf32>
    %546 = vector.extract_strided_slice %513 {offsets = [0, 192], sizes = [8, 32], strides = [1, 1]} : vector<8x256xf32> to vector<8x32xf32>
    %547 = math.tanh %546 : vector<8x32xf32>
    %548 = vector.extract_strided_slice %513 {offsets = [0, 224], sizes = [8, 32], strides = [1, 1]} : vector<8x256xf32> to vector<8x32xf32>
    %549 = arith.negf %548 : vector<8x32xf32>
    %550 = math.exp %549 : vector<8x32xf32>
    %cst_98 = arith.constant 1.000000e+00 : f32
    %551 = vector.broadcast %cst_98 : f32 to vector<8x32xf32>
    %552 = arith.addf %551, %550 : vector<8x32xf32>
    %553 = arith.divf %551, %552 : vector<8x32xf32>
    %554 = arith.mulf %525, %499 : vector<8x32xf32>
    %555 = arith.mulf %519, %527 : vector<8x32xf32>
    %556 = arith.addf %554, %555 : vector<8x32xf32>
    %557 = math.tanh %556 : vector<8x32xf32>
    %558 = arith.mulf %533, %557 : vector<8x32xf32>
    %559 = arith.mulf %545, %504 : vector<8x32xf32>
    %560 = arith.mulf %539, %547 : vector<8x32xf32>
    %561 = arith.addf %559, %560 : vector<8x32xf32>
    %562 = math.tanh %561 : vector<8x32xf32>
    %563 = arith.mulf %553, %562 : vector<8x32xf32>
    %564 = vector.extract_strided_slice %103 {offsets = [64, 0], sizes = [8, 128], strides = [1, 1]} : vector<96x256xf32> to vector<8x128xf32>
    %565 = vector.extract_strided_slice %103 {offsets = [24, 128], sizes = [8, 128], strides = [1, 1]} : vector<96x256xf32> to vector<8x128xf32>
    %566 = tpu.concatenate %564, %565 in 1 : vector<8x128xf32>, vector<8x128xf32> -> vector<8x256xf32>
    %567 = tpu.concatenate %558, %563 in 1 : vector<8x32xf32>, vector<8x32xf32> -> vector<8x64xf32>
    %c0_99 = arith.constant 0 : index
    %c0_100 = arith.constant 0 : index
    %568 = vector.load %arg6[%c0_99, %c0_100] : memref<64x256xf32, #tpu.memory_space<vmem>>, vector<64x256xf32>
    %cst_101 = arith.constant dense<0.000000e+00> : vector<8x256xf32>
    %569 = tpu.matmul %567, %568, %cst_101 {dimension_numbers = #tpu.dot_dimension_numbers<[1], [0], [0], [1], [0, 0, 1, 1], [], []>} : vector<8x64xf32>, vector<64x256xf32>, vector<8x256xf32> -> vector<8x256xf32>
    %570 = arith.addf %566, %569 : vector<8x256xf32>
    %571 = vector.extract_strided_slice %570 {offsets = [0, 0], sizes = [8, 32], strides = [1, 1]} : vector<8x256xf32> to vector<8x32xf32>
    %572 = arith.negf %571 : vector<8x32xf32>
    %573 = math.exp %572 : vector<8x32xf32>
    %cst_102 = arith.constant 1.000000e+00 : f32
    %574 = vector.broadcast %cst_102 : f32 to vector<8x32xf32>
    %575 = arith.addf %574, %573 : vector<8x32xf32>
    %576 = arith.divf %574, %575 : vector<8x32xf32>
    %577 = vector.extract_strided_slice %570 {offsets = [0, 32], sizes = [8, 32], strides = [1, 1]} : vector<8x256xf32> to vector<8x32xf32>
    %578 = arith.negf %577 : vector<8x32xf32>
    %579 = math.exp %578 : vector<8x32xf32>
    %cst_103 = arith.constant 1.000000e+00 : f32
    %580 = vector.broadcast %cst_103 : f32 to vector<8x32xf32>
    %581 = arith.addf %580, %579 : vector<8x32xf32>
    %582 = arith.divf %580, %581 : vector<8x32xf32>
    %583 = vector.extract_strided_slice %570 {offsets = [0, 64], sizes = [8, 32], strides = [1, 1]} : vector<8x256xf32> to vector<8x32xf32>
    %584 = math.tanh %583 : vector<8x32xf32>
    %585 = vector.extract_strided_slice %570 {offsets = [0, 96], sizes = [8, 32], strides = [1, 1]} : vector<8x256xf32> to vector<8x32xf32>
    %586 = arith.negf %585 : vector<8x32xf32>
    %587 = math.exp %586 : vector<8x32xf32>
    %cst_104 = arith.constant 1.000000e+00 : f32
    %588 = vector.broadcast %cst_104 : f32 to vector<8x32xf32>
    %589 = arith.addf %588, %587 : vector<8x32xf32>
    %590 = arith.divf %588, %589 : vector<8x32xf32>
    %591 = vector.extract_strided_slice %570 {offsets = [0, 128], sizes = [8, 32], strides = [1, 1]} : vector<8x256xf32> to vector<8x32xf32>
    %592 = arith.negf %591 : vector<8x32xf32>
    %593 = math.exp %592 : vector<8x32xf32>
    %cst_105 = arith.constant 1.000000e+00 : f32
    %594 = vector.broadcast %cst_105 : f32 to vector<8x32xf32>
    %595 = arith.addf %594, %593 : vector<8x32xf32>
    %596 = arith.divf %594, %595 : vector<8x32xf32>
    %597 = vector.extract_strided_slice %570 {offsets = [0, 160], sizes = [8, 32], strides = [1, 1]} : vector<8x256xf32> to vector<8x32xf32>
    %598 = arith.negf %597 : vector<8x32xf32>
    %599 = math.exp %598 : vector<8x32xf32>
    %cst_106 = arith.constant 1.000000e+00 : f32
    %600 = vector.broadcast %cst_106 : f32 to vector<8x32xf32>
    %601 = arith.addf %600, %599 : vector<8x32xf32>
    %602 = arith.divf %600, %601 : vector<8x32xf32>
    %603 = vector.extract_strided_slice %570 {offsets = [0, 192], sizes = [8, 32], strides = [1, 1]} : vector<8x256xf32> to vector<8x32xf32>
    %604 = math.tanh %603 : vector<8x32xf32>
    %605 = vector.extract_strided_slice %570 {offsets = [0, 224], sizes = [8, 32], strides = [1, 1]} : vector<8x256xf32> to vector<8x32xf32>
    %606 = arith.negf %605 : vector<8x32xf32>
    %607 = math.exp %606 : vector<8x32xf32>
    %cst_107 = arith.constant 1.000000e+00 : f32
    %608 = vector.broadcast %cst_107 : f32 to vector<8x32xf32>
    %609 = arith.addf %608, %607 : vector<8x32xf32>
    %610 = arith.divf %608, %609 : vector<8x32xf32>
    %611 = arith.mulf %582, %556 : vector<8x32xf32>
    %612 = arith.mulf %576, %584 : vector<8x32xf32>
    %613 = arith.addf %611, %612 : vector<8x32xf32>
    %614 = math.tanh %613 : vector<8x32xf32>
    %615 = arith.mulf %590, %614 : vector<8x32xf32>
    %616 = arith.mulf %602, %561 : vector<8x32xf32>
    %617 = arith.mulf %596, %604 : vector<8x32xf32>
    %618 = arith.addf %616, %617 : vector<8x32xf32>
    %619 = math.tanh %618 : vector<8x32xf32>
    %620 = arith.mulf %610, %619 : vector<8x32xf32>
    %621 = vector.extract_strided_slice %103 {offsets = [72, 0], sizes = [8, 128], strides = [1, 1]} : vector<96x256xf32> to vector<8x128xf32>
    %622 = vector.extract_strided_slice %103 {offsets = [16, 128], sizes = [8, 128], strides = [1, 1]} : vector<96x256xf32> to vector<8x128xf32>
    %623 = tpu.concatenate %621, %622 in 1 : vector<8x128xf32>, vector<8x128xf32> -> vector<8x256xf32>
    %624 = tpu.concatenate %615, %620 in 1 : vector<8x32xf32>, vector<8x32xf32> -> vector<8x64xf32>
    %c0_108 = arith.constant 0 : index
    %c0_109 = arith.constant 0 : index
    %625 = vector.load %arg6[%c0_108, %c0_109] : memref<64x256xf32, #tpu.memory_space<vmem>>, vector<64x256xf32>
    %cst_110 = arith.constant dense<0.000000e+00> : vector<8x256xf32>
    %626 = tpu.matmul %624, %625, %cst_110 {dimension_numbers = #tpu.dot_dimension_numbers<[1], [0], [0], [1], [0, 0, 1, 1], [], []>} : vector<8x64xf32>, vector<64x256xf32>, vector<8x256xf32> -> vector<8x256xf32>
    %627 = arith.addf %623, %626 : vector<8x256xf32>
    %628 = vector.extract_strided_slice %627 {offsets = [0, 0], sizes = [8, 32], strides = [1, 1]} : vector<8x256xf32> to vector<8x32xf32>
    %629 = arith.negf %628 : vector<8x32xf32>
    %630 = math.exp %629 : vector<8x32xf32>
    %cst_111 = arith.constant 1.000000e+00 : f32
    %631 = vector.broadcast %cst_111 : f32 to vector<8x32xf32>
    %632 = arith.addf %631, %630 : vector<8x32xf32>
    %633 = arith.divf %631, %632 : vector<8x32xf32>
    %634 = vector.extract_strided_slice %627 {offsets = [0, 32], sizes = [8, 32], strides = [1, 1]} : vector<8x256xf32> to vector<8x32xf32>
    %635 = arith.negf %634 : vector<8x32xf32>
    %636 = math.exp %635 : vector<8x32xf32>
    %cst_112 = arith.constant 1.000000e+00 : f32
    %637 = vector.broadcast %cst_112 : f32 to vector<8x32xf32>
    %638 = arith.addf %637, %636 : vector<8x32xf32>
    %639 = arith.divf %637, %638 : vector<8x32xf32>
    %640 = vector.extract_strided_slice %627 {offsets = [0, 64], sizes = [8, 32], strides = [1, 1]} : vector<8x256xf32> to vector<8x32xf32>
    %641 = math.tanh %640 : vector<8x32xf32>
    %642 = vector.extract_strided_slice %627 {offsets = [0, 96], sizes = [8, 32], strides = [1, 1]} : vector<8x256xf32> to vector<8x32xf32>
    %643 = arith.negf %642 : vector<8x32xf32>
    %644 = math.exp %643 : vector<8x32xf32>
    %cst_113 = arith.constant 1.000000e+00 : f32
    %645 = vector.broadcast %cst_113 : f32 to vector<8x32xf32>
    %646 = arith.addf %645, %644 : vector<8x32xf32>
    %647 = arith.divf %645, %646 : vector<8x32xf32>
    %648 = vector.extract_strided_slice %627 {offsets = [0, 128], sizes = [8, 32], strides = [1, 1]} : vector<8x256xf32> to vector<8x32xf32>
    %649 = arith.negf %648 : vector<8x32xf32>
    %650 = math.exp %649 : vector<8x32xf32>
    %cst_114 = arith.constant 1.000000e+00 : f32
    %651 = vector.broadcast %cst_114 : f32 to vector<8x32xf32>
    %652 = arith.addf %651, %650 : vector<8x32xf32>
    %653 = arith.divf %651, %652 : vector<8x32xf32>
    %654 = vector.extract_strided_slice %627 {offsets = [0, 160], sizes = [8, 32], strides = [1, 1]} : vector<8x256xf32> to vector<8x32xf32>
    %655 = arith.negf %654 : vector<8x32xf32>
    %656 = math.exp %655 : vector<8x32xf32>
    %cst_115 = arith.constant 1.000000e+00 : f32
    %657 = vector.broadcast %cst_115 : f32 to vector<8x32xf32>
    %658 = arith.addf %657, %656 : vector<8x32xf32>
    %659 = arith.divf %657, %658 : vector<8x32xf32>
    %660 = vector.extract_strided_slice %627 {offsets = [0, 192], sizes = [8, 32], strides = [1, 1]} : vector<8x256xf32> to vector<8x32xf32>
    %661 = math.tanh %660 : vector<8x32xf32>
    %662 = vector.extract_strided_slice %627 {offsets = [0, 224], sizes = [8, 32], strides = [1, 1]} : vector<8x256xf32> to vector<8x32xf32>
    %663 = arith.negf %662 : vector<8x32xf32>
    %664 = math.exp %663 : vector<8x32xf32>
    %cst_116 = arith.constant 1.000000e+00 : f32
    %665 = vector.broadcast %cst_116 : f32 to vector<8x32xf32>
    %666 = arith.addf %665, %664 : vector<8x32xf32>
    %667 = arith.divf %665, %666 : vector<8x32xf32>
    %668 = arith.mulf %639, %613 : vector<8x32xf32>
    %669 = arith.mulf %633, %641 : vector<8x32xf32>
    %670 = arith.addf %668, %669 : vector<8x32xf32>
    %671 = math.tanh %670 : vector<8x32xf32>
    %672 = arith.mulf %647, %671 : vector<8x32xf32>
    %673 = arith.mulf %659, %618 : vector<8x32xf32>
    %674 = arith.mulf %653, %661 : vector<8x32xf32>
    %675 = arith.addf %673, %674 : vector<8x32xf32>
    %676 = math.tanh %675 : vector<8x32xf32>
    %677 = arith.mulf %667, %676 : vector<8x32xf32>
    %678 = vector.extract_strided_slice %103 {offsets = [80, 0], sizes = [8, 128], strides = [1, 1]} : vector<96x256xf32> to vector<8x128xf32>
    %679 = vector.extract_strided_slice %103 {offsets = [8, 128], sizes = [8, 128], strides = [1, 1]} : vector<96x256xf32> to vector<8x128xf32>
    %680 = tpu.concatenate %678, %679 in 1 : vector<8x128xf32>, vector<8x128xf32> -> vector<8x256xf32>
    %681 = tpu.concatenate %672, %677 in 1 : vector<8x32xf32>, vector<8x32xf32> -> vector<8x64xf32>
    %c0_117 = arith.constant 0 : index
    %c0_118 = arith.constant 0 : index
    %682 = vector.load %arg6[%c0_117, %c0_118] : memref<64x256xf32, #tpu.memory_space<vmem>>, vector<64x256xf32>
    %cst_119 = arith.constant dense<0.000000e+00> : vector<8x256xf32>
    %683 = tpu.matmul %681, %682, %cst_119 {dimension_numbers = #tpu.dot_dimension_numbers<[1], [0], [0], [1], [0, 0, 1, 1], [], []>} : vector<8x64xf32>, vector<64x256xf32>, vector<8x256xf32> -> vector<8x256xf32>
    %684 = arith.addf %680, %683 : vector<8x256xf32>
    %685 = vector.extract_strided_slice %684 {offsets = [0, 0], sizes = [8, 32], strides = [1, 1]} : vector<8x256xf32> to vector<8x32xf32>
    %686 = arith.negf %685 : vector<8x32xf32>
    %687 = math.exp %686 : vector<8x32xf32>
    %cst_120 = arith.constant 1.000000e+00 : f32
    %688 = vector.broadcast %cst_120 : f32 to vector<8x32xf32>
    %689 = arith.addf %688, %687 : vector<8x32xf32>
    %690 = arith.divf %688, %689 : vector<8x32xf32>
    %691 = vector.extract_strided_slice %684 {offsets = [0, 32], sizes = [8, 32], strides = [1, 1]} : vector<8x256xf32> to vector<8x32xf32>
    %692 = arith.negf %691 : vector<8x32xf32>
    %693 = math.exp %692 : vector<8x32xf32>
    %cst_121 = arith.constant 1.000000e+00 : f32
    %694 = vector.broadcast %cst_121 : f32 to vector<8x32xf32>
    %695 = arith.addf %694, %693 : vector<8x32xf32>
    %696 = arith.divf %694, %695 : vector<8x32xf32>
    %697 = vector.extract_strided_slice %684 {offsets = [0, 64], sizes = [8, 32], strides = [1, 1]} : vector<8x256xf32> to vector<8x32xf32>
    %698 = math.tanh %697 : vector<8x32xf32>
    %699 = vector.extract_strided_slice %684 {offsets = [0, 96], sizes = [8, 32], strides = [1, 1]} : vector<8x256xf32> to vector<8x32xf32>
    %700 = arith.negf %699 : vector<8x32xf32>
    %701 = math.exp %700 : vector<8x32xf32>
    %cst_122 = arith.constant 1.000000e+00 : f32
    %702 = vector.broadcast %cst_122 : f32 to vector<8x32xf32>
    %703 = arith.addf %702, %701 : vector<8x32xf32>
    %704 = arith.divf %702, %703 : vector<8x32xf32>
    %705 = vector.extract_strided_slice %684 {offsets = [0, 128], sizes = [8, 32], strides = [1, 1]} : vector<8x256xf32> to vector<8x32xf32>
    %706 = arith.negf %705 : vector<8x32xf32>
    %707 = math.exp %706 : vector<8x32xf32>
    %cst_123 = arith.constant 1.000000e+00 : f32
    %708 = vector.broadcast %cst_123 : f32 to vector<8x32xf32>
    %709 = arith.addf %708, %707 : vector<8x32xf32>
    %710 = arith.divf %708, %709 : vector<8x32xf32>
    %711 = vector.extract_strided_slice %684 {offsets = [0, 160], sizes = [8, 32], strides = [1, 1]} : vector<8x256xf32> to vector<8x32xf32>
    %712 = arith.negf %711 : vector<8x32xf32>
    %713 = math.exp %712 : vector<8x32xf32>
    %cst_124 = arith.constant 1.000000e+00 : f32
    %714 = vector.broadcast %cst_124 : f32 to vector<8x32xf32>
    %715 = arith.addf %714, %713 : vector<8x32xf32>
    %716 = arith.divf %714, %715 : vector<8x32xf32>
    %717 = vector.extract_strided_slice %684 {offsets = [0, 192], sizes = [8, 32], strides = [1, 1]} : vector<8x256xf32> to vector<8x32xf32>
    %718 = math.tanh %717 : vector<8x32xf32>
    %719 = vector.extract_strided_slice %684 {offsets = [0, 224], sizes = [8, 32], strides = [1, 1]} : vector<8x256xf32> to vector<8x32xf32>
    %720 = arith.negf %719 : vector<8x32xf32>
    %721 = math.exp %720 : vector<8x32xf32>
    %cst_125 = arith.constant 1.000000e+00 : f32
    %722 = vector.broadcast %cst_125 : f32 to vector<8x32xf32>
    %723 = arith.addf %722, %721 : vector<8x32xf32>
    %724 = arith.divf %722, %723 : vector<8x32xf32>
    %725 = arith.mulf %696, %670 : vector<8x32xf32>
    %726 = arith.mulf %690, %698 : vector<8x32xf32>
    %727 = arith.addf %725, %726 : vector<8x32xf32>
    %728 = math.tanh %727 : vector<8x32xf32>
    %729 = arith.mulf %704, %728 : vector<8x32xf32>
    %730 = arith.mulf %716, %675 : vector<8x32xf32>
    %731 = arith.mulf %710, %718 : vector<8x32xf32>
    %732 = arith.addf %730, %731 : vector<8x32xf32>
    %733 = math.tanh %732 : vector<8x32xf32>
    %734 = arith.mulf %724, %733 : vector<8x32xf32>
    %735 = vector.extract_strided_slice %103 {offsets = [88, 0], sizes = [8, 128], strides = [1, 1]} : vector<96x256xf32> to vector<8x128xf32>
    %736 = vector.extract_strided_slice %103 {offsets = [0, 128], sizes = [8, 128], strides = [1, 1]} : vector<96x256xf32> to vector<8x128xf32>
    %737 = tpu.concatenate %735, %736 in 1 : vector<8x128xf32>, vector<8x128xf32> -> vector<8x256xf32>
    %738 = tpu.concatenate %729, %734 in 1 : vector<8x32xf32>, vector<8x32xf32> -> vector<8x64xf32>
    %c0_126 = arith.constant 0 : index
    %c0_127 = arith.constant 0 : index
    %739 = vector.load %arg6[%c0_126, %c0_127] : memref<64x256xf32, #tpu.memory_space<vmem>>, vector<64x256xf32>
    %cst_128 = arith.constant dense<0.000000e+00> : vector<8x256xf32>
    %740 = tpu.matmul %738, %739, %cst_128 {dimension_numbers = #tpu.dot_dimension_numbers<[1], [0], [0], [1], [0, 0, 1, 1], [], []>} : vector<8x64xf32>, vector<64x256xf32>, vector<8x256xf32> -> vector<8x256xf32>
    %741 = arith.addf %737, %740 : vector<8x256xf32>
    %742 = vector.extract_strided_slice %741 {offsets = [0, 0], sizes = [8, 32], strides = [1, 1]} : vector<8x256xf32> to vector<8x32xf32>
    %743 = arith.negf %742 : vector<8x32xf32>
    %744 = math.exp %743 : vector<8x32xf32>
    %cst_129 = arith.constant 1.000000e+00 : f32
    %745 = vector.broadcast %cst_129 : f32 to vector<8x32xf32>
    %746 = arith.addf %745, %744 : vector<8x32xf32>
    %747 = arith.divf %745, %746 : vector<8x32xf32>
    %748 = vector.extract_strided_slice %741 {offsets = [0, 32], sizes = [8, 32], strides = [1, 1]} : vector<8x256xf32> to vector<8x32xf32>
    %749 = arith.negf %748 : vector<8x32xf32>
    %750 = math.exp %749 : vector<8x32xf32>
    %cst_130 = arith.constant 1.000000e+00 : f32
    %751 = vector.broadcast %cst_130 : f32 to vector<8x32xf32>
    %752 = arith.addf %751, %750 : vector<8x32xf32>
    %753 = arith.divf %751, %752 : vector<8x32xf32>
    %754 = vector.extract_strided_slice %741 {offsets = [0, 64], sizes = [8, 32], strides = [1, 1]} : vector<8x256xf32> to vector<8x32xf32>
    %755 = math.tanh %754 : vector<8x32xf32>
    %756 = vector.extract_strided_slice %741 {offsets = [0, 96], sizes = [8, 32], strides = [1, 1]} : vector<8x256xf32> to vector<8x32xf32>
    %757 = arith.negf %756 : vector<8x32xf32>
    %758 = math.exp %757 : vector<8x32xf32>
    %cst_131 = arith.constant 1.000000e+00 : f32
    %759 = vector.broadcast %cst_131 : f32 to vector<8x32xf32>
    %760 = arith.addf %759, %758 : vector<8x32xf32>
    %761 = arith.divf %759, %760 : vector<8x32xf32>
    %762 = vector.extract_strided_slice %741 {offsets = [0, 128], sizes = [8, 32], strides = [1, 1]} : vector<8x256xf32> to vector<8x32xf32>
    %763 = arith.negf %762 : vector<8x32xf32>
    %764 = math.exp %763 : vector<8x32xf32>
    %cst_132 = arith.constant 1.000000e+00 : f32
    %765 = vector.broadcast %cst_132 : f32 to vector<8x32xf32>
    %766 = arith.addf %765, %764 : vector<8x32xf32>
    %767 = arith.divf %765, %766 : vector<8x32xf32>
    %768 = vector.extract_strided_slice %741 {offsets = [0, 160], sizes = [8, 32], strides = [1, 1]} : vector<8x256xf32> to vector<8x32xf32>
    %769 = arith.negf %768 : vector<8x32xf32>
    %770 = math.exp %769 : vector<8x32xf32>
    %cst_133 = arith.constant 1.000000e+00 : f32
    %771 = vector.broadcast %cst_133 : f32 to vector<8x32xf32>
    %772 = arith.addf %771, %770 : vector<8x32xf32>
    %773 = arith.divf %771, %772 : vector<8x32xf32>
    %774 = vector.extract_strided_slice %741 {offsets = [0, 192], sizes = [8, 32], strides = [1, 1]} : vector<8x256xf32> to vector<8x32xf32>
    %775 = math.tanh %774 : vector<8x32xf32>
    %776 = vector.extract_strided_slice %741 {offsets = [0, 224], sizes = [8, 32], strides = [1, 1]} : vector<8x256xf32> to vector<8x32xf32>
    %777 = arith.negf %776 : vector<8x32xf32>
    %778 = math.exp %777 : vector<8x32xf32>
    %cst_134 = arith.constant 1.000000e+00 : f32
    %779 = vector.broadcast %cst_134 : f32 to vector<8x32xf32>
    %780 = arith.addf %779, %778 : vector<8x32xf32>
    %781 = arith.divf %779, %780 : vector<8x32xf32>
    %782 = arith.mulf %753, %727 : vector<8x32xf32>
    %783 = arith.mulf %747, %755 : vector<8x32xf32>
    %784 = arith.addf %782, %783 : vector<8x32xf32>
    %785 = math.tanh %784 : vector<8x32xf32>
    %786 = arith.mulf %761, %785 : vector<8x32xf32>
    %787 = arith.mulf %773, %732 : vector<8x32xf32>
    %788 = arith.mulf %767, %775 : vector<8x32xf32>
    %789 = arith.addf %787, %788 : vector<8x32xf32>
    %790 = math.tanh %789 : vector<8x32xf32>
    %791 = arith.mulf %781, %790 : vector<8x32xf32>
    %792 = tpu.concatenate %791, %786 in 1 : vector<8x32xf32>, vector<8x32xf32> -> vector<8x64xf32>
    %793 = tpu.concatenate %159, %791 in 1 : vector<8x32xf32>, vector<8x32xf32> -> vector<8x64xf32>
    %794 = tpu.concatenate %216, %734 in 1 : vector<8x32xf32>, vector<8x32xf32> -> vector<8x64xf32>
    %795 = tpu.concatenate %273, %677 in 1 : vector<8x32xf32>, vector<8x32xf32> -> vector<8x64xf32>
    %796 = tpu.concatenate %330, %620 in 1 : vector<8x32xf32>, vector<8x32xf32> -> vector<8x64xf32>
    %797 = tpu.concatenate %387, %563 in 1 : vector<8x32xf32>, vector<8x32xf32> -> vector<8x64xf32>
    %798 = tpu.concatenate %444, %506 in 1 : vector<8x32xf32>, vector<8x32xf32> -> vector<8x64xf32>
    %799 = tpu.concatenate %501, %449 in 1 : vector<8x32xf32>, vector<8x32xf32> -> vector<8x64xf32>
    %800 = tpu.concatenate %558, %392 in 1 : vector<8x32xf32>, vector<8x32xf32> -> vector<8x64xf32>
    %801 = tpu.concatenate %615, %335 in 1 : vector<8x32xf32>, vector<8x32xf32> -> vector<8x64xf32>
    %802 = tpu.concatenate %672, %278 in 1 : vector<8x32xf32>, vector<8x32xf32> -> vector<8x64xf32>
    %803 = tpu.concatenate %729, %221 in 1 : vector<8x32xf32>, vector<8x32xf32> -> vector<8x64xf32>
    %804 = tpu.concatenate %786, %164 in 1 : vector<8x32xf32>, vector<8x32xf32> -> vector<8x64xf32>
    %805 = arith.mulf %793, %792 : vector<8x64xf32>
    %cst_135 = arith.constant dense<0.000000e+00> : vector<8xf32>
    %806 = vector.multi_reduction <add>, %805, %cst_135 [1] : vector<8x64xf32> to vector<8xf32>
    %807 = vector.shape_cast %806 : vector<8xf32> to vector<8x1xf32>
    %808 = arith.mulf %794, %792 : vector<8x64xf32>
    %cst_136 = arith.constant dense<0.000000e+00> : vector<8xf32>
    %809 = vector.multi_reduction <add>, %808, %cst_136 [1] : vector<8x64xf32> to vector<8xf32>
    %810 = vector.shape_cast %809 : vector<8xf32> to vector<8x1xf32>
    %811 = arith.mulf %795, %792 : vector<8x64xf32>
    %cst_137 = arith.constant dense<0.000000e+00> : vector<8xf32>
    %812 = vector.multi_reduction <add>, %811, %cst_137 [1] : vector<8x64xf32> to vector<8xf32>
    %813 = vector.shape_cast %812 : vector<8xf32> to vector<8x1xf32>
    %814 = arith.mulf %796, %792 : vector<8x64xf32>
    %cst_138 = arith.constant dense<0.000000e+00> : vector<8xf32>
    %815 = vector.multi_reduction <add>, %814, %cst_138 [1] : vector<8x64xf32> to vector<8xf32>
    %816 = vector.shape_cast %815 : vector<8xf32> to vector<8x1xf32>
    %817 = arith.mulf %797, %792 : vector<8x64xf32>
    %cst_139 = arith.constant dense<0.000000e+00> : vector<8xf32>
    %818 = vector.multi_reduction <add>, %817, %cst_139 [1] : vector<8x64xf32> to vector<8xf32>
    %819 = vector.shape_cast %818 : vector<8xf32> to vector<8x1xf32>
    %820 = arith.mulf %798, %792 : vector<8x64xf32>
    %cst_140 = arith.constant dense<0.000000e+00> : vector<8xf32>
    %821 = vector.multi_reduction <add>, %820, %cst_140 [1] : vector<8x64xf32> to vector<8xf32>
    %822 = vector.shape_cast %821 : vector<8xf32> to vector<8x1xf32>
    %823 = arith.mulf %799, %792 : vector<8x64xf32>
    %cst_141 = arith.constant dense<0.000000e+00> : vector<8xf32>
    %824 = vector.multi_reduction <add>, %823, %cst_141 [1] : vector<8x64xf32> to vector<8xf32>
    %825 = vector.shape_cast %824 : vector<8xf32> to vector<8x1xf32>
    %826 = arith.mulf %800, %792 : vector<8x64xf32>
    %cst_142 = arith.constant dense<0.000000e+00> : vector<8xf32>
    %827 = vector.multi_reduction <add>, %826, %cst_142 [1] : vector<8x64xf32> to vector<8xf32>
    %828 = vector.shape_cast %827 : vector<8xf32> to vector<8x1xf32>
    %829 = arith.mulf %801, %792 : vector<8x64xf32>
    %cst_143 = arith.constant dense<0.000000e+00> : vector<8xf32>
    %830 = vector.multi_reduction <add>, %829, %cst_143 [1] : vector<8x64xf32> to vector<8xf32>
    %831 = vector.shape_cast %830 : vector<8xf32> to vector<8x1xf32>
    %832 = arith.mulf %802, %792 : vector<8x64xf32>
    %cst_144 = arith.constant dense<0.000000e+00> : vector<8xf32>
    %833 = vector.multi_reduction <add>, %832, %cst_144 [1] : vector<8x64xf32> to vector<8xf32>
    %834 = vector.shape_cast %833 : vector<8xf32> to vector<8x1xf32>
    %835 = arith.mulf %803, %792 : vector<8x64xf32>
    %cst_145 = arith.constant dense<0.000000e+00> : vector<8xf32>
    %836 = vector.multi_reduction <add>, %835, %cst_145 [1] : vector<8x64xf32> to vector<8xf32>
    %837 = vector.shape_cast %836 : vector<8xf32> to vector<8x1xf32>
    %838 = arith.mulf %804, %792 : vector<8x64xf32>
    %cst_146 = arith.constant dense<0.000000e+00> : vector<8xf32>
    %839 = vector.multi_reduction <add>, %838, %cst_146 [1] : vector<8x64xf32> to vector<8xf32>
    %840 = vector.shape_cast %839 : vector<8xf32> to vector<8x1xf32>
    %841 = tpu.concatenate %807, %810, %813, %816, %819, %822, %825, %828, %831, %834, %837, %840 in 1 : vector<8x1xf32>, vector<8x1xf32>, vector<8x1xf32>, vector<8x1xf32>, vector<8x1xf32>, vector<8x1xf32>, vector<8x1xf32>, vector<8x1xf32>, vector<8x1xf32>, vector<8x1xf32>, vector<8x1xf32>, vector<8x1xf32> -> vector<8x12xf32>
    %cst_147 = arith.constant dense<0xFF800000> : vector<8xf32>
    %842 = vector.multi_reduction <maximumf>, %841, %cst_147 [1] : vector<8x12xf32> to vector<8xf32>
    %843 = vector.shape_cast %842 : vector<8xf32> to vector<8x1xf32>
    %844 = vector.broadcast %843 : vector<8x1xf32> to vector<8x12xf32>
    %845 = arith.subf %841, %844 : vector<8x12xf32>
    %846 = math.exp %845 : vector<8x12xf32>
    %cst_148 = arith.constant dense<0.000000e+00> : vector<8xf32>
    %847 = vector.multi_reduction <add>, %846, %cst_148 [1] : vector<8x12xf32> to vector<8xf32>
    %848 = vector.shape_cast %847 : vector<8xf32> to vector<8x1xf32>
    %849 = tpu.reciprocal %848 {approx = true} : vector<8x1xf32> -> vector<8x1xf32>
    %850 = vector.broadcast %849 : vector<8x1xf32> to vector<8x12xf32>
    %851 = arith.mulf %846, %850 : vector<8x12xf32>
    %852 = vector.extract_strided_slice %851 {offsets = [0, 0], sizes = [8, 1], strides = [1, 1]} : vector<8x12xf32> to vector<8x1xf32>
    %853 = vector.broadcast %852 : vector<8x1xf32> to vector<8x64xf32>
    %854 = arith.mulf %793, %853 : vector<8x64xf32>
    %855 = vector.extract_strided_slice %851 {offsets = [0, 1], sizes = [8, 1], strides = [1, 1]} : vector<8x12xf32> to vector<8x1xf32>
    %856 = vector.broadcast %855 : vector<8x1xf32> to vector<8x64xf32>
    %857 = arith.mulf %794, %856 : vector<8x64xf32>
    %858 = arith.addf %854, %857 : vector<8x64xf32>
    %859 = vector.extract_strided_slice %851 {offsets = [0, 2], sizes = [8, 1], strides = [1, 1]} : vector<8x12xf32> to vector<8x1xf32>
    %860 = vector.broadcast %859 : vector<8x1xf32> to vector<8x64xf32>
    %861 = arith.mulf %795, %860 : vector<8x64xf32>
    %862 = arith.addf %858, %861 : vector<8x64xf32>
    %863 = vector.extract_strided_slice %851 {offsets = [0, 3], sizes = [8, 1], strides = [1, 1]} : vector<8x12xf32> to vector<8x1xf32>
    %864 = vector.broadcast %863 : vector<8x1xf32> to vector<8x64xf32>
    %865 = arith.mulf %796, %864 : vector<8x64xf32>
    %866 = arith.addf %862, %865 : vector<8x64xf32>
    %867 = vector.extract_strided_slice %851 {offsets = [0, 4], sizes = [8, 1], strides = [1, 1]} : vector<8x12xf32> to vector<8x1xf32>
    %868 = vector.broadcast %867 : vector<8x1xf32> to vector<8x64xf32>
    %869 = arith.mulf %797, %868 : vector<8x64xf32>
    %870 = arith.addf %866, %869 : vector<8x64xf32>
    %871 = vector.extract_strided_slice %851 {offsets = [0, 5], sizes = [8, 1], strides = [1, 1]} : vector<8x12xf32> to vector<8x1xf32>
    %872 = vector.broadcast %871 : vector<8x1xf32> to vector<8x64xf32>
    %873 = arith.mulf %798, %872 : vector<8x64xf32>
    %874 = arith.addf %870, %873 : vector<8x64xf32>
    %875 = vector.extract_strided_slice %851 {offsets = [0, 6], sizes = [8, 1], strides = [1, 1]} : vector<8x12xf32> to vector<8x1xf32>
    %876 = vector.broadcast %875 : vector<8x1xf32> to vector<8x64xf32>
    %877 = arith.mulf %799, %876 : vector<8x64xf32>
    %878 = arith.addf %874, %877 : vector<8x64xf32>
    %879 = vector.extract_strided_slice %851 {offsets = [0, 7], sizes = [8, 1], strides = [1, 1]} : vector<8x12xf32> to vector<8x1xf32>
    %880 = vector.broadcast %879 : vector<8x1xf32> to vector<8x64xf32>
    %881 = arith.mulf %800, %880 : vector<8x64xf32>
    %882 = arith.addf %878, %881 : vector<8x64xf32>
    %883 = vector.extract_strided_slice %851 {offsets = [0, 8], sizes = [8, 1], strides = [1, 1]} : vector<8x12xf32> to vector<8x1xf32>
    %884 = vector.broadcast %883 : vector<8x1xf32> to vector<8x64xf32>
    %885 = arith.mulf %801, %884 : vector<8x64xf32>
    %886 = arith.addf %882, %885 : vector<8x64xf32>
    %887 = vector.extract_strided_slice %851 {offsets = [0, 9], sizes = [8, 1], strides = [1, 1]} : vector<8x12xf32> to vector<8x1xf32>
    %888 = vector.broadcast %887 : vector<8x1xf32> to vector<8x64xf32>
    %889 = arith.mulf %802, %888 : vector<8x64xf32>
    %890 = arith.addf %886, %889 : vector<8x64xf32>
    %891 = vector.extract_strided_slice %851 {offsets = [0, 10], sizes = [8, 1], strides = [1, 1]} : vector<8x12xf32> to vector<8x1xf32>
    %892 = vector.broadcast %891 : vector<8x1xf32> to vector<8x64xf32>
    %893 = arith.mulf %803, %892 : vector<8x64xf32>
    %894 = arith.addf %890, %893 : vector<8x64xf32>
    %895 = vector.extract_strided_slice %851 {offsets = [0, 11], sizes = [8, 1], strides = [1, 1]} : vector<8x12xf32> to vector<8x1xf32>
    %896 = vector.broadcast %895 : vector<8x1xf32> to vector<8x64xf32>
    %897 = arith.mulf %804, %896 : vector<8x64xf32>
    %898 = arith.addf %894, %897 : vector<8x64xf32>
    %899 = tpu.concatenate %98, %898 in 1 : vector<8x48xf32>, vector<8x64xf32> -> vector<8x112xf32>
    %900 = math.tanh %899 : vector<8x112xf32>
    %c0_149 = arith.constant 0 : index
    %c0_150 = arith.constant 0 : index
    %901 = vector.load %arg8[%c0_149, %c0_150] : memref<112x56xf32, #tpu.memory_space<vmem>>, vector<112x56xf32>
    %cst_151 = arith.constant dense<0.000000e+00> : vector<8x56xf32>
    %902 = tpu.matmul %900, %901, %cst_151 {dimension_numbers = #tpu.dot_dimension_numbers<[1], [0], [0], [1], [0, 0, 1, 1], [], []>} : vector<8x112xf32>, vector<112x56xf32>, vector<8x56xf32> -> vector<8x56xf32>
    %c0_152 = arith.constant 0 : index
    %c0_153 = arith.constant 0 : index
    %903 = vector.load %arg9[%c0_152, %c0_153] : memref<1x56xf32, #tpu.memory_space<vmem>>, vector<1x56xf32>
    %904 = vector.broadcast %903 : vector<1x56xf32> to vector<8x56xf32>
    %905 = arith.addf %902, %904 : vector<8x56xf32>
    %906 = math.tanh %905 : vector<8x56xf32>
    %c0_154 = arith.constant 0 : index
    %c0_155 = arith.constant 0 : index
    %907 = vector.load %arg10[%c0_154, %c0_155] : memref<56x5xf32, #tpu.memory_space<vmem>>, vector<56x5xf32>
    %cst_156 = arith.constant dense<0.000000e+00> : vector<8x5xf32>
    %908 = tpu.matmul %906, %907, %cst_156 {dimension_numbers = #tpu.dot_dimension_numbers<[1], [0], [0], [1], [0, 0, 1, 1], [], []>} : vector<8x56xf32>, vector<56x5xf32>, vector<8x5xf32> -> vector<8x5xf32>
    %c0_157 = arith.constant 0 : index
    %c0_158 = arith.constant 0 : index
    %909 = vector.load %arg11[%c0_157, %c0_158] : memref<1x5xf32, #tpu.memory_space<vmem>>, vector<1x5xf32>
    %910 = vector.broadcast %909 : vector<1x5xf32> to vector<8x5xf32>
    %911 = arith.addf %908, %910 : vector<8x5xf32>
    %c0_159 = arith.constant 0 : index
    %c0_160 = arith.constant 0 : index
    %912 = vector.load %arg12[%c0_159, %c0_160] : memref<8x5xf32, #tpu.memory_space<vmem>>, vector<8x5xf32>
    tpu.vector_store %arg12[%c0_159, %c0_160], %911 {strides = array<i32>} : memref<8x5xf32, #tpu.memory_space<vmem>>, vector<8x5xf32>,
    return
  }
  func.func @transform_0(%arg0: i32) -> (i32, i32) {
    %c0_i32 = arith.constant 0 : i32
    %c0_i32_0 = arith.constant 0 : i32
    %c0_i32_1 = arith.constant 0 : i32
    return %c0_i32, %c0_i32_0 : i32, i32
  }
  func.func @transform_1(%arg0: i32) -> (i32, i32) {
    %c0_i32 = arith.constant 0 : i32
    %c0_i32_0 = arith.constant 0 : i32
    %c0_i32_1 = arith.constant 0 : i32
    return %c0_i32, %c0_i32_0 : i32, i32
  }
  func.func @transform_2(%arg0: i32) -> (i32, i32) {
    %c0_i32 = arith.constant 0 : i32
    %c0_i32_0 = arith.constant 0 : i32
    %c0_i32_1 = arith.constant 0 : i32
    return %c0_i32, %c0_i32_0 : i32, i32
  }
  func.func @transform_3(%arg0: i32) -> (i32, i32) {
    %c0_i32 = arith.constant 0 : i32
    %c0_i32_0 = arith.constant 0 : i32
    %c0_i32_1 = arith.constant 0 : i32
    return %c0_i32, %c0_i32_0 : i32, i32
  }
  func.func @transform_4(%arg0: i32) -> (i32, i32) {
    %c0_i32 = arith.constant 0 : i32
    %c0_i32_0 = arith.constant 0 : i32
    %c0_i32_1 = arith.constant 0 : i32
    return %c0_i32, %c0_i32_0 : i32, i32
  }
  func.func @transform_5(%arg0: i32) -> (i32, i32) {
    %c0_i32 = arith.constant 0 : i32
    %c0_i32_0 = arith.constant 0 : i32
    %c0_i32_1 = arith.constant 0 : i32
    return %c0_i32, %c0_i32_0 : i32, i32
  }
  func.func @transform_6(%arg0: i32) -> (i32, i32) {
    %c0_i32 = arith.constant 0 : i32
    %c0_i32_0 = arith.constant 0 : i32
    %c0_i32_1 = arith.constant 0 : i32
    return %c0_i32, %c0_i32_0 : i32, i32
  }
  func.func @transform_7(%arg0: i32) -> (i32, i32) {
    %c0_i32 = arith.constant 0 : i32
    %c0_i32_0 = arith.constant 0 : i32
    %c0_i32_1 = arith.constant 0 : i32
    return %c0_i32, %c0_i32_0 : i32, i32
  }
  func.func @transform_8(%arg0: i32) -> (i32, i32) {
    %c0_i32 = arith.constant 0 : i32
    %c0_i32_0 = arith.constant 0 : i32
    %c0_i32_1 = arith.constant 0 : i32
    return %c0_i32, %c0_i32_0 : i32, i32
  }
  func.func @transform_9(%arg0: i32) -> (i32, i32) {
    %c0_i32 = arith.constant 0 : i32
    %c0_i32_0 = arith.constant 0 : i32
    %c0_i32_1 = arith.constant 0 : i32
    return %c0_i32, %c0_i32_0 : i32, i32
  }
  func.func @transform_10(%arg0: i32) -> (i32, i32) {
    %c0_i32 = arith.constant 0 : i32
    %c0_i32_0 = arith.constant 0 : i32
    %c0_i32_1 = arith.constant 0 : i32
    return %c0_i32, %c0_i32_0 : i32, i32
  }
  func.func @transform_11(%arg0: i32) -> (i32, i32) {
    %c0_i32 = arith.constant 0 : i32
    %c0_i32_0 = arith.constant 0 : i32
    %c0_i32_1 = arith.constant 0 : i32
    return %c0_i32, %c0_i32_0 : i32, i32
  }
}

</mosaic_0001>

<llo_original>
// kernel: tpu_custom_call.1
$region0: #{tpu_custom_call.1}
  #allocation0 [shape = 'u32[]', space=smem, size = 0x4, offset = 0x4, fixed_abs, tag = 'smem constant byte address 0x4 - core index']
  #allocation1 [shape = 'u32[72,128]{1,0:T(1,128)}', space=vmem, size = 0x9000, scoped, tag = 'internal scratch']
  #allocation2 [shape = 'f32[144,16]{1,0:T(8,128)}', space=vmem, size = 0x12000, scoped, tag = 'scratch operand']
  %s0 = inlined_call_operand.vmem [shape: s32[96,1], index: 0, kind: input, shape index: {}]
  %s1 = inlined_call_operand.vmem [shape: f32[50,16], index: 1, kind: input, shape index: {}]
  %s2 = inlined_call_operand.vmem [shape: f32[64,48], index: 2, kind: input, shape index: {}]
  %s3 = inlined_call_operand.vmem [shape: f32[1,48], index: 3, kind: input, shape index: {}]
  %s4 = inlined_call_operand.vmem [shape: f32[16,256], index: 4, kind: input, shape index: {}]
  %s5 = inlined_call_operand.vmem [shape: f32[64,256], index: 5, kind: input, shape index: {}]
  %s6 = inlined_call_operand.vmem [shape: f32[1,256], index: 6, kind: input, shape index: {}]
  %s7 = inlined_call_operand.vmem [shape: f32[112,56], index: 7, kind: input, shape index: {}]
  %s8 = inlined_call_operand.vmem [shape: f32[1,56], index: 8, kind: input, shape index: {}]
  %s9 = inlined_call_operand.vmem [shape: f32[56,5], index: 9, kind: input, shape index: {}]
  %s10 = inlined_call_operand.vmem [shape: f32[1,5], index: 10, kind: input, shape index: {}]
  %s11 = inlined_call_operand.hbm [shape: f32[8,5], index: 11, kind: output, shape index: {}]
  %s12 = sld [smem:[#allocation0]]
  $region54: #{tpu_custom_call.1} parent=0
    _
  %s14 = ssub.s32 1, %s12
  %s15 = scalar_select 0, %s14, %s12
  $region1: #{tpu_custom_call.1} parent=0
    #allocation3 [shape = 'u8[4096]{0}', space=vmem, size = 0x1000, scoped, tag = 'output window, operand 0, single buffered']
    #allocation4 [shape = 's32[1]{0}', space=sflag, size = 0x4, scoped, tag = 'scoped memory for tpu_custom_call.1']
    %16 = vsyncpa [#allocation4], 0
    // Predicated region
    $region2: #{tpu_custom_call.1} parent=1 // pred_check
      _
    $region3: #{tpu_custom_call.1} parent=1 // pred_check_branch
      %18 = sbr.rel (0) target = $region5
    $region4: #{tpu_custom_call.1} parent=1 // pred_region
      _
    $region5: #{tpu_custom_call.1} parent=1 // pred_fallthru
      _
    // Predicated region
    $region6: #{tpu_custom_call.1} parent=1 // pred_check
      _
    $region7: #{tpu_custom_call.1} parent=1 // pred_check_branch
      %20 = sbr.rel (0) target = $region9
    $region8: #{tpu_custom_call.1} parent=1 // pred_region
      _
    $region9: #{tpu_custom_call.1} parent=1 // pred_fallthru
      _
    // Predicated region
    $region10: #{tpu_custom_call.1} parent=1 // pred_check
      _
    $region11: #{tpu_custom_call.1} parent=1 // pred_check_branch
      %22 = sbr.rel (0) target = $region13
    $region12: #{tpu_custom_call.1} parent=1 // pred_region
      _
    $region13: #{tpu_custom_call.1} parent=1 // pred_fallthru
      _
    // Predicated region
    $region14: #{tpu_custom_call.1} parent=1 // pred_check
      _
    $region15: #{tpu_custom_call.1} parent=1 // pred_check_branch
      %24 = sbr.rel (0) target = $region17
    $region16: #{tpu_custom_call.1} parent=1 // pred_region
      _
    $region17: #{tpu_custom_call.1} parent=1 // pred_fallthru
      _
    // Predicated region
    $region18: #{tpu_custom_call.1} parent=1 // pred_check
      _
    $region19: #{tpu_custom_call.1} parent=1 // pred_check_branch
      %26 = sbr.rel (0) target = $region21
    $region20: #{tpu_custom_call.1} parent=1 // pred_region
      _
    $region21: #{tpu_custom_call.1} parent=1 // pred_fallthru
      _
    // Predicated region
    $region22: #{tpu_custom_call.1} parent=1 // pred_check
      _
    $region23: #{tpu_custom_call.1} parent=1 // pred_check_branch
      %28 = sbr.rel (0) target = $region25
    $region24: #{tpu_custom_call.1} parent=1 // pred_region
      _
    $region25: #{tpu_custom_call.1} parent=1 // pred_fallthru
      _
    // Predicated region
    $region26: #{tpu_custom_call.1} parent=1 // pred_check
      _
    $region27: #{tpu_custom_call.1} parent=1 // pred_check_branch
      %30 = sbr.rel (0) target = $region29
    $region28: #{tpu_custom_call.1} parent=1 // pred_region
      _
    $region29: #{tpu_custom_call.1} parent=1 // pred_fallthru
      _
    // Predicated region
    $region30: #{tpu_custom_call.1} parent=1 // pred_check
      _
    $region31: #{tpu_custom_call.1} parent=1 // pred_check_branch
      %32 = sbr.rel (0) target = $region33
    $region32: #{tpu_custom_call.1} parent=1 // pred_region
      _
    $region33: #{tpu_custom_call.1} parent=1 // pred_fallthru
      _
    // Predicated region
    $region34: #{tpu_custom_call.1} parent=1 // pred_check
      _
    $region35: #{tpu_custom_call.1} parent=1 // pred_check_branch
      %34 = sbr.rel (0) target = $region37
    $region36: #{tpu_custom_call.1} parent=1 // pred_region
      _
    $region37: #{tpu_custom_call.1} parent=1 // pred_fallthru
      _
    // Predicated region
    $region38: #{tpu_custom_call.1} parent=1 // pred_check
      _
    $region39: #{tpu_custom_call.1} parent=1 // pred_check_branch
      %36 = sbr.rel (0) target = $region41
    $region40: #{tpu_custom_call.1} parent=1 // pred_region
      _
    $region41: #{tpu_custom_call.1} parent=1 // pred_fallthru
      _
    // Predicated region
    $region42: #{tpu_custom_call.1} parent=1 // pred_check
      _
    $region43: #{tpu_custom_call.1} parent=1 // pred_check_branch
      %38 = sbr.rel (0) target = $region45
    $region44: #{tpu_custom_call.1} parent=1 // pred_region
      _
    $region45: #{tpu_custom_call.1} parent=1 // pred_fallthru
      _
    %v39 = vld [vmem:[%s0] sm:$0xff]
    %v40 = vld [vmem:[%s0 + $0x8] sm:$0xff]
    %v41 = vld [vmem:[%s0 + $0x10] sm:$0xff]
    %v42 = vld [vmem:[%s0 + $0x18] sm:$0xff]
    %v43 = vld [vmem:[%s0 + $0x20] sm:$0xff]
    %v44 = vld [vmem:[%s0 + $0x28] sm:$0xff]
    %v45 = vld [vmem:[%s0 + $0x30] sm:$0xff]
    %v46 = vld [vmem:[%s0 + $0x38] sm:$0xff]
    %v47 = vld [vmem:[%s0 + $0x40] sm:$0xff]
    %v48 = vld [vmem:[%s0 + $0x48] sm:$0xff]
    %v49 = vld [vmem:[%s0 + $0x50] sm:$0xff]
    %v50 = vld [vmem:[%s0 + $0x58] sm:$0xff]
    %v51 = vlaneseq
    %v52 = vand.u32 %v51, 127
    %53 = vset.pattern.permute.xlu0 0
    %54 = vperm.xlu0 %53, %v39
    %v55 = vpop.permute.xlu0 %54
    %56 = vset.pattern.permute.xlu0 0
    %57 = vperm.xlu0 %56, %v40
    %v58 = vpop.permute.xlu0 %57
    %59 = vset.pattern.permute.xlu0 0
    %60 = vperm.xlu0 %59, %v41
    %v61 = vpop.permute.xlu0 %60
    %62 = vset.pattern.permute.xlu0 0
    %63 = vperm.xlu0 %62, %v42
    %v64 = vpop.permute.xlu0 %63
    %65 = vset.pattern.permute.xlu0 0
    %66 = vperm.xlu0 %65, %v43
    %v67 = vpop.permute.xlu0 %66
    %68 = vset.pattern.permute.xlu0 0
    %69 = vperm.xlu0 %68, %v44
    %v70 = vpop.permute.xlu0 %69
    %71 = vset.pattern.permute.xlu0 0
    %72 = vperm.xlu0 %71, %v45
    %v73 = vpop.permute.xlu0 %72
    %74 = vset.pattern.permute.xlu0 0
    %75 = vperm.xlu0 %74, %v46
    %v76 = vpop.permute.xlu0 %75
    %77 = vset.pattern.permute.xlu0 0
    %78 = vperm.xlu0 %77, %v47
    %v79 = vpop.permute.xlu0 %78
    %80 = vset.pattern.permute.xlu0 0
    %81 = vperm.xlu0 %80, %v48
    %v82 = vpop.permute.xlu0 %81
    %83 = vset.pattern.permute.xlu0 0
    %84 = vperm.xlu0 %83, %v49
    %v85 = vpop.permute.xlu0 %84
    %86 = vset.pattern.permute.xlu0 0
    %87 = vperm.xlu0 %86, %v50
    %v88 = vpop.permute.xlu0 %87
    %vm89 = vcmp.eq.s32.totalorder %v52, %v55
    %vm90 = vcmp.eq.s32.totalorder %v52, %v58
    %vm91 = vcmp.eq.s32.totalorder %v52, %v61
    %vm92 = vcmp.eq.s32.totalorder %v52, %v64
    %vm93 = vcmp.eq.s32.totalorder %v52, %v67
    %vm94 = vcmp.eq.s32.totalorder %v52, %v70
    %vm95 = vcmp.eq.s32.totalorder %v52, %v73
    %vm96 = vcmp.eq.s32.totalorder %v52, %v76
    %vm97 = vcmp.eq.s32.totalorder %v52, %v79
    %vm98 = vcmp.eq.s32.totalorder %v52, %v82
    %vm99 = vcmp.eq.s32.totalorder %v52, %v85
    %vm100 = vcmp.eq.s32.totalorder %v52, %v88
    %v101 = vsel %vm89, 1, 0
    %v102 = vsel %vm90, 1, 0
    %v103 = vsel %vm91, 1, 0
    %v104 = vsel %vm92, 1, 0
    %v105 = vsel %vm93, 1, 0
    %v106 = vsel %vm94, 1, 0
    %v107 = vsel %vm95, 1, 0
    %v108 = vsel %vm96, 1, 0
    %v109 = vsel %vm97, 1, 0
    %v110 = vsel %vm98, 1, 0
    %v111 = vsel %vm99, 1, 0
    %v112 = vsel %vm100, 1, 0
    %v113 = vcvt.s32.f32 %v101
    %v114 = vcvt.s32.f32 %v102
    %v115 = vcvt.s32.f32 %v103
    %v116 = vcvt.s32.f32 %v104
    %v117 = vcvt.s32.f32 %v105
    %v118 = vcvt.s32.f32 %v106
    %v119 = vcvt.s32.f32 %v107
    %v120 = vcvt.s32.f32 %v108
    %v121 = vcvt.s32.f32 %v109
    %v122 = vcvt.s32.f32 %v110
    %v123 = vcvt.s32.f32 %v111
    %v124 = vcvt.s32.f32 %v112
    %v125 = vld [vmem:[%s1] sm:$0xff]
    %v126 = vld [vmem:[%s1 + $0x8] sm:$0xff]
    %v127 = vld [vmem:[%s1 + $0x10] sm:$0xff]
    %v128 = vld [vmem:[%s1 + $0x18] sm:$0xff]
    %v129 = vld [vmem:[%s1 + $0x20] sm:$0xff]
    %v130 = vld [vmem:[%s1 + $0x28] sm:$0xff]
    %v131 = vld [vmem:[%s1 + $0x30] sm:$0x3]
    %vm132 = vcmask 408576
    %v134 = vsel %vm132, %v113, 0
    %v137 = vsel %vm132, %v114, 0
    %v140 = vsel %vm132, %v115, 0
    %v143 = vsel %vm132, %v116, 0
    %v146 = vsel %vm132, %v117, 0
    %v149 = vsel %vm132, %v118, 0
    %v152 = vsel %vm132, %v119, 0
    %v155 = vsel %vm132, %v120, 0
    %v158 = vsel %vm132, %v121, 0
    %v161 = vsel %vm132, %v122, 0
    %v164 = vsel %vm132, %v123, 0
    %v167 = vsel %vm132, %v124, 0
    %vm169 = vcmask 1041408
    %v171 = vsel %vm169, %v131, 0
    %173 = vmatpush.msra.mxu0 0.0
    %174 = vmatpush.msra.mxu0 0.0
    %175 = vmatpush.msra.mxu0 0.0
    %176 = vmatpush.msra.mxu0 0.0
    %177 = vmatpush.msra.mxu0 0.0
    %178 = vmatpush.msra.mxu0 0.0
    %179 = vmatpush.msra.mxu0 0.0
    %180 = vmatpush.msra.mxu0 0.0
    %181 = vmatpush.msra.mxu0 0.0
    %182 = vmatpush.msra.mxu0 %v171
    %183 = vmatpush.msra.mxu0 %v130
    %184 = vmatpush.msra.mxu0 %v129
    %185 = vmatpush.msra.mxu0 %v128
    %186 = vmatpush.msra.mxu0 %v127
    %187 = vmatpush.msra.mxu0 %v126
    %188 = vmatpush.msra.mxu0 %v125
    %189 = vmatmul.f32.gmra.mxu0 %v134
    %v190 = vpop.f32.mrf.mxu0
    %v191 = vadd.f32 0.0, %v190
    %192 = vmatmul.f32.gmra.mxu0 %v137
    %v193 = vpop.f32.mrf.mxu0
    %v194 = vadd.f32 0.0, %v193
    %195 = vmatmul.f32.gmra.mxu0 %v140
    %v196 = vpop.f32.mrf.mxu0
    %v197 = vadd.f32 0.0, %v196
    %198 = vmatmul.f32.gmra.mxu0 %v143
    %v199 = vpop.f32.mrf.mxu0
    %v200 = vadd.f32 0.0, %v199
    %201 = vmatmul.f32.gmra.mxu0 %v146
    %v202 = vpop.f32.mrf.mxu0
    %v203 = vadd.f32 0.0, %v202
    %204 = vmatmul.f32.gmra.mxu0 %v149
    %v205 = vpop.f32.mrf.mxu0
    %v206 = vadd.f32 0.0, %v205
    %207 = vmatmul.f32.gmra.mxu0 %v152
    %v208 = vpop.f32.mrf.mxu0
    %v209 = vadd.f32 0.0, %v208
    %210 = vmatmul.f32.gmra.mxu0 %v155
    %v211 = vpop.f32.mrf.mxu0
    %v212 = vadd.f32 0.0, %v211
    %213 = vmatmul.f32.gmra.mxu0 %v158
    %v214 = vpop.f32.mrf.mxu0
    %v215 = vadd.f32 0.0, %v214
    %216 = vmatmul.f32.gmra.mxu0 %v161
    %v217 = vpop.f32.mrf.mxu0
    %v218 = vadd.f32 0.0, %v217
    %219 = vmatmul.f32.gmra.mxu0 %v164
    %v220 = vpop.f32.mrf.mxu0
    %v221 = vadd.f32 0.0, %v220
    %222 = vmatmul.f32.gmra.mxu0 %v167
    %v223 = vpop.f32.mrf.mxu0
    %v224 = vadd.f32 0.0, %v223
    %225 = vdwg.mxu0
    %vm226 = vcmask 130048
    %227 = vst.msk [vmem:[#allocation2] sm:$0xff] %vm226, 0.0
    %228 = vst.msk [vmem:[#allocation2 + $0x8] sm:$0xff] %vm226, 0.0
    %229 = vst.msk [vmem:[#allocation2 + $0x10] sm:$0xff] %vm226, 0.0
    %230 = vst.msk [vmem:[#allocation2 + $0x18] sm:$0xff] %vm226, 0.0
    %231 = vst.msk [vmem:[#allocation2 + $0x20] sm:$0xff] %vm226, 0.0
    %232 = vst.msk [vmem:[#allocation2 + $0x28] sm:$0xff] %vm226, 0.0
    %233 = vst.msk [vmem:[#allocation2 + $0x30] sm:$0xff] %vm226, 0.0
    %234 = vst.msk [vmem:[#allocation2 + $0x38] sm:$0xff] %vm226, 0.0
    %235 = vst.msk [vmem:[#allocation2 + $0x40] sm:$0xff] %vm226, 0.0
    %236 = vst.msk [vmem:[#allocation2 + $0x48] sm:$0xff] %vm226, 0.0
    %237 = vst.msk [vmem:[#allocation2 + $0x50] sm:$0xff] %vm226, 0.0
    %238 = vst.msk [vmem:[#allocation2 + $0x58] sm:$0xff] %vm226, 0.0
    %239 = vst.msk [vmem:[#allocation2 + $0x60] sm:$0xff] %vm226, 0.0
    %240 = vst.msk [vmem:[#allocation2 + $0x68] sm:$0xff] %vm226, 0.0
    %241 = vst.msk [vmem:[#allocation2 + $0x70] sm:$0xff] %vm226, 0.0
    %242 = vst.msk [vmem:[#allocation2 + $0x78] sm:$0xff] %vm226, 0.0
    %243 = vst.msk [vmem:[#allocation2 + $0x80] sm:$0xff] %vm226, 0.0
    %244 = vst.msk [vmem:[#allocation2 + $0x88] sm:$0xff] %vm226, 0.0
    %245 = vst.msk [vmem:[#allocation2 + $0x18] sm:$0xff] %vm226, %v191
    %246 = vst.msk [vmem:[#allocation2 + $0x20] sm:$0xff] %vm226, %v194
    %247 = vst.msk [vmem:[#allocation2 + $0x28] sm:$0xff] %vm226, %v197
    %248 = vst.msk [vmem:[#allocation2 + $0x30] sm:$0xff] %vm226, %v200
    %249 = vst.msk [vmem:[#allocation2 + $0x38] sm:$0xff] %vm226, %v203
    %250 = vst.msk [vmem:[#allocation2 + $0x40] sm:$0xff] %vm226, %v206
    %251 = vst.msk [vmem:[#allocation2 + $0x48] sm:$0xff] %vm226, %v209
    %252 = vst.msk [vmem:[#allocation2 + $0x50] sm:$0xff] %vm226, %v212
    %253 = vst.msk [vmem:[#allocation2 + $0x58] sm:$0xff] %vm226, %v215
    %254 = vst.msk [vmem:[#allocation2 + $0x60] sm:$0xff] %vm226, %v218
    %255 = vst.msk [vmem:[#allocation2 + $0x68] sm:$0xff] %vm226, %v221
    %256 = vst.msk [vmem:[#allocation2 + $0x70] sm:$0xff] %vm226, %v224
    %v257 = vld [vmem:[#allocation2] sm:$0xff]
    %v258 = vld [vmem:[#allocation2 + $0x8] sm:$0xff]
    %v259 = vld [vmem:[#allocation2 + $0x10] sm:$0xff]
    %v260 = vld [vmem:[#allocation2 + $0x18] sm:$0xff]
    %v261 = vld [vmem:[#allocation2 + $0x20] sm:$0xff]
    %v262 = vld [vmem:[#allocation2 + $0x28] sm:$0xff]
    %v263 = vld [vmem:[#allocation2 + $0x30] sm:$0xff]
    %v264 = vld [vmem:[#allocation2 + $0x38] sm:$0xff]
    %v265 = vld [vmem:[#allocation2 + $0x40] sm:$0xff]
    %v266 = vld [vmem:[#allocation2 + $0x48] sm:$0xff]
    %v267 = vld [vmem:[#allocation2 + $0x50] sm:$0xff]
    %v268 = vld [vmem:[#allocation2 + $0x58] sm:$0xff]
    %v269 = vld [vmem:[#allocation2 + $0x60] sm:$0xff]
    %v270 = vld [vmem:[#allocation2 + $0x68] sm:$0xff]
    %v271 = vld [vmem:[#allocation2 + $0x70] sm:$0xff]
    %v272 = vld [vmem:[#allocation2 + $0x78] sm:$0xff]
    %v273 = vld [vmem:[#allocation2 + $0x80] sm:$0xff]
    %v274 = vld [vmem:[#allocation2 + $0x88] sm:$0xff]
    %290 = vrot.lane.b32.xlu0 %v258, 16
    %v291 = vpop.permute.xlu0 %290
    %292 = vrot.lane.b32.xlu0 %v259, 16
    %v293 = vpop.permute.xlu0 %292
    %294 = vrot.lane.b32.xlu0 %v260, 16
    %v295 = vpop.permute.xlu0 %294
    %296 = vrot.lane.b32.xlu0 %v261, 16
    %v297 = vpop.permute.xlu0 %296
    %298 = vrot.lane.b32.xlu0 %v262, 16
    %v299 = vpop.permute.xlu0 %298
    %300 = vrot.lane.b32.xlu0 %v263, 16
    %v301 = vpop.permute.xlu0 %300
    %302 = vrot.lane.b32.xlu0 %v264, 16
    %v303 = vpop.permute.xlu0 %302
    %304 = vrot.lane.b32.xlu0 %v265, 16
    %v305 = vpop.permute.xlu0 %304
    %306 = vrot.lane.b32.xlu0 %v266, 16
    %v307 = vpop.permute.xlu0 %306
    %308 = vrot.lane.b32.xlu0 %v267, 16
    %v309 = vpop.permute.xlu0 %308
    %310 = vrot.lane.b32.xlu0 %v268, 16
    %v311 = vpop.permute.xlu0 %310
    %312 = vrot.lane.b32.xlu0 %v269, 16
    %v313 = vpop.permute.xlu0 %312
    %314 = vrot.lane.b32.xlu0 %v270, 16
    %v315 = vpop.permute.xlu0 %314
    %316 = vrot.lane.b32.xlu0 %v271, 16
    %v317 = vpop.permute.xlu0 %316
    %318 = vrot.lane.b32.xlu0 %v272, 16
    %v319 = vpop.permute.xlu0 %318
    %336 = vrot.lane.b32.xlu0 %v259, 32
    %v337 = vpop.permute.xlu0 %336
    %338 = vrot.lane.b32.xlu0 %v260, 32
    %v339 = vpop.permute.xlu0 %338
    %340 = vrot.lane.b32.xlu0 %v261, 32
    %v341 = vpop.permute.xlu0 %340
    %342 = vrot.lane.b32.xlu0 %v262, 32
    %v343 = vpop.permute.xlu0 %342
    %344 = vrot.lane.b32.xlu0 %v263, 32
    %v345 = vpop.permute.xlu0 %344
    %346 = vrot.lane.b32.xlu0 %v264, 32
    %v347 = vpop.permute.xlu0 %346
    %348 = vrot.lane.b32.xlu0 %v265, 32
    %v349 = vpop.permute.xlu0 %348
    %350 = vrot.lane.b32.xlu0 %v266, 32
    %v351 = vpop.permute.xlu0 %350
    %352 = vrot.lane.b32.xlu0 %v267, 32
    %v353 = vpop.permute.xlu0 %352
    %354 = vrot.lane.b32.xlu0 %v268, 32
    %v355 = vpop.permute.xlu0 %354
    %356 = vrot.lane.b32.xlu0 %v269, 32
    %v357 = vpop.permute.xlu0 %356
    %358 = vrot.lane.b32.xlu0 %v270, 32
    %v359 = vpop.permute.xlu0 %358
    %360 = vrot.lane.b32.xlu0 %v271, 32
    %v361 = vpop.permute.xlu0 %360
    %362 = vrot.lane.b32.xlu0 %v272, 32
    %v363 = vpop.permute.xlu0 %362
    %364 = vrot.lane.b32.xlu0 %v273, 32
    %v365 = vpop.permute.xlu0 %364
    %382 = vrot.lane.b32.xlu0 %v260, 48
    %v383 = vpop.permute.xlu0 %382
    %384 = vrot.lane.b32.xlu0 %v261, 48
    %v385 = vpop.permute.xlu0 %384
    %386 = vrot.lane.b32.xlu0 %v262, 48
    %v387 = vpop.permute.xlu0 %386
    %388 = vrot.lane.b32.xlu0 %v263, 48
    %v389 = vpop.permute.xlu0 %388
    %390 = vrot.lane.b32.xlu0 %v264, 48
    %v391 = vpop.permute.xlu0 %390
    %392 = vrot.lane.b32.xlu0 %v265, 48
    %v393 = vpop.permute.xlu0 %392
    %394 = vrot.lane.b32.xlu0 %v266, 48
    %v395 = vpop.permute.xlu0 %394
    %396 = vrot.lane.b32.xlu0 %v267, 48
    %v397 = vpop.permute.xlu0 %396
    %398 = vrot.lane.b32.xlu0 %v268, 48
    %v399 = vpop.permute.xlu0 %398
    %400 = vrot.lane.b32.xlu0 %v269, 48
    %v401 = vpop.permute.xlu0 %400
    %402 = vrot.lane.b32.xlu0 %v270, 48
    %v403 = vpop.permute.xlu0 %402
    %404 = vrot.lane.b32.xlu0 %v271, 48
    %v405 = vpop.permute.xlu0 %404
    %406 = vrot.lane.b32.xlu0 %v272, 48
    %v407 = vpop.permute.xlu0 %406
    %408 = vrot.lane.b32.xlu0 %v273, 48
    %v409 = vpop.permute.xlu0 %408
    %410 = vrot.lane.b32.xlu0 %v274, 48
    %v411 = vpop.permute.xlu0 %410
    %v427 = vsel %vm226, %v257, %v291
    %v428 = vsel %vm226, %v258, %v293
    %v429 = vsel %vm226, %v259, %v295
    %v430 = vsel %vm226, %v260, %v297
    %v431 = vsel %vm226, %v261, %v299
    %v432 = vsel %vm226, %v262, %v301
    %v433 = vsel %vm226, %v263, %v303
    %v434 = vsel %vm226, %v264, %v305
    %v435 = vsel %vm226, %v265, %v307
    %v436 = vsel %vm226, %v266, %v309
    %v437 = vsel %vm226, %v267, %v311
    %v438 = vsel %vm226, %v268, %v313
    %v439 = vsel %vm226, %v269, %v315
    %v440 = vsel %vm226, %v270, %v317
    %v441 = vsel %vm226, %v271, %v319
    %vm442 = vcmask 261120
    %v443 = vsel %vm442, %v427, %v337
    %v444 = vsel %vm442, %v428, %v339
    %v445 = vsel %vm442, %v429, %v341
    %v446 = vsel %vm442, %v430, %v343
    %v447 = vsel %vm442, %v431, %v345
    %v448 = vsel %vm442, %v432, %v347
    %v449 = vsel %vm442, %v433, %v349
    %v450 = vsel %vm442, %v434, %v351
    %v451 = vsel %vm442, %v435, %v353
    %v452 = vsel %vm442, %v436, %v355
    %v453 = vsel %vm442, %v437, %v357
    %v454 = vsel %vm442, %v438, %v359
    %v455 = vsel %vm442, %v439, %v361
    %v456 = vsel %vm442, %v440, %v363
    %v457 = vsel %vm442, %v441, %v365
    %vm458 = vcmask 392192
    %v459 = vsel %vm458, %v443, %v383
    %v460 = vsel %vm458, %v444, %v385
    %v461 = vsel %vm458, %v445, %v387
    %v462 = vsel %vm458, %v446, %v389
    %v463 = vsel %vm458, %v447, %v391
    %v464 = vsel %vm458, %v448, %v393
    %v465 = vsel %vm458, %v449, %v395
    %v466 = vsel %vm458, %v450, %v397
    %v467 = vsel %vm458, %v451, %v399
    %v468 = vsel %vm458, %v452, %v401
    %v469 = vsel %vm458, %v453, %v403
    %v470 = vsel %vm458, %v454, %v405
    %v471 = vsel %vm458, %v455, %v407
    %v472 = vsel %vm458, %v456, %v409
    %v473 = vsel %vm458, %v457, %v411
    %v474 = vld [vmem:[%s2] sm:$0xff]
    %v475 = vld [vmem:[%s2 + $0x8] sm:$0xff]
    %v476 = vld [vmem:[%s2 + $0x10] sm:$0xff]
    %v477 = vld [vmem:[%s2 + $0x18] sm:$0xff]
    %v478 = vld [vmem:[%s2 + $0x20] sm:$0xff]
    %v479 = vld [vmem:[%s2 + $0x28] sm:$0xff]
    %v480 = vld [vmem:[%s2 + $0x30] sm:$0xff]
    %v481 = vld [vmem:[%s2 + $0x38] sm:$0xff]
    %vm482 = vcmask 523264
    %v484 = vsel %vm482, %v459, 0
    %v487 = vsel %vm482, %v460, 0
    %v490 = vsel %vm482, %v461, 0
    %v493 = vsel %vm482, %v462, 0
    %v496 = vsel %vm482, %v463, 0
    %v499 = vsel %vm482, %v464, 0
    %v502 = vsel %vm482, %v465, 0
    %v505 = vsel %vm482, %v466, 0
    %v508 = vsel %vm482, %v467, 0
    %v511 = vsel %vm482, %v468, 0
    %v514 = vsel %vm482, %v469, 0
    %v517 = vsel %vm482, %v470, 0
    %v520 = vsel %vm482, %v471, 0
    %v523 = vsel %vm482, %v472, 0
    %v526 = vsel %vm482, %v473, 0
    %528 = vmatpush.msra.mxu0 0.0
    %529 = vmatpush.msra.mxu0 0.0
    %530 = vmatpush.msra.mxu0 0.0
    %531 = vmatpush.msra.mxu0 0.0
    %532 = vmatpush.msra.mxu0 0.0
    %533 = vmatpush.msra.mxu0 0.0
    %534 = vmatpush.msra.mxu0 0.0
    %535 = vmatpush.msra.mxu0 0.0
    %536 = vmatpush.msra.mxu0 %v481
    %537 = vmatpush.msra.mxu0 %v480
    %538 = vmatpush.msra.mxu0 %v479
    %539 = vmatpush.msra.mxu0 %v478
    %540 = vmatpush.msra.mxu0 %v477
    %541 = vmatpush.msra.mxu0 %v476
    %542 = vmatpush.msra.mxu0 %v475
    %543 = vmatpush.msra.mxu0 %v474
    %544 = vmatmul.f32.gmra.mxu0 %v484
    %v545 = vpop.f32.mrf.mxu0
    %546 = vmatmul.f32.gmra.mxu0 %v487
    %v547 = vpop.f32.mrf.mxu0
    %v548 = vadd.f32 0.0, %v547
    %549 = vmatmul.f32.gmra.mxu0 %v490
    %v550 = vpop.f32.mrf.mxu0
    %v551 = vadd.f32 0.0, %v550
    %552 = vmatmul.f32.gmra.mxu0 %v493
    %v553 = vpop.f32.mrf.mxu0
    %v554 = vadd.f32 0.0, %v553
    %555 = vmatmul.f32.gmra.mxu0 %v496
    %v556 = vpop.f32.mrf.mxu0
    %v557 = vadd.f32 0.0, %v556
    %558 = vmatmul.f32.gmra.mxu0 %v499
    %v559 = vpop.f32.mrf.mxu0
    %v560 = vadd.f32 0.0, %v559
    %561 = vmatmul.f32.gmra.mxu0 %v502
    %v562 = vpop.f32.mrf.mxu0
    %v563 = vadd.f32 0.0, %v562
    %564 = vmatmul.f32.gmra.mxu0 %v505
    %v565 = vpop.f32.mrf.mxu0
    %v566 = vadd.f32 0.0, %v565
    %567 = vmatmul.f32.gmra.mxu0 %v508
    %v568 = vpop.f32.mrf.mxu0
    %v569 = vadd.f32 0.0, %v568
    %570 = vmatmul.f32.gmra.mxu0 %v511
    %v571 = vpop.f32.mrf.mxu0
    %v572 = vadd.f32 0.0, %v571
    %573 = vmatmul.f32.gmra.mxu0 %v514
    %v574 = vpop.f32.mrf.mxu0
    %v575 = vadd.f32 0.0, %v574
    %576 = vmatmul.f32.gmra.mxu0 %v517
    %v577 = vpop.f32.mrf.mxu0
    %v578 = vadd.f32 0.0, %v577
    %579 = vmatmul.f32.gmra.mxu0 %v520
    %v580 = vpop.f32.mrf.mxu0
    %v581 = vadd.f32 0.0, %v580
    %582 = vmatmul.f32.gmra.mxu0 %v523
    %v583 = vpop.f32.mrf.mxu0
    %v584 = vadd.f32 0.0, %v583
    %585 = vmatmul.f32.gmra.mxu0 %v526
    %v586 = vpop.f32.mrf.mxu0
    %v587 = vadd.f32 0.0, %v586
    %588 = vdwg.mxu0
    %v589 = vmax.f32 %v551, %v554
    %v590 = vmax.f32 %v589, %v557
    %v591 = vmax.f32 %v590, %v560
    %v592 = vmax.f32 %v591, %v563
    %v593 = vmax.f32 %v592, %v566
    %v594 = vmax.f32 %v593, %v569
    %v595 = vmax.f32 %v594, %v572
    %v596 = vmax.f32 %v595, %v575
    %v597 = vmax.f32 %v596, %v578
    %v598 = vmax.f32 %v597, %v581
    %v599 = vmax.f32 %v598, %v584
    %v600 = vmax.f32 %v599, %v587
    %v601 = vmax.f32 %v548, %v551
    %v602 = vmax.f32 %v601, %v554
    %v603 = vmax.f32 %v602, %v557
    %v604 = vmax.f32 %v603, %v560
    %v605 = vmax.f32 %v604, %v563
    %v606 = vmax.f32 %v605, %v566
    %v607 = vmax.f32 %v606, %v569
    %v608 = vmax.f32 %v607, %v572
    %v609 = vmax.f32 %v608, %v575
    %v610 = vmax.f32 %v609, %v578
    %v611 = vmax.f32 %v610, %v581
    %v612 = vmax.f32 %v611, %v584
    %v613 = vsel %vm226, %v600, %v599
    %v614 = vsel %vm442, %v613, %v612
    %v615 = vld [vmem:[%s3] sm:$0x1]
    %v617 = vperm.slane %v615, 0
    %v619 = vadd.f32 %v614, %v617
    %v620 = vtanh.pop %v619
    %v621 = vld [vmem:[%s4] sm:$0xff]
    %v622 = vld [vmem:[%s4 + $0x8] sm:$0xff]
    %v623 = vld [vmem:[%s4 + $0x10] sm:$0xff]
    %v624 = vld [vmem:[%s4 + $0x18] sm:$0xff]
    %v625 = vld [vmem:[%s6] sm:$0x3]
    %v627 = vperm.slane %v625, 0
    %v628 = vperm.slane %v625, 1
    %v632 = vsel %vm226, %v191, 0
    %v635 = vsel %vm226, %v194, 0
    %v638 = vsel %vm226, %v197, 0
    %v641 = vsel %vm226, %v200, 0
    %v644 = vsel %vm226, %v203, 0
    %v647 = vsel %vm226, %v206, 0
    %v650 = vsel %vm226, %v209, 0
    %v653 = vsel %vm226, %v212, 0
    %v656 = vsel %vm226, %v215, 0
    %v659 = vsel %vm226, %v218, 0
    %v662 = vsel %vm226, %v221, 0
    %v665 = vsel %vm226, %v224, 0
    %667 = vmatpush.msra.mxu0 0.0
    %668 = vmatpush.msra.mxu0 0.0
    %669 = vmatpush.msra.mxu0 0.0
    %670 = vmatpush.msra.mxu0 0.0
    %671 = vmatpush.msra.mxu0 0.0
    %672 = vmatpush.msra.mxu0 0.0
    %673 = vmatpush.msra.mxu0 0.0
    %674 = vmatpush.msra.mxu0 0.0
    %675 = vmatpush.msra.mxu0 0.0
    %676 = vmatpush.msra.mxu0 0.0
    %677 = vmatpush.msra.mxu0 0.0
    %678 = vmatpush.msra.mxu0 0.0
    %679 = vmatpush.msra.mxu0 0.0
    %680 = vmatpush.msra.mxu0 0.0
    %681 = vmatpush.msra.mxu0 %v623
    %682 = vmatpush.msra.mxu0 %v621
    %683 = vmatmul.f32.gmra.mxu0 %v632
    %v684 = vpop.f32.mrf.mxu0
    %v685 = vadd.f32 %v627, %v684
    %686 = vmatmul.f32.gmra.mxu0 %v635
    %v687 = vpop.f32.mrf.mxu0
    %v688 = vadd.f32 %v627, %v687
    %689 = vmatmul.f32.gmra.mxu0 %v638
    %v690 = vpop.f32.mrf.mxu0
    %v691 = vadd.f32 %v627, %v690
    %692 = vmatmul.f32.gmra.mxu0 %v641
    %v693 = vpop.f32.mrf.mxu0
    %v694 = vadd.f32 %v627, %v693
    %695 = vmatmul.f32.gmra.mxu0 %v644
    %v696 = vpop.f32.mrf.mxu0
    %v697 = vadd.f32 %v627, %v696
    %698 = vmatmul.f32.gmra.mxu0 %v647
    %v699 = vpop.f32.mrf.mxu0
    %v700 = vadd.f32 %v627, %v699
    %701 = vmatmul.f32.gmra.mxu0 %v650
    %v702 = vpop.f32.mrf.mxu0
    %v703 = vadd.f32 %v627, %v702
    %704 = vmatmul.f32.gmra.mxu0 %v653
    %v705 = vpop.f32.mrf.mxu0
    %v706 = vadd.f32 %v627, %v705
    %707 = vmatmul.f32.gmra.mxu0 %v656
    %v708 = vpop.f32.mrf.mxu0
    %v709 = vadd.f32 %v627, %v708
    %710 = vmatmul.f32.gmra.mxu0 %v659
    %v711 = vpop.f32.mrf.mxu0
    %v712 = vadd.f32 %v627, %v711
    %713 = vmatmul.f32.gmra.mxu0 %v662
    %v714 = vpop.f32.mrf.mxu0
    %v715 = vadd.f32 %v627, %v714
    %716 = vmatmul.f32.gmra.mxu0 %v665
    %v717 = vpop.f32.mrf.mxu0
    %v718 = vadd.f32 %v627, %v717
    %719 = vdwg.mxu0
    %720 = vmatpush.msra.mxu0 0.0
    %721 = vmatpush.msra.mxu0 0.0
    %722 = vmatpush.msra.mxu0 0.0
    %723 = vmatpush.msra.mxu0 0.0
    %724 = vmatpush.msra.mxu0 0.0
    %725 = vmatpush.msra.mxu0 0.0
    %726 = vmatpush.msra.mxu0 0.0
    %727 = vmatpush.msra.mxu0 0.0
    %728 = vmatpush.msra.mxu0 0.0
    %729 = vmatpush.msra.mxu0 0.0
    %730 = vmatpush.msra.mxu0 0.0
    %731 = vmatpush.msra.mxu0 0.0
    %732 = vmatpush.msra.mxu0 0.0
    %733 = vmatpush.msra.mxu0 0.0
    %734 = vmatpush.msra.mxu0 %v624
    %735 = vmatpush.msra.mxu0 %v622
    %736 = vmatmul.f32.gmra.mxu0 %v632
    %v737 = vpop.f32.mrf.mxu0
    %v738 = vadd.f32 %v628, %v737
    %739 = vmatmul.f32.gmra.mxu0 %v635
    %v740 = vpop.f32.mrf.mxu0
    %v741 = vadd.f32 %v628, %v740
    %742 = vmatmul.f32.gmra.mxu0 %v638
    %v743 = vpop.f32.mrf.mxu0
    %v744 = vadd.f32 %v628, %v743
    %745 = vmatmul.f32.gmra.mxu0 %v641
    %v746 = vpop.f32.mrf.mxu0
    %v747 = vadd.f32 %v628, %v746
    %748 = vmatmul.f32.gmra.mxu0 %v644
    %v749 = vpop.f32.mrf.mxu0
    %v750 = vadd.f32 %v628, %v749
    %751 = vmatmul.f32.gmra.mxu0 %v647
    %v752 = vpop.f32.mrf.mxu0
    %v753 = vadd.f32 %v628, %v752
    %754 = vmatmul.f32.gmra.mxu0 %v650
    %v755 = vpop.f32.mrf.mxu0
    %v756 = vadd.f32 %v628, %v755
    %757 = vmatmul.f32.gmra.mxu0 %v653
    %v758 = vpop.f32.mrf.mxu0
    %v759 = vadd.f32 %v628, %v758
    %760 = vmatmul.f32.gmra.mxu0 %v656
    %v761 = vpop.f32.mrf.mxu0
    %v762 = vadd.f32 %v628, %v761
    %763 = vmatmul.f32.gmra.mxu0 %v659
    %v764 = vpop.f32.mrf.mxu0
    %v765 = vadd.f32 %v628, %v764
    %766 = vmatmul.f32.gmra.mxu0 %v662
    %v767 = vpop.f32.mrf.mxu0
    %v768 = vadd.f32 %v628, %v767
    %769 = vmatmul.f32.gmra.mxu0 %v665
    %v770 = vpop.f32.mrf.mxu0
    %v771 = vadd.f32 %v628, %v770
    %772 = vdwg.mxu0
    %v773 = vld [vmem:[%s5] sm:$0xff]
    %v774 = vld [vmem:[%s5 + $0x8] sm:$0xff]
    %v775 = vld [vmem:[%s5 + $0x10] sm:$0xff]
    %v776 = vld [vmem:[%s5 + $0x18] sm:$0xff]
    %v777 = vld [vmem:[%s5 + $0x20] sm:$0xff]
    %v778 = vld [vmem:[%s5 + $0x28] sm:$0xff]
    %v779 = vld [vmem:[%s5 + $0x30] sm:$0xff]
    %v780 = vld [vmem:[%s5 + $0x38] sm:$0xff]
    %v781 = vld [vmem:[%s5 + $0x40] sm:$0xff]
    %v782 = vld [vmem:[%s5 + $0x48] sm:$0xff]
    %v783 = vld [vmem:[%s5 + $0x50] sm:$0xff]
    %v784 = vld [vmem:[%s5 + $0x58] sm:$0xff]
    %v785 = vld [vmem:[%s5 + $0x60] sm:$0xff]
    %v786 = vld [vmem:[%s5 + $0x68] sm:$0xff]
    %v787 = vld [vmem:[%s5 + $0x70] sm:$0xff]
    %v788 = vld [vmem:[%s5 + $0x78] sm:$0xff]
    %v790 = vsel %vm482, 0.0, 0
    %792 = vmatpush.msra.mxu0 0.0
    %793 = vmatpush.msra.mxu0 0.0
    %794 = vmatpush.msra.mxu0 0.0
    %795 = vmatpush.msra.mxu0 0.0
    %796 = vmatpush.msra.mxu0 0.0
    %797 = vmatpush.msra.mxu0 0.0
    %798 = vmatpush.msra.mxu0 0.0
    %799 = vmatpush.msra.mxu0 0.0
    %800 = vmatpush.msra.mxu0 %v787
    %801 = vmatpush.msra.mxu0 %v785
    %802 = vmatpush.msra.mxu0 %v783
    %803 = vmatpush.msra.mxu0 %v781
    %804 = vmatpush.msra.mxu0 %v779
    %805 = vmatpush.msra.mxu0 %v777
    %806 = vmatpush.msra.mxu0 %v775
    %807 = vmatpush.msra.mxu0 %v773
    %808 = vmatmul.f32.gmra.mxu0 %v790
    %v809 = vpop.f32.mrf.mxu0
    %v810 = vadd.f32 0.0, %v809
    %811 = vdwg.mxu0
    %812 = vmatpush.msra.mxu0 0.0
    %813 = vmatpush.msra.mxu0 0.0
    %814 = vmatpush.msra.mxu0 0.0
    %815 = vmatpush.msra.mxu0 0.0
    %816 = vmatpush.msra.mxu0 0.0
    %817 = vmatpush.msra.mxu0 0.0
    %818 = vmatpush.msra.mxu0 0.0
    %819 = vmatpush.msra.mxu0 0.0
    %820 = vmatpush.msra.mxu0 %v788
    %821 = vmatpush.msra.mxu0 %v786
    %822 = vmatpush.msra.mxu0 %v784
    %823 = vmatpush.msra.mxu0 %v782
    %824 = vmatpush.msra.mxu0 %v780
    %825 = vmatpush.msra.mxu0 %v778
    %826 = vmatpush.msra.mxu0 %v776
    %827 = vmatpush.msra.mxu0 %v774
    %828 = vmatmul.f32.gmra.mxu0 %v790
    %v829 = vpop.f32.mrf.mxu0
    %v830 = vadd.f32 0.0, %v829
    %831 = vdwg.mxu0
    %v832 = vadd.f32 %v685, %v810
    %v833 = vadd.f32 %v771, %v830
    %v834 = vxor.u32 %v832, 2147483648
    %v835 = vmul.f32 %v834, 1.442695
    %v836 = vpow.pop %v835
    %v837 = vadd.f32 %v836, 1.0
    %v838 = vrcp.pop %v837
    %v839 = vmul.f32 %v837, %v838
    %v840 = vsub.f32 1.0, %v839
    %v841 = vmul.f32 %v838, %v840
    %v842 = vadd.f32 %v838, %v841
    %vm843 = vweird.f32 %v837
    %vm844 = vweird.f32 %v838
    %vm845 = vmor %vm843, %vm844
    %v846 = vsel %vm845, %v838, %v842
    %v847 = vand.u32 2147483647, %v837
    %vm848 = vcmp.eq.f32.partialorder %v847, 8.507059e+37
    %v849 = vand.u32 %v837, 2147483648
    %v850 = vor.u32 1.1754944e-38, %v849
    %v851 = vsel %vm848, %v850, %v846
    %v852 = vmul.f32 1.0, %v851
    %v853 = vtanh.pop %v832
    %v854 = vxor.u32 %v833, 2147483648
    %v855 = vmul.f32 %v854, 1.442695
    %v856 = vpow.pop %v855
    %v857 = vadd.f32 %v856, 1.0
    %v858 = vrcp.pop %v857
    %v859 = vmul.f32 %v857, %v858
    %v860 = vsub.f32 1.0, %v859
    %v861 = vmul.f32 %v858, %v860
    %v862 = vadd.f32 %v858, %v861
    %vm863 = vweird.f32 %v857
    %vm864 = vweird.f32 %v858
    %vm865 = vmor %vm863, %vm864
    %v866 = vsel %vm865, %v858, %v862
    %v867 = vand.u32 2147483647, %v857
    %vm868 = vcmp.eq.f32.partialorder %v867, 8.507059e+37
    %v869 = vand.u32 %v857, 2147483648
    %v870 = vor.u32 1.1754944e-38, %v869
    %v871 = vsel %vm868, %v870, %v866
    %v872 = vmul.f32 1.0, %v871
    %v873 = vtanh.pop %v833
    %v874 = vmul.f32 %v852, 0.0
    %876 = vrot.lane.b32.xlu0 %v853, 64
    %v877 = vpop.permute.xlu0 %876
    %v879 = vmul.f32 %v852, %v877
    %881 = vrot.lane.b32.xlu0 %v879, 32
    %v882 = vpop.permute.xlu0 %881
    %v884 = vadd.f32 %v874, %v882
    %v885 = vtanh.pop %v884
    %887 = vrot.lane.b32.xlu0 %v885, 64
    %v888 = vpop.permute.xlu0 %887
    %v890 = vmul.f32 %v852, %v888
    %v891 = vmul.f32 %v872, 0.0
    %893 = vrot.lane.b32.xlu0 %v873, 64
    %v894 = vpop.permute.xlu0 %893
    %v896 = vmul.f32 %v872, %v894
    %898 = vrot.lane.b32.xlu0 %v896, 32
    %v899 = vpop.permute.xlu0 %898
    %v901 = vadd.f32 %v891, %v899
    %v902 = vtanh.pop %v901
    %904 = vrot.lane.b32.xlu0 %v902, 64
    %v905 = vpop.permute.xlu0 %904
    %v907 = vmul.f32 %v872, %v905
    %909 = vrot.lane.b32.xlu0 %v890, 32
    %v910 = vpop.permute.xlu0 %909
    %913 = vrot.lane.b32.xlu0 %v907, 64
    %v914 = vpop.permute.xlu0 %913
    %v916 = vsel %vm442, %v910, %v914
    %v918 = vsel %vm482, %v916, 0
    %920 = vmatpush.msra.mxu0 0.0
    %921 = vmatpush.msra.mxu0 0.0
    %922 = vmatpush.msra.mxu0 0.0
    %923 = vmatpush.msra.mxu0 0.0
    %924 = vmatpush.msra.mxu0 0.0
    %925 = vmatpush.msra.mxu0 0.0
    %926 = vmatpush.msra.mxu0 0.0
    %927 = vmatpush.msra.mxu0 0.0
    %928 = vmatpush.msra.mxu0 %v787
    %929 = vmatpush.msra.mxu0 %v785
    %930 = vmatpush.msra.mxu0 %v783
    %931 = vmatpush.msra.mxu0 %v781
    %932 = vmatpush.msra.mxu0 %v779
    %933 = vmatpush.msra.mxu0 %v777
    %934 = vmatpush.msra.mxu0 %v775
    %935 = vmatpush.msra.mxu0 %v773
    %936 = vmatmul.f32.gmra.mxu0 %v918
    %v937 = vpop.f32.mrf.mxu0
    %v938 = vadd.f32 0.0, %v937
    %939 = vdwg.mxu0
    %940 = vmatpush.msra.mxu0 0.0
    %941 = vmatpush.msra.mxu0 0.0
    %942 = vmatpush.msra.mxu0 0.0
    %943 = vmatpush.msra.mxu0 0.0
    %944 = vmatpush.msra.mxu0 0.0
    %945 = vmatpush.msra.mxu0 0.0
    %946 = vmatpush.msra.mxu0 0.0
    %947 = vmatpush.msra.mxu0 0.0
    %948 = vmatpush.msra.mxu0 %v788
    %949 = vmatpush.msra.mxu0 %v786
    %950 = vmatpush.msra.mxu0 %v784
    %951 = vmatpush.msra.mxu0 %v782
    %952 = vmatpush.msra.mxu0 %v780
    %953 = vmatpush.msra.mxu0 %v778
    %954 = vmatpush.msra.mxu0 %v776
    %955 = vmatpush.msra.mxu0 %v774
    %956 = vmatmul.f32.gmra.mxu0 %v918
    %v957 = vpop.f32.mrf.mxu0
    %v958 = vadd.f32 0.0, %v957
    %959 = vdwg.mxu0
    %v960 = vadd.f32 %v688, %v938
    %v961 = vadd.f32 %v768, %v958
    %v962 = vxor.u32 %v960, 2147483648
    %v963 = vmul.f32 %v962, 1.442695
    %v964 = vpow.pop %v963
    %v965 = vadd.f32 %v964, 1.0
    %v966 = vrcp.pop %v965
    %v967 = vmul.f32 %v965, %v966
    %v968 = vsub.f32 1.0, %v967
    %v969 = vmul.f32 %v966, %v968
    %v970 = vadd.f32 %v966, %v969
    %vm971 = vweird.f32 %v965
    %vm972 = vweird.f32 %v966
    %vm973 = vmor %vm971, %vm972
    %v974 = vsel %vm973, %v966, %v970
    %v975 = vand.u32 2147483647, %v965
    %vm976 = vcmp.eq.f32.partialorder %v975, 8.507059e+37
    %v977 = vand.u32 %v965, 2147483648
    %v978 = vor.u32 1.1754944e-38, %v977
    %v979 = vsel %vm976, %v978, %v974
    %v980 = vmul.f32 1.0, %v979
    %v981 = vtanh.pop %v960
    %v982 = vxor.u32 %v961, 2147483648
    %v983 = vmul.f32 %v982, 1.442695
    %v984 = vpow.pop %v983
    %v985 = vadd.f32 %v984, 1.0
    %v986 = vrcp.pop %v985
    %v987 = vmul.f32 %v985, %v986
    %v988 = vsub.f32 1.0, %v987
    %v989 = vmul.f32 %v986, %v988
    %v990 = vadd.f32 %v986, %v989
    %vm991 = vweird.f32 %v985
    %vm992 = vweird.f32 %v986
    %vm993 = vmor %vm991, %vm992
    %v994 = vsel %vm993, %v986, %v990
    %v995 = vand.u32 2147483647, %v985
    %vm996 = vcmp.eq.f32.partialorder %v995, 8.507059e+37
    %v997 = vand.u32 %v985, 2147483648
    %v998 = vor.u32 1.1754944e-38, %v997
    %v999 = vsel %vm996, %v998, %v994
    %v1000 = vmul.f32 1.0, %v999
    %v1001 = vtanh.pop %v961
    %v1002 = vmul.f32 %v980, %v884
    %1004 = vrot.lane.b32.xlu0 %v981, 64
    %v1005 = vpop.permute.xlu0 %1004
    %v1007 = vmul.f32 %v980, %v1005
    %1009 = vrot.lane.b32.xlu0 %v1007, 32
    %v1010 = vpop.permute.xlu0 %1009
    %v1012 = vadd.f32 %v1002, %v1010
    %v1013 = vtanh.pop %v1012
    %1015 = vrot.lane.b32.xlu0 %v1013, 64
    %v1016 = vpop.permute.xlu0 %1015
    %v1018 = vmul.f32 %v980, %v1016
    %v1019 = vmul.f32 %v1000, %v901
    %1021 = vrot.lane.b32.xlu0 %v1001, 64
    %v1022 = vpop.permute.xlu0 %1021
    %v1024 = vmul.f32 %v1000, %v1022
    %1026 = vrot.lane.b32.xlu0 %v1024, 32
    %v1027 = vpop.permute.xlu0 %1026
    %v1029 = vadd.f32 %v1019, %v1027
    %v1030 = vtanh.pop %v1029
    %1032 = vrot.lane.b32.xlu0 %v1030, 64
    %v1033 = vpop.permute.xlu0 %1032
    %v1035 = vmul.f32 %v1000, %v1033
    %1037 = vrot.lane.b32.xlu0 %v1018, 32
    %v1038 = vpop.permute.xlu0 %1037
    %1041 = vrot.lane.b32.xlu0 %v1035, 64
    %v1042 = vpop.permute.xlu0 %1041
    %v1044 = vsel %vm442, %v1038, %v1042
    %v1046 = vsel %vm482, %v1044, 0
    %1048 = vmatpush.msra.mxu0 0.0
    %1049 = vmatpush.msra.mxu0 0.0
    %1050 = vmatpush.msra.mxu0 0.0
    %1051 = vmatpush.msra.mxu0 0.0
    %1052 = vmatpush.msra.mxu0 0.0
    %1053 = vmatpush.msra.mxu0 0.0
    %1054 = vmatpush.msra.mxu0 0.0
    %1055 = vmatpush.msra.mxu0 0.0
    %1056 = vmatpush.msra.mxu0 %v787
    %1057 = vmatpush.msra.mxu0 %v785
    %1058 = vmatpush.msra.mxu0 %v783
    %1059 = vmatpush.msra.mxu0 %v781
    %1060 = vmatpush.msra.mxu0 %v779
    %1061 = vmatpush.msra.mxu0 %v777
    %1062 = vmatpush.msra.mxu0 %v775
    %1063 = vmatpush.msra.mxu0 %v773
    %1064 = vmatmul.f32.gmra.mxu0 %v1046
    %v1065 = vpop.f32.mrf.mxu0
    %v1066 = vadd.f32 0.0, %v1065
    %1067 = vdwg.mxu0
    %1068 = vmatpush.msra.mxu0 0.0
    %1069 = vmatpush.msra.mxu0 0.0
    %1070 = vmatpush.msra.mxu0 0.0
    %1071 = vmatpush.msra.mxu0 0.0
    %1072 = vmatpush.msra.mxu0 0.0
    %1073 = vmatpush.msra.mxu0 0.0
    %1074 = vmatpush.msra.mxu0 0.0
    %1075 = vmatpush.msra.mxu0 0.0
    %1076 = vmatpush.msra.mxu0 %v788
    %1077 = vmatpush.msra.mxu0 %v786
    %1078 = vmatpush.msra.mxu0 %v784
    %1079 = vmatpush.msra.mxu0 %v782
    %1080 = vmatpush.msra.mxu0 %v780
    %1081 = vmatpush.msra.mxu0 %v778
    %1082 = vmatpush.msra.mxu0 %v776
    %1083 = vmatpush.msra.mxu0 %v774
    %1084 = vmatmul.f32.gmra.mxu0 %v1046
    %v1085 = vpop.f32.mrf.mxu0
    %v1086 = vadd.f32 0.0, %v1085
    %1087 = vdwg.mxu0
    %v1088 = vadd.f32 %v691, %v1066
    %v1089 = vadd.f32 %v765, %v1086
    %v1090 = vxor.u32 %v1088, 2147483648
    %v1091 = vmul.f32 %v1090, 1.442695
    %v1092 = vpow.pop %v1091
    %v1093 = vadd.f32 %v1092, 1.0
    %v1094 = vrcp.pop %v1093
    %v1095 = vmul.f32 %v1093, %v1094
    %v1096 = vsub.f32 1.0, %v1095
    %v1097 = vmul.f32 %v1094, %v1096
    %v1098 = vadd.f32 %v1094, %v1097
    %vm1099 = vweird.f32 %v1093
    %vm1100 = vweird.f32 %v1094
    %vm1101 = vmor %vm1099, %vm1100
    %v1102 = vsel %vm1101, %v1094, %v1098
    %v1103 = vand.u32 2147483647, %v1093
    %vm1104 = vcmp.eq.f32.partialorder %v1103, 8.507059e+37
    %v1105 = vand.u32 %v1093, 2147483648
    %v1106 = vor.u32 1.1754944e-38, %v1105
    %v1107 = vsel %vm1104, %v1106, %v1102
    %v1108 = vmul.f32 1.0, %v1107
    %v1109 = vtanh.pop %v1088
    %v1110 = vxor.u32 %v1089, 2147483648
    %v1111 = vmul.f32 %v1110, 1.442695
    %v1112 = vpow.pop %v1111
    %v1113 = vadd.f32 %v1112, 1.0
    %v1114 = vrcp.pop %v1113
    %v1115 = vmul.f32 %v1113, %v1114
    %v1116 = vsub.f32 1.0, %v1115
    %v1117 = vmul.f32 %v1114, %v1116
    %v1118 = vadd.f32 %v1114, %v1117
    %vm1119 = vweird.f32 %v1113
    %vm1120 = vweird.f32 %v1114
    %vm1121 = vmor %vm1119, %vm1120
    %v1122 = vsel %vm1121, %v1114, %v1118
    %v1123 = vand.u32 2147483647, %v1113
    %vm1124 = vcmp.eq.f32.partialorder %v1123, 8.507059e+37
    %v1125 = vand.u32 %v1113, 2147483648
    %v1126 = vor.u32 1.1754944e-38, %v1125
    %v1127 = vsel %vm1124, %v1126, %v1122
    %v1128 = vmul.f32 1.0, %v1127
    %v1129 = vtanh.pop %v1089
    %v1130 = vmul.f32 %v1108, %v1012
    %1132 = vrot.lane.b32.xlu0 %v1109, 64
    %v1133 = vpop.permute.xlu0 %1132
    %v1135 = vmul.f32 %v1108, %v1133
    %1137 = vrot.lane.b32.xlu0 %v1135, 32
    %v1138 = vpop.permute.xlu0 %1137
    %v1140 = vadd.f32 %v1130, %v1138
    %v1141 = vtanh.pop %v1140
    %1143 = vrot.lane.b32.xlu0 %v1141, 64
    %v1144 = vpop.permute.xlu0 %1143
    %v1146 = vmul.f32 %v1108, %v1144
    %v1147 = vmul.f32 %v1128, %v1029
    %1149 = vrot.lane.b32.xlu0 %v1129, 64
    %v1150 = vpop.permute.xlu0 %1149
    %v1152 = vmul.f32 %v1128, %v1150
    %1154 = vrot.lane.b32.xlu0 %v1152, 32
    %v1155 = vpop.permute.xlu0 %1154
    %v1157 = vadd.f32 %v1147, %v1155
    %v1158 = vtanh.pop %v1157
    %1160 = vrot.lane.b32.xlu0 %v1158, 64
    %v1161 = vpop.permute.xlu0 %1160
    %v1163 = vmul.f32 %v1128, %v1161
    %1165 = vrot.lane.b32.xlu0 %v1146, 32
    %v1166 = vpop.permute.xlu0 %1165
    %1169 = vrot.lane.b32.xlu0 %v1163, 64
    %v1170 = vpop.permute.xlu0 %1169
    %v1172 = vsel %vm442, %v1166, %v1170
    %v1174 = vsel %vm482, %v1172, 0
    %1176 = vmatpush.msra.mxu0 0.0
    %1177 = vmatpush.msra.mxu0 0.0
    %1178 = vmatpush.msra.mxu0 0.0
    %1179 = vmatpush.msra.mxu0 0.0
    %1180 = vmatpush.msra.mxu0 0.0
    %1181 = vmatpush.msra.mxu0 0.0
    %1182 = vmatpush.msra.mxu0 0.0
    %1183 = vmatpush.msra.mxu0 0.0
    %1184 = vmatpush.msra.mxu0 %v787
    %1185 = vmatpush.msra.mxu0 %v785
    %1186 = vmatpush.msra.mxu0 %v783
    %1187 = vmatpush.msra.mxu0 %v781
    %1188 = vmatpush.msra.mxu0 %v779
    %1189 = vmatpush.msra.mxu0 %v777
    %1190 = vmatpush.msra.mxu0 %v775
    %1191 = vmatpush.msra.mxu0 %v773
    %1192 = vmatmul.f32.gmra.mxu0 %v1174
    %v1193 = vpop.f32.mrf.mxu0
    %v1194 = vadd.f32 0.0, %v1193
    %1195 = vdwg.mxu0
    %1196 = vmatpush.msra.mxu0 0.0
    %1197 = vmatpush.msra.mxu0 0.0
    %1198 = vmatpush.msra.mxu0 0.0
    %1199 = vmatpush.msra.mxu0 0.0
    %1200 = vmatpush.msra.mxu0 0.0
    %1201 = vmatpush.msra.mxu0 0.0
    %1202 = vmatpush.msra.mxu0 0.0
    %1203 = vmatpush.msra.mxu0 0.0
    %1204 = vmatpush.msra.mxu0 %v788
    %1205 = vmatpush.msra.mxu0 %v786
    %1206 = vmatpush.msra.mxu0 %v784
    %1207 = vmatpush.msra.mxu0 %v782
    %1208 = vmatpush.msra.mxu0 %v780
    %1209 = vmatpush.msra.mxu0 %v778
    %1210 = vmatpush.msra.mxu0 %v776
    %1211 = vmatpush.msra.mxu0 %v774
    %1212 = vmatmul.f32.gmra.mxu0 %v1174
    %v1213 = vpop.f32.mrf.mxu0
    %v1214 = vadd.f32 0.0, %v1213
    %1215 = vdwg.mxu0
    %v1216 = vadd.f32 %v694, %v1194
    %v1217 = vadd.f32 %v762, %v1214
    %v1218 = vxor.u32 %v1216, 2147483648
    %v1219 = vmul.f32 %v1218, 1.442695
    %v1220 = vpow.pop %v1219
    %v1221 = vadd.f32 %v1220, 1.0
    %v1222 = vrcp.pop %v1221
    %v1223 = vmul.f32 %v1221, %v1222
    %v1224 = vsub.f32 1.0, %v1223
    %v1225 = vmul.f32 %v1222, %v1224
    %v1226 = vadd.f32 %v1222, %v1225
    %vm1227 = vweird.f32 %v1221
    %vm1228 = vweird.f32 %v1222
    %vm1229 = vmor %vm1227, %vm1228
    %v1230 = vsel %vm1229, %v1222, %v1226
    %v1231 = vand.u32 2147483647, %v1221
    %vm1232 = vcmp.eq.f32.partialorder %v1231, 8.507059e+37
    %v1233 = vand.u32 %v1221, 2147483648
    %v1234 = vor.u32 1.1754944e-38, %v1233
    %v1235 = vsel %vm1232, %v1234, %v1230
    %v1236 = vmul.f32 1.0, %v1235
    %v1237 = vtanh.pop %v1216
    %v1238 = vxor.u32 %v1217, 2147483648
    %v1239 = vmul.f32 %v1238, 1.442695
    %v1240 = vpow.pop %v1239
    %v1241 = vadd.f32 %v1240, 1.0
    %v1242 = vrcp.pop %v1241
    %v1243 = vmul.f32 %v1241, %v1242
    %v1244 = vsub.f32 1.0, %v1243
    %v1245 = vmul.f32 %v1242, %v1244
    %v1246 = vadd.f32 %v1242, %v1245
    %vm1247 = vweird.f32 %v1241
    %vm1248 = vweird.f32 %v1242
    %vm1249 = vmor %vm1247, %vm1248
    %v1250 = vsel %vm1249, %v1242, %v1246
    %v1251 = vand.u32 2147483647, %v1241
    %vm1252 = vcmp.eq.f32.partialorder %v1251, 8.507059e+37
    %v1253 = vand.u32 %v1241, 2147483648
    %v1254 = vor.u32 1.1754944e-38, %v1253
    %v1255 = vsel %vm1252, %v1254, %v1250
    %v1256 = vmul.f32 1.0, %v1255
    %v1257 = vtanh.pop %v1217
    %v1258 = vmul.f32 %v1236, %v1140
    %1260 = vrot.lane.b32.xlu0 %v1237, 64
    %v1261 = vpop.permute.xlu0 %1260
    %v1263 = vmul.f32 %v1236, %v1261
    %1265 = vrot.lane.b32.xlu0 %v1263, 32
    %v1266 = vpop.permute.xlu0 %1265
    %v1268 = vadd.f32 %v1258, %v1266
    %v1269 = vtanh.pop %v1268
    %1271 = vrot.lane.b32.xlu0 %v1269, 64
    %v1272 = vpop.permute.xlu0 %1271
    %v1274 = vmul.f32 %v1236, %v1272
    %v1275 = vmul.f32 %v1256, %v1157
    %1277 = vrot.lane.b32.xlu0 %v1257, 64
    %v1278 = vpop.permute.xlu0 %1277
    %v1280 = vmul.f32 %v1256, %v1278
    %1282 = vrot.lane.b32.xlu0 %v1280, 32
    %v1283 = vpop.permute.xlu0 %1282
    %v1285 = vadd.f32 %v1275, %v1283
    %v1286 = vtanh.pop %v1285
    %1288 = vrot.lane.b32.xlu0 %v1286, 64
    %v1289 = vpop.permute.xlu0 %1288
    %v1291 = vmul.f32 %v1256, %v1289
    %1293 = vrot.lane.b32.xlu0 %v1274, 32
    %v1294 = vpop.permute.xlu0 %1293
    %1297 = vrot.lane.b32.xlu0 %v1291, 64
    %v1298 = vpop.permute.xlu0 %1297
    %v1300 = vsel %vm442, %v1294, %v1298
    %v1302 = vsel %vm482, %v1300, 0
    %1304 = vmatpush.msra.mxu0 0.0
    %1305 = vmatpush.msra.mxu0 0.0
    %1306 = vmatpush.msra.mxu0 0.0
    %1307 = vmatpush.msra.mxu0 0.0
    %1308 = vmatpush.msra.mxu0 0.0
    %1309 = vmatpush.msra.mxu0 0.0
    %1310 = vmatpush.msra.mxu0 0.0
    %1311 = vmatpush.msra.mxu0 0.0
    %1312 = vmatpush.msra.mxu0 %v787
    %1313 = vmatpush.msra.mxu0 %v785
    %1314 = vmatpush.msra.mxu0 %v783
    %1315 = vmatpush.msra.mxu0 %v781
    %1316 = vmatpush.msra.mxu0 %v779
    %1317 = vmatpush.msra.mxu0 %v777
    %1318 = vmatpush.msra.mxu0 %v775
    %1319 = vmatpush.msra.mxu0 %v773
    %1320 = vmatmul.f32.gmra.mxu0 %v1302
    %v1321 = vpop.f32.mrf.mxu0
    %v1322 = vadd.f32 0.0, %v1321
    %1323 = vdwg.mxu0
    %1324 = vmatpush.msra.mxu0 0.0
    %1325 = vmatpush.msra.mxu0 0.0
    %1326 = vmatpush.msra.mxu0 0.0
    %1327 = vmatpush.msra.mxu0 0.0
    %1328 = vmatpush.msra.mxu0 0.0
    %1329 = vmatpush.msra.mxu0 0.0
    %1330 = vmatpush.msra.mxu0 0.0
    %1331 = vmatpush.msra.mxu0 0.0
    %1332 = vmatpush.msra.mxu0 %v788
    %1333 = vmatpush.msra.mxu0 %v786
    %1334 = vmatpush.msra.mxu0 %v784
    %1335 = vmatpush.msra.mxu0 %v782
    %1336 = vmatpush.msra.mxu0 %v780
    %1337 = vmatpush.msra.mxu0 %v778
    %1338 = vmatpush.msra.mxu0 %v776
    %1339 = vmatpush.msra.mxu0 %v774
    %1340 = vmatmul.f32.gmra.mxu0 %v1302
    %v1341 = vpop.f32.mrf.mxu0
    %v1342 = vadd.f32 0.0, %v1341
    %1343 = vdwg.mxu0
    %v1344 = vadd.f32 %v697, %v1322
    %v1345 = vadd.f32 %v759, %v1342
    %v1346 = vxor.u32 %v1344, 2147483648
    %v1347 = vmul.f32 %v1346, 1.442695
    %v1348 = vpow.pop %v1347
    %v1349 = vadd.f32 %v1348, 1.0
    %v1350 = vrcp.pop %v1349
    %v1351 = vmul.f32 %v1349, %v1350
    %v1352 = vsub.f32 1.0, %v1351
    %v1353 = vmul.f32 %v1350, %v1352
    %v1354 = vadd.f32 %v1350, %v1353
    %vm1355 = vweird.f32 %v1349
    %vm1356 = vweird.f32 %v1350
    %vm1357 = vmor %vm1355, %vm1356
    %v1358 = vsel %vm1357, %v1350, %v1354
    %v1359 = vand.u32 2147483647, %v1349
    %vm1360 = vcmp.eq.f32.partialorder %v1359, 8.507059e+37
    %v1361 = vand.u32 %v1349, 2147483648
    %v1362 = vor.u32 1.1754944e-38, %v1361
    %v1363 = vsel %vm1360, %v1362, %v1358
    %v1364 = vmul.f32 1.0, %v1363
    %v1365 = vtanh.pop %v1344
    %v1366 = vxor.u32 %v1345, 2147483648
    %v1367 = vmul.f32 %v1366, 1.442695
    %v1368 = vpow.pop %v1367
    %v1369 = vadd.f32 %v1368, 1.0
    %v1370 = vrcp.pop %v1369
    %v1371 = vmul.f32 %v1369, %v1370
    %v1372 = vsub.f32 1.0, %v1371
    %v1373 = vmul.f32 %v1370, %v1372
    %v1374 = vadd.f32 %v1370, %v1373
    %vm1375 = vweird.f32 %v1369
    %vm1376 = vweird.f32 %v1370
    %vm1377 = vmor %vm1375, %vm1376
    %v1378 = vsel %vm1377, %v1370, %v1374
    %v1379 = vand.u32 2147483647, %v1369
    %vm1380 = vcmp.eq.f32.partialorder %v1379, 8.507059e+37
    %v1381 = vand.u32 %v1369, 2147483648
    %v1382 = vor.u32 1.1754944e-38, %v1381
    %v1383 = vsel %vm1380, %v1382, %v1378
    %v1384 = vmul.f32 1.0, %v1383
    %v1385 = vtanh.pop %v1345
    %v1386 = vmul.f32 %v1364, %v1268
    %1388 = vrot.lane.b32.xlu0 %v1365, 64
    %v1389 = vpop.permute.xlu0 %1388
    %v1391 = vmul.f32 %v1364, %v1389
    %1393 = vrot.lane.b32.xlu0 %v1391, 32
    %v1394 = vpop.permute.xlu0 %1393
    %v1396 = vadd.f32 %v1386, %v1394
    %v1397 = vtanh.pop %v1396
    %1399 = vrot.lane.b32.xlu0 %v1397, 64
    %v1400 = vpop.permute.xlu0 %1399
    %v1402 = vmul.f32 %v1364, %v1400
    %v1403 = vmul.f32 %v1384, %v1285
    %1405 = vrot.lane.b32.xlu0 %v1385, 64
    %v1406 = vpop.permute.xlu0 %1405
    %v1408 = vmul.f32 %v1384, %v1406
    %1410 = vrot.lane.b32.xlu0 %v1408, 32
    %v1411 = vpop.permute.xlu0 %1410
    %v1413 = vadd.f32 %v1403, %v1411
    %v1414 = vtanh.pop %v1413
    %1416 = vrot.lane.b32.xlu0 %v1414, 64
    %v1417 = vpop.permute.xlu0 %1416
    %v1419 = vmul.f32 %v1384, %v1417
    %1421 = vrot.lane.b32.xlu0 %v1402, 32
    %v1422 = vpop.permute.xlu0 %1421
    %1425 = vrot.lane.b32.xlu0 %v1419, 64
    %v1426 = vpop.permute.xlu0 %1425
    %v1428 = vsel %vm442, %v1422, %v1426
    %v1430 = vsel %vm482, %v1428, 0
    %1432 = vmatpush.msra.mxu0 0.0
    %1433 = vmatpush.msra.mxu0 0.0
    %1434 = vmatpush.msra.mxu0 0.0
    %1435 = vmatpush.msra.mxu0 0.0
    %1436 = vmatpush.msra.mxu0 0.0
    %1437 = vmatpush.msra.mxu0 0.0
    %1438 = vmatpush.msra.mxu0 0.0
    %1439 = vmatpush.msra.mxu0 0.0
    %1440 = vmatpush.msra.mxu0 %v787
    %1441 = vmatpush.msra.mxu0 %v785
    %1442 = vmatpush.msra.mxu0 %v783
    %1443 = vmatpush.msra.mxu0 %v781
    %1444 = vmatpush.msra.mxu0 %v779
    %1445 = vmatpush.msra.mxu0 %v777
    %1446 = vmatpush.msra.mxu0 %v775
    %1447 = vmatpush.msra.mxu0 %v773
    %1448 = vmatmul.f32.gmra.mxu0 %v1430
    %v1449 = vpop.f32.mrf.mxu0
    %v1450 = vadd.f32 0.0, %v1449
    %1451 = vdwg.mxu0
    %1452 = vmatpush.msra.mxu0 0.0
    %1453 = vmatpush.msra.mxu0 0.0
    %1454 = vmatpush.msra.mxu0 0.0
    %1455 = vmatpush.msra.mxu0 0.0
    %1456 = vmatpush.msra.mxu0 0.0
    %1457 = vmatpush.msra.mxu0 0.0
    %1458 = vmatpush.msra.mxu0 0.0
    %1459 = vmatpush.msra.mxu0 0.0
    %1460 = vmatpush.msra.mxu0 %v788
    %1461 = vmatpush.msra.mxu0 %v786
    %1462 = vmatpush.msra.mxu0 %v784
    %1463 = vmatpush.msra.mxu0 %v782
    %1464 = vmatpush.msra.mxu0 %v780
    %1465 = vmatpush.msra.mxu0 %v778
    %1466 = vmatpush.msra.mxu0 %v776
    %1467 = vmatpush.msra.mxu0 %v774
    %1468 = vmatmul.f32.gmra.mxu0 %v1430
    %v1469 = vpop.f32.mrf.mxu0
    %v1470 = vadd.f32 0.0, %v1469
    %1471 = vdwg.mxu0
    %v1472 = vadd.f32 %v700, %v1450
    %v1473 = vadd.f32 %v756, %v1470
    %v1474 = vxor.u32 %v1472, 2147483648
    %v1475 = vmul.f32 %v1474, 1.442695
    %v1476 = vpow.pop %v1475
    %v1477 = vadd.f32 %v1476, 1.0
    %v1478 = vrcp.pop %v1477
    %v1479 = vmul.f32 %v1477, %v1478
    %v1480 = vsub.f32 1.0, %v1479
    %v1481 = vmul.f32 %v1478, %v1480
    %v1482 = vadd.f32 %v1478, %v1481
    %vm1483 = vweird.f32 %v1477
    %vm1484 = vweird.f32 %v1478
    %vm1485 = vmor %vm1483, %vm1484
    %v1486 = vsel %vm1485, %v1478, %v1482
    %v1487 = vand.u32 2147483647, %v1477
    %vm1488 = vcmp.eq.f32.partialorder %v1487, 8.507059e+37
    %v1489 = vand.u32 %v1477, 2147483648
    %v1490 = vor.u32 1.1754944e-38, %v1489
    %v1491 = vsel %vm1488, %v1490, %v1486
    %v1492 = vmul.f32 1.0, %v1491
    %v1493 = vtanh.pop %v1472
    %v1494 = vxor.u32 %v1473, 2147483648
    %v1495 = vmul.f32 %v1494, 1.442695
    %v1496 = vpow.pop %v1495
    %v1497 = vadd.f32 %v1496, 1.0
    %v1498 = vrcp.pop %v1497
    %v1499 = vmul.f32 %v1497, %v1498
    %v1500 = vsub.f32 1.0, %v1499
    %v1501 = vmul.f32 %v1498, %v1500
    %v1502 = vadd.f32 %v1498, %v1501
    %vm1503 = vweird.f32 %v1497
    %vm1504 = vweird.f32 %v1498
    %vm1505 = vmor %vm1503, %vm1504
    %v1506 = vsel %vm1505, %v1498, %v1502
    %v1507 = vand.u32 2147483647, %v1497
    %vm1508 = vcmp.eq.f32.partialorder %v1507, 8.507059e+37
    %v1509 = vand.u32 %v1497, 2147483648
    %v1510 = vor.u32 1.1754944e-38, %v1509
    %v1511 = vsel %vm1508, %v1510, %v1506
    %v1512 = vmul.f32 1.0, %v1511
    %v1513 = vtanh.pop %v1473
    %v1514 = vmul.f32 %v1492, %v1396
    %1516 = vrot.lane.b32.xlu0 %v1493, 64
    %v1517 = vpop.permute.xlu0 %1516
    %v1519 = vmul.f32 %v1492, %v1517
    %1521 = vrot.lane.b32.xlu0 %v1519, 32
    %v1522 = vpop.permute.xlu0 %1521
    %v1524 = vadd.f32 %v1514, %v1522
    %v1525 = vtanh.pop %v1524
    %1527 = vrot.lane.b32.xlu0 %v1525, 64
    %v1528 = vpop.permute.xlu0 %1527
    %v1530 = vmul.f32 %v1492, %v1528
    %v1531 = vmul.f32 %v1512, %v1413
    %1533 = vrot.lane.b32.xlu0 %v1513, 64
    %v1534 = vpop.permute.xlu0 %1533
    %v1536 = vmul.f32 %v1512, %v1534
    %1538 = vrot.lane.b32.xlu0 %v1536, 32
    %v1539 = vpop.permute.xlu0 %1538
    %v1541 = vadd.f32 %v1531, %v1539
    %v1542 = vtanh.pop %v1541
    %1544 = vrot.lane.b32.xlu0 %v1542, 64
    %v1545 = vpop.permute.xlu0 %1544
    %v1547 = vmul.f32 %v1512, %v1545
    %1549 = vrot.lane.b32.xlu0 %v1530, 32
    %v1550 = vpop.permute.xlu0 %1549
    %1553 = vrot.lane.b32.xlu0 %v1547, 64
    %v1554 = vpop.permute.xlu0 %1553
    %v1556 = vsel %vm442, %v1550, %v1554
    %v1558 = vsel %vm482, %v1556, 0
    %1560 = vmatpush.msra.mxu0 0.0
    %1561 = vmatpush.msra.mxu0 0.0
    %1562 = vmatpush.msra.mxu0 0.0
    %1563 = vmatpush.msra.mxu0 0.0
    %1564 = vmatpush.msra.mxu0 0.0
    %1565 = vmatpush.msra.mxu0 0.0
    %1566 = vmatpush.msra.mxu0 0.0
    %1567 = vmatpush.msra.mxu0 0.0
    %1568 = vmatpush.msra.mxu0 %v787
    %1569 = vmatpush.msra.mxu0 %v785
    %1570 = vmatpush.msra.mxu0 %v783
    %1571 = vmatpush.msra.mxu0 %v781
    %1572 = vmatpush.msra.mxu0 %v779
    %1573 = vmatpush.msra.mxu0 %v777
    %1574 = vmatpush.msra.mxu0 %v775
    %1575 = vmatpush.msra.mxu0 %v773
    %1576 = vmatmul.f32.gmra.mxu0 %v1558
    %v1577 = vpop.f32.mrf.mxu0
    %v1578 = vadd.f32 0.0, %v1577
    %1579 = vdwg.mxu0
    %1580 = vmatpush.msra.mxu0 0.0
    %1581 = vmatpush.msra.mxu0 0.0
    %1582 = vmatpush.msra.mxu0 0.0
    %1583 = vmatpush.msra.mxu0 0.0
    %1584 = vmatpush.msra.mxu0 0.0
    %1585 = vmatpush.msra.mxu0 0.0
    %1586 = vmatpush.msra.mxu0 0.0
    %1587 = vmatpush.msra.mxu0 0.0
    %1588 = vmatpush.msra.mxu0 %v788
    %1589 = vmatpush.msra.mxu0 %v786
    %1590 = vmatpush.msra.mxu0 %v784
    %1591 = vmatpush.msra.mxu0 %v782
    %1592 = vmatpush.msra.mxu0 %v780
    %1593 = vmatpush.msra.mxu0 %v778
    %1594 = vmatpush.msra.mxu0 %v776
    %1595 = vmatpush.msra.mxu0 %v774
    %1596 = vmatmul.f32.gmra.mxu0 %v1558
    %v1597 = vpop.f32.mrf.mxu0
    %v1598 = vadd.f32 0.0, %v1597
    %1599 = vdwg.mxu0
    %v1600 = vadd.f32 %v703, %v1578
    %v1601 = vadd.f32 %v753, %v1598
    %v1602 = vxor.u32 %v1600, 2147483648
    %v1603 = vmul.f32 %v1602, 1.442695
    %v1604 = vpow.pop %v1603
    %v1605 = vadd.f32 %v1604, 1.0
    %v1606 = vrcp.pop %v1605
    %v1607 = vmul.f32 %v1605, %v1606
    %v1608 = vsub.f32 1.0, %v1607
    %v1609 = vmul.f32 %v1606, %v1608
    %v1610 = vadd.f32 %v1606, %v1609
    %vm1611 = vweird.f32 %v1605
    %vm1612 = vweird.f32 %v1606
    %vm1613 = vmor %vm1611, %vm1612
    %v1614 = vsel %vm1613, %v1606, %v1610
    %v1615 = vand.u32 2147483647, %v1605
    %vm1616 = vcmp.eq.f32.partialorder %v1615, 8.507059e+37
    %v1617 = vand.u32 %v1605, 2147483648
    %v1618 = vor.u32 1.1754944e-38, %v1617
    %v1619 = vsel %vm1616, %v1618, %v1614
    %v1620 = vmul.f32 1.0, %v1619
    %v1621 = vtanh.pop %v1600
    %v1622 = vxor.u32 %v1601, 2147483648
    %v1623 = vmul.f32 %v1622, 1.442695
    %v1624 = vpow.pop %v1623
    %v1625 = vadd.f32 %v1624, 1.0
    %v1626 = vrcp.pop %v1625
    %v1627 = vmul.f32 %v1625, %v1626
    %v1628 = vsub.f32 1.0, %v1627
    %v1629 = vmul.f32 %v1626, %v1628
    %v1630 = vadd.f32 %v1626, %v1629
    %vm1631 = vweird.f32 %v1625
    %vm1632 = vweird.f32 %v1626
    %vm1633 = vmor %vm1631, %vm1632
    %v1634 = vsel %vm1633, %v1626, %v1630
    %v1635 = vand.u32 2147483647, %v1625
    %vm1636 = vcmp.eq.f32.partialorder %v1635, 8.507059e+37
    %v1637 = vand.u32 %v1625, 2147483648
    %v1638 = vor.u32 1.1754944e-38, %v1637
    %v1639 = vsel %vm1636, %v1638, %v1634
    %v1640 = vmul.f32 1.0, %v1639
    %v1641 = vtanh.pop %v1601
    %v1642 = vmul.f32 %v1620, %v1524
    %1644 = vrot.lane.b32.xlu0 %v1621, 64
    %v1645 = vpop.permute.xlu0 %1644
    %v1647 = vmul.f32 %v1620, %v1645
    %1649 = vrot.lane.b32.xlu0 %v1647, 32
    %v1650 = vpop.permute.xlu0 %1649
    %v1652 = vadd.f32 %v1642, %v1650
    %v1653 = vtanh.pop %v1652
    %1655 = vrot.lane.b32.xlu0 %v1653, 64
    %v1656 = vpop.permute.xlu0 %1655
    %v1658 = vmul.f32 %v1620, %v1656
    %v1659 = vmul.f32 %v1640, %v1541
    %1661 = vrot.lane.b32.xlu0 %v1641, 64
    %v1662 = vpop.permute.xlu0 %1661
    %v1664 = vmul.f32 %v1640, %v1662
    %1666 = vrot.lane.b32.xlu0 %v1664, 32
    %v1667 = vpop.permute.xlu0 %1666
    %v1669 = vadd.f32 %v1659, %v1667
    %v1670 = vtanh.pop %v1669
    %1672 = vrot.lane.b32.xlu0 %v1670, 64
    %v1673 = vpop.permute.xlu0 %1672
    %v1675 = vmul.f32 %v1640, %v1673
    %1677 = vrot.lane.b32.xlu0 %v1658, 32
    %v1678 = vpop.permute.xlu0 %1677
    %1681 = vrot.lane.b32.xlu0 %v1675, 64
    %v1682 = vpop.permute.xlu0 %1681
    %v1684 = vsel %vm442, %v1678, %v1682
    %v1686 = vsel %vm482, %v1684, 0
    %1688 = vmatpush.msra.mxu0 0.0
    %1689 = vmatpush.msra.mxu0 0.0
    %1690 = vmatpush.msra.mxu0 0.0
    %1691 = vmatpush.msra.mxu0 0.0
    %1692 = vmatpush.msra.mxu0 0.0
    %1693 = vmatpush.msra.mxu0 0.0
    %1694 = vmatpush.msra.mxu0 0.0
    %1695 = vmatpush.msra.mxu0 0.0
    %1696 = vmatpush.msra.mxu0 %v787
    %1697 = vmatpush.msra.mxu0 %v785
    %1698 = vmatpush.msra.mxu0 %v783
    %1699 = vmatpush.msra.mxu0 %v781
    %1700 = vmatpush.msra.mxu0 %v779
    %1701 = vmatpush.msra.mxu0 %v777
    %1702 = vmatpush.msra.mxu0 %v775
    %1703 = vmatpush.msra.mxu0 %v773
    %1704 = vmatmul.f32.gmra.mxu0 %v1686
    %v1705 = vpop.f32.mrf.mxu0
    %v1706 = vadd.f32 0.0, %v1705
    %1707 = vdwg.mxu0
    %1708 = vmatpush.msra.mxu0 0.0
    %1709 = vmatpush.msra.mxu0 0.0
    %1710 = vmatpush.msra.mxu0 0.0
    %1711 = vmatpush.msra.mxu0 0.0
    %1712 = vmatpush.msra.mxu0 0.0
    %1713 = vmatpush.msra.mxu0 0.0
    %1714 = vmatpush.msra.mxu0 0.0
    %1715 = vmatpush.msra.mxu0 0.0
    %1716 = vmatpush.msra.mxu0 %v788
    %1717 = vmatpush.msra.mxu0 %v786
    %1718 = vmatpush.msra.mxu0 %v784
    %1719 = vmatpush.msra.mxu0 %v782
    %1720 = vmatpush.msra.mxu0 %v780
    %1721 = vmatpush.msra.mxu0 %v778
    %1722 = vmatpush.msra.mxu0 %v776
    %1723 = vmatpush.msra.mxu0 %v774
    %1724 = vmatmul.f32.gmra.mxu0 %v1686
    %v1725 = vpop.f32.mrf.mxu0
    %v1726 = vadd.f32 0.0, %v1725
    %1727 = vdwg.mxu0
    %v1728 = vadd.f32 %v706, %v1706
    %v1729 = vadd.f32 %v750, %v1726
    %v1730 = vxor.u32 %v1728, 2147483648
    %v1731 = vmul.f32 %v1730, 1.442695
    %v1732 = vpow.pop %v1731
    %v1733 = vadd.f32 %v1732, 1.0
    %v1734 = vrcp.pop %v1733
    %v1735 = vmul.f32 %v1733, %v1734
    %v1736 = vsub.f32 1.0, %v1735
    %v1737 = vmul.f32 %v1734, %v1736
    %v1738 = vadd.f32 %v1734, %v1737
    %vm1739 = vweird.f32 %v1733
    %vm1740 = vweird.f32 %v1734
    %vm1741 = vmor %vm1739, %vm1740
    %v1742 = vsel %vm1741, %v1734, %v1738
    %v1743 = vand.u32 2147483647, %v1733
    %vm1744 = vcmp.eq.f32.partialorder %v1743, 8.507059e+37
    %v1745 = vand.u32 %v1733, 2147483648
    %v1746 = vor.u32 1.1754944e-38, %v1745
    %v1747 = vsel %vm1744, %v1746, %v1742
    %v1748 = vmul.f32 1.0, %v1747
    %v1749 = vtanh.pop %v1728
    %v1750 = vxor.u32 %v1729, 2147483648
    %v1751 = vmul.f32 %v1750, 1.442695
    %v1752 = vpow.pop %v1751
    %v1753 = vadd.f32 %v1752, 1.0
    %v1754 = vrcp.pop %v1753
    %v1755 = vmul.f32 %v1753, %v1754
    %v1756 = vsub.f32 1.0, %v1755
    %v1757 = vmul.f32 %v1754, %v1756
    %v1758 = vadd.f32 %v1754, %v1757
    %vm1759 = vweird.f32 %v1753
    %vm1760 = vweird.f32 %v1754
    %vm1761 = vmor %vm1759, %vm1760
    %v1762 = vsel %vm1761, %v1754, %v1758
    %v1763 = vand.u32 2147483647, %v1753
    %vm1764 = vcmp.eq.f32.partialorder %v1763, 8.507059e+37
    %v1765 = vand.u32 %v1753, 2147483648
    %v1766 = vor.u32 1.1754944e-38, %v1765
    %v1767 = vsel %vm1764, %v1766, %v1762
    %v1768 = vmul.f32 1.0, %v1767
    %v1769 = vtanh.pop %v1729
    %v1770 = vmul.f32 %v1748, %v1652
    %1772 = vrot.lane.b32.xlu0 %v1749, 64
    %v1773 = vpop.permute.xlu0 %1772
    %v1775 = vmul.f32 %v1748, %v1773
    %1777 = vrot.lane.b32.xlu0 %v1775, 32
    %v1778 = vpop.permute.xlu0 %1777
    %v1780 = vadd.f32 %v1770, %v1778
    %v1781 = vtanh.pop %v1780
    %1783 = vrot.lane.b32.xlu0 %v1781, 64
    %v1784 = vpop.permute.xlu0 %1783
    %v1786 = vmul.f32 %v1748, %v1784
    %v1787 = vmul.f32 %v1768, %v1669
    %1789 = vrot.lane.b32.xlu0 %v1769, 64
    %v1790 = vpop.permute.xlu0 %1789
    %v1792 = vmul.f32 %v1768, %v1790
    %1794 = vrot.lane.b32.xlu0 %v1792, 32
    %v1795 = vpop.permute.xlu0 %1794
    %v1797 = vadd.f32 %v1787, %v1795
    %v1798 = vtanh.pop %v1797
    %1800 = vrot.lane.b32.xlu0 %v1798, 64
    %v1801 = vpop.permute.xlu0 %1800
    %v1803 = vmul.f32 %v1768, %v1801
    %1805 = vrot.lane.b32.xlu0 %v1786, 32
    %v1806 = vpop.permute.xlu0 %1805
    %1809 = vrot.lane.b32.xlu0 %v1803, 64
    %v1810 = vpop.permute.xlu0 %1809
    %v1812 = vsel %vm442, %v1806, %v1810
    %v1814 = vsel %vm482, %v1812, 0
    %1816 = vmatpush.msra.mxu0 0.0
    %1817 = vmatpush.msra.mxu0 0.0
    %1818 = vmatpush.msra.mxu0 0.0
    %1819 = vmatpush.msra.mxu0 0.0
    %1820 = vmatpush.msra.mxu0 0.0
    %1821 = vmatpush.msra.mxu0 0.0
    %1822 = vmatpush.msra.mxu0 0.0
    %1823 = vmatpush.msra.mxu0 0.0
    %1824 = vmatpush.msra.mxu0 %v787
    %1825 = vmatpush.msra.mxu0 %v785
    %1826 = vmatpush.msra.mxu0 %v783
    %1827 = vmatpush.msra.mxu0 %v781
    %1828 = vmatpush.msra.mxu0 %v779
    %1829 = vmatpush.msra.mxu0 %v777
    %1830 = vmatpush.msra.mxu0 %v775
    %1831 = vmatpush.msra.mxu0 %v773
    %1832 = vmatmul.f32.gmra.mxu0 %v1814
    %v1833 = vpop.f32.mrf.mxu0
    %v1834 = vadd.f32 0.0, %v1833
    %1835 = vdwg.mxu0
    %1836 = vmatpush.msra.mxu0 0.0
    %1837 = vmatpush.msra.mxu0 0.0
    %1838 = vmatpush.msra.mxu0 0.0
    %1839 = vmatpush.msra.mxu0 0.0
    %1840 = vmatpush.msra.mxu0 0.0
    %1841 = vmatpush.msra.mxu0 0.0
    %1842 = vmatpush.msra.mxu0 0.0
    %1843 = vmatpush.msra.mxu0 0.0
    %1844 = vmatpush.msra.mxu0 %v788
    %1845 = vmatpush.msra.mxu0 %v786
    %1846 = vmatpush.msra.mxu0 %v784
    %1847 = vmatpush.msra.mxu0 %v782
    %1848 = vmatpush.msra.mxu0 %v780
    %1849 = vmatpush.msra.mxu0 %v778
    %1850 = vmatpush.msra.mxu0 %v776
    %1851 = vmatpush.msra.mxu0 %v774
    %1852 = vmatmul.f32.gmra.mxu0 %v1814
    %v1853 = vpop.f32.mrf.mxu0
    %v1854 = vadd.f32 0.0, %v1853
    %1855 = vdwg.mxu0
    %v1856 = vadd.f32 %v709, %v1834
    %v1857 = vadd.f32 %v747, %v1854
    %v1858 = vxor.u32 %v1856, 2147483648
    %v1859 = vmul.f32 %v1858, 1.442695
    %v1860 = vpow.pop %v1859
    %v1861 = vadd.f32 %v1860, 1.0
    %v1862 = vrcp.pop %v1861
    %v1863 = vmul.f32 %v1861, %v1862
    %v1864 = vsub.f32 1.0, %v1863
    %v1865 = vmul.f32 %v1862, %v1864
    %v1866 = vadd.f32 %v1862, %v1865
    %vm1867 = vweird.f32 %v1861
    %vm1868 = vweird.f32 %v1862
    %vm1869 = vmor %vm1867, %vm1868
    %v1870 = vsel %vm1869, %v1862, %v1866
    %v1871 = vand.u32 2147483647, %v1861
    %vm1872 = vcmp.eq.f32.partialorder %v1871, 8.507059e+37
    %v1873 = vand.u32 %v1861, 2147483648
    %v1874 = vor.u32 1.1754944e-38, %v1873
    %v1875 = vsel %vm1872, %v1874, %v1870
    %v1876 = vmul.f32 1.0, %v1875
    %v1877 = vtanh.pop %v1856
    %v1878 = vxor.u32 %v1857, 2147483648
    %v1879 = vmul.f32 %v1878, 1.442695
    %v1880 = vpow.pop %v1879
    %v1881 = vadd.f32 %v1880, 1.0
    %v1882 = vrcp.pop %v1881
    %v1883 = vmul.f32 %v1881, %v1882
    %v1884 = vsub.f32 1.0, %v1883
    %v1885 = vmul.f32 %v1882, %v1884
    %v1886 = vadd.f32 %v1882, %v1885
    %vm1887 = vweird.f32 %v1881
    %vm1888 = vweird.f32 %v1882
    %vm1889 = vmor %vm1887, %vm1888
    %v1890 = vsel %vm1889, %v1882, %v1886
    %v1891 = vand.u32 2147483647, %v1881
    %vm1892 = vcmp.eq.f32.partialorder %v1891, 8.507059e+37
    %v1893 = vand.u32 %v1881, 2147483648
    %v1894 = vor.u32 1.1754944e-38, %v1893
    %v1895 = vsel %vm1892, %v1894, %v1890
    %v1896 = vmul.f32 1.0, %v1895
    %v1897 = vtanh.pop %v1857
    %v1898 = vmul.f32 %v1876, %v1780
    %1900 = vrot.lane.b32.xlu0 %v1877, 64
    %v1901 = vpop.permute.xlu0 %1900
    %v1903 = vmul.f32 %v1876, %v1901
    %1905 = vrot.lane.b32.xlu0 %v1903, 32
    %v1906 = vpop.permute.xlu0 %1905
    %v1908 = vadd.f32 %v1898, %v1906
    %v1909 = vtanh.pop %v1908
    %1911 = vrot.lane.b32.xlu0 %v1909, 64
    %v1912 = vpop.permute.xlu0 %1911
    %v1914 = vmul.f32 %v1876, %v1912
    %v1915 = vmul.f32 %v1896, %v1797
    %1917 = vrot.lane.b32.xlu0 %v1897, 64
    %v1918 = vpop.permute.xlu0 %1917
    %v1920 = vmul.f32 %v1896, %v1918
    %1922 = vrot.lane.b32.xlu0 %v1920, 32
    %v1923 = vpop.permute.xlu0 %1922
    %v1925 = vadd.f32 %v1915, %v1923
    %v1926 = vtanh.pop %v1925
    %1928 = vrot.lane.b32.xlu0 %v1926, 64
    %v1929 = vpop.permute.xlu0 %1928
    %v1931 = vmul.f32 %v1896, %v1929
    %1933 = vrot.lane.b32.xlu0 %v1914, 32
    %v1934 = vpop.permute.xlu0 %1933
    %1937 = vrot.lane.b32.xlu0 %v1931, 64
    %v1938 = vpop.permute.xlu0 %1937
    %v1940 = vsel %vm442, %v1934, %v1938
    %v1942 = vsel %vm482, %v1940, 0
    %1944 = vmatpush.msra.mxu0 0.0
    %1945 = vmatpush.msra.mxu0 0.0
    %1946 = vmatpush.msra.mxu0 0.0
    %1947 = vmatpush.msra.mxu0 0.0
    %1948 = vmatpush.msra.mxu0 0.0
    %1949 = vmatpush.msra.mxu0 0.0
    %1950 = vmatpush.msra.mxu0 0.0
    %1951 = vmatpush.msra.mxu0 0.0
    %1952 = vmatpush.msra.mxu0 %v787
    %1953 = vmatpush.msra.mxu0 %v785
    %1954 = vmatpush.msra.mxu0 %v783
    %1955 = vmatpush.msra.mxu0 %v781
    %1956 = vmatpush.msra.mxu0 %v779
    %1957 = vmatpush.msra.mxu0 %v777
    %1958 = vmatpush.msra.mxu0 %v775
    %1959 = vmatpush.msra.mxu0 %v773
    %1960 = vmatmul.f32.gmra.mxu0 %v1942
    %v1961 = vpop.f32.mrf.mxu0
    %v1962 = vadd.f32 0.0, %v1961
    %1963 = vdwg.mxu0
    %1964 = vmatpush.msra.mxu0 0.0
    %1965 = vmatpush.msra.mxu0 0.0
    %1966 = vmatpush.msra.mxu0 0.0
    %1967 = vmatpush.msra.mxu0 0.0
    %1968 = vmatpush.msra.mxu0 0.0
    %1969 = vmatpush.msra.mxu0 0.0
    %1970 = vmatpush.msra.mxu0 0.0
    %1971 = vmatpush.msra.mxu0 0.0
    %1972 = vmatpush.msra.mxu0 %v788
    %1973 = vmatpush.msra.mxu0 %v786
    %1974 = vmatpush.msra.mxu0 %v784
    %1975 = vmatpush.msra.mxu0 %v782
    %1976 = vmatpush.msra.mxu0 %v780
    %1977 = vmatpush.msra.mxu0 %v778
    %1978 = vmatpush.msra.mxu0 %v776
    %1979 = vmatpush.msra.mxu0 %v774
    %1980 = vmatmul.f32.gmra.mxu0 %v1942
    %v1981 = vpop.f32.mrf.mxu0
    %v1982 = vadd.f32 0.0, %v1981
    %1983 = vdwg.mxu0
    %v1984 = vadd.f32 %v712, %v1962
    %v1985 = vadd.f32 %v744, %v1982
    %v1986 = vxor.u32 %v1984, 2147483648
    %v1987 = vmul.f32 %v1986, 1.442695
    %v1988 = vpow.pop %v1987
    %v1989 = vadd.f32 %v1988, 1.0
    %v1990 = vrcp.pop %v1989
    %v1991 = vmul.f32 %v1989, %v1990
    %v1992 = vsub.f32 1.0, %v1991
    %v1993 = vmul.f32 %v1990, %v1992
    %v1994 = vadd.f32 %v1990, %v1993
    %vm1995 = vweird.f32 %v1989
    %vm1996 = vweird.f32 %v1990
    %vm1997 = vmor %vm1995, %vm1996
    %v1998 = vsel %vm1997, %v1990, %v1994
    %v1999 = vand.u32 2147483647, %v1989
    %vm2000 = vcmp.eq.f32.partialorder %v1999, 8.507059e+37
    %v2001 = vand.u32 %v1989, 2147483648
    %v2002 = vor.u32 1.1754944e-38, %v2001
    %v2003 = vsel %vm2000, %v2002, %v1998
    %v2004 = vmul.f32 1.0, %v2003
    %v2005 = vtanh.pop %v1984
    %v2006 = vxor.u32 %v1985, 2147483648
    %v2007 = vmul.f32 %v2006, 1.442695
    %v2008 = vpow.pop %v2007
    %v2009 = vadd.f32 %v2008, 1.0
    %v2010 = vrcp.pop %v2009
    %v2011 = vmul.f32 %v2009, %v2010
    %v2012 = vsub.f32 1.0, %v2011
    %v2013 = vmul.f32 %v2010, %v2012
    %v2014 = vadd.f32 %v2010, %v2013
    %vm2015 = vweird.f32 %v2009
    %vm2016 = vweird.f32 %v2010
    %vm2017 = vmor %vm2015, %vm2016
    %v2018 = vsel %vm2017, %v2010, %v2014
    %v2019 = vand.u32 2147483647, %v2009
    %vm2020 = vcmp.eq.f32.partialorder %v2019, 8.507059e+37
    %v2021 = vand.u32 %v2009, 2147483648
    %v2022 = vor.u32 1.1754944e-38, %v2021
    %v2023 = vsel %vm2020, %v2022, %v2018
    %v2024 = vmul.f32 1.0, %v2023
    %v2025 = vtanh.pop %v1985
    %v2026 = vmul.f32 %v2004, %v1908
    %2028 = vrot.lane.b32.xlu0 %v2005, 64
    %v2029 = vpop.permute.xlu0 %2028
    %v2031 = vmul.f32 %v2004, %v2029
    %2033 = vrot.lane.b32.xlu0 %v2031, 32
    %v2034 = vpop.permute.xlu0 %2033
    %v2036 = vadd.f32 %v2026, %v2034
    %v2037 = vtanh.pop %v2036
    %2039 = vrot.lane.b32.xlu0 %v2037, 64
    %v2040 = vpop.permute.xlu0 %2039
    %v2042 = vmul.f32 %v2004, %v2040
    %v2043 = vmul.f32 %v2024, %v1925
    %2045 = vrot.lane.b32.xlu0 %v2025, 64
    %v2046 = vpop.permute.xlu0 %2045
    %v2048 = vmul.f32 %v2024, %v2046
    %2050 = vrot.lane.b32.xlu0 %v2048, 32
    %v2051 = vpop.permute.xlu0 %2050
    %v2053 = vadd.f32 %v2043, %v2051
    %v2054 = vtanh.pop %v2053
    %2056 = vrot.lane.b32.xlu0 %v2054, 64
    %v2057 = vpop.permute.xlu0 %2056
    %v2059 = vmul.f32 %v2024, %v2057
    %2061 = vrot.lane.b32.xlu0 %v2042, 32
    %v2062 = vpop.permute.xlu0 %2061
    %2065 = vrot.lane.b32.xlu0 %v2059, 64
    %v2066 = vpop.permute.xlu0 %2065
    %v2068 = vsel %vm442, %v2062, %v2066
    %v2070 = vsel %vm482, %v2068, 0
    %2072 = vmatpush.msra.mxu0 0.0
    %2073 = vmatpush.msra.mxu0 0.0
    %2074 = vmatpush.msra.mxu0 0.0
    %2075 = vmatpush.msra.mxu0 0.0
    %2076 = vmatpush.msra.mxu0 0.0
    %2077 = vmatpush.msra.mxu0 0.0
    %2078 = vmatpush.msra.mxu0 0.0
    %2079 = vmatpush.msra.mxu0 0.0
    %2080 = vmatpush.msra.mxu0 %v787
    %2081 = vmatpush.msra.mxu0 %v785
    %2082 = vmatpush.msra.mxu0 %v783
    %2083 = vmatpush.msra.mxu0 %v781
    %2084 = vmatpush.msra.mxu0 %v779
    %2085 = vmatpush.msra.mxu0 %v777
    %2086 = vmatpush.msra.mxu0 %v775
    %2087 = vmatpush.msra.mxu0 %v773
    %2088 = vmatmul.f32.gmra.mxu0 %v2070
    %v2089 = vpop.f32.mrf.mxu0
    %v2090 = vadd.f32 0.0, %v2089
    %2091 = vdwg.mxu0
    %2092 = vmatpush.msra.mxu0 0.0
    %2093 = vmatpush.msra.mxu0 0.0
    %2094 = vmatpush.msra.mxu0 0.0
    %2095 = vmatpush.msra.mxu0 0.0
    %2096 = vmatpush.msra.mxu0 0.0
    %2097 = vmatpush.msra.mxu0 0.0
    %2098 = vmatpush.msra.mxu0 0.0
    %2099 = vmatpush.msra.mxu0 0.0
    %2100 = vmatpush.msra.mxu0 %v788
    %2101 = vmatpush.msra.mxu0 %v786
    %2102 = vmatpush.msra.mxu0 %v784
    %2103 = vmatpush.msra.mxu0 %v782
    %2104 = vmatpush.msra.mxu0 %v780
    %2105 = vmatpush.msra.mxu0 %v778
    %2106 = vmatpush.msra.mxu0 %v776
    %2107 = vmatpush.msra.mxu0 %v774
    %2108 = vmatmul.f32.gmra.mxu0 %v2070
    %v2109 = vpop.f32.mrf.mxu0
    %v2110 = vadd.f32 0.0, %v2109
    %2111 = vdwg.mxu0
    %v2112 = vadd.f32 %v715, %v2090
    %v2113 = vadd.f32 %v741, %v2110
    %v2114 = vxor.u32 %v2112, 2147483648
    %v2115 = vmul.f32 %v2114, 1.442695
    %v2116 = vpow.pop %v2115
    %v2117 = vadd.f32 %v2116, 1.0
    %v2118 = vrcp.pop %v2117
    %v2119 = vmul.f32 %v2117, %v2118
    %v2120 = vsub.f32 1.0, %v2119
    %v2121 = vmul.f32 %v2118, %v2120
    %v2122 = vadd.f32 %v2118, %v2121
    %vm2123 = vweird.f32 %v2117
    %vm2124 = vweird.f32 %v2118
    %vm2125 = vmor %vm2123, %vm2124
    %v2126 = vsel %vm2125, %v2118, %v2122
    %v2127 = vand.u32 2147483647, %v2117
    %vm2128 = vcmp.eq.f32.partialorder %v2127, 8.507059e+37
    %v2129 = vand.u32 %v2117, 2147483648
    %v2130 = vor.u32 1.1754944e-38, %v2129
    %v2131 = vsel %vm2128, %v2130, %v2126
    %v2132 = vmul.f32 1.0, %v2131
    %v2133 = vtanh.pop %v2112
    %v2134 = vxor.u32 %v2113, 2147483648
    %v2135 = vmul.f32 %v2134, 1.442695
    %v2136 = vpow.pop %v2135
    %v2137 = vadd.f32 %v2136, 1.0
    %v2138 = vrcp.pop %v2137
    %v2139 = vmul.f32 %v2137, %v2138
    %v2140 = vsub.f32 1.0, %v2139
    %v2141 = vmul.f32 %v2138, %v2140
    %v2142 = vadd.f32 %v2138, %v2141
    %vm2143 = vweird.f32 %v2137
    %vm2144 = vweird.f32 %v2138
    %vm2145 = vmor %vm2143, %vm2144
    %v2146 = vsel %vm2145, %v2138, %v2142
    %v2147 = vand.u32 2147483647, %v2137
    %vm2148 = vcmp.eq.f32.partialorder %v2147, 8.507059e+37
    %v2149 = vand.u32 %v2137, 2147483648
    %v2150 = vor.u32 1.1754944e-38, %v2149
    %v2151 = vsel %vm2148, %v2150, %v2146
    %v2152 = vmul.f32 1.0, %v2151
    %v2153 = vtanh.pop %v2113
    %v2154 = vmul.f32 %v2132, %v2036
    %2156 = vrot.lane.b32.xlu0 %v2133, 64
    %v2157 = vpop.permute.xlu0 %2156
    %v2159 = vmul.f32 %v2132, %v2157
    %2161 = vrot.lane.b32.xlu0 %v2159, 32
    %v2162 = vpop.permute.xlu0 %2161
    %v2164 = vadd.f32 %v2154, %v2162
    %v2165 = vtanh.pop %v2164
    %2167 = vrot.lane.b32.xlu0 %v2165, 64
    %v2168 = vpop.permute.xlu0 %2167
    %v2170 = vmul.f32 %v2132, %v2168
    %v2171 = vmul.f32 %v2152, %v2053
    %2173 = vrot.lane.b32.xlu0 %v2153, 64
    %v2174 = vpop.permute.xlu0 %2173
    %v2176 = vmul.f32 %v2152, %v2174
    %2178 = vrot.lane.b32.xlu0 %v2176, 32
    %v2179 = vpop.permute.xlu0 %2178
    %v2181 = vadd.f32 %v2171, %v2179
    %v2182 = vtanh.pop %v2181
    %2184 = vrot.lane.b32.xlu0 %v2182, 64
    %v2185 = vpop.permute.xlu0 %2184
    %v2187 = vmul.f32 %v2152, %v2185
    %2189 = vrot.lane.b32.xlu0 %v2170, 32
    %v2190 = vpop.permute.xlu0 %2189
    %2193 = vrot.lane.b32.xlu0 %v2187, 64
    %v2194 = vpop.permute.xlu0 %2193
    %v2196 = vsel %vm442, %v2190, %v2194
    %v2198 = vsel %vm482, %v2196, 0
    %2200 = vmatpush.msra.mxu0 0.0
    %2201 = vmatpush.msra.mxu0 0.0
    %2202 = vmatpush.msra.mxu0 0.0
    %2203 = vmatpush.msra.mxu0 0.0
    %2204 = vmatpush.msra.mxu0 0.0
    %2205 = vmatpush.msra.mxu0 0.0
    %2206 = vmatpush.msra.mxu0 0.0
    %2207 = vmatpush.msra.mxu0 0.0
    %2208 = vmatpush.msra.mxu0 %v787
    %2209 = vmatpush.msra.mxu0 %v785
    %2210 = vmatpush.msra.mxu0 %v783
    %2211 = vmatpush.msra.mxu0 %v781
    %2212 = vmatpush.msra.mxu0 %v779
    %2213 = vmatpush.msra.mxu0 %v777
    %2214 = vmatpush.msra.mxu0 %v775
    %2215 = vmatpush.msra.mxu0 %v773
    %2216 = vmatmul.f32.gmra.mxu0 %v2198
    %v2217 = vpop.f32.mrf.mxu0
    %v2218 = vadd.f32 0.0, %v2217
    %2219 = vdwg.mxu0
    %2220 = vmatpush.msra.mxu0 0.0
    %2221 = vmatpush.msra.mxu0 0.0
    %2222 = vmatpush.msra.mxu0 0.0
    %2223 = vmatpush.msra.mxu0 0.0
    %2224 = vmatpush.msra.mxu0 0.0
    %2225 = vmatpush.msra.mxu0 0.0
    %2226 = vmatpush.msra.mxu0 0.0
    %2227 = vmatpush.msra.mxu0 0.0
    %2228 = vmatpush.msra.mxu0 %v788
    %2229 = vmatpush.msra.mxu0 %v786
    %2230 = vmatpush.msra.mxu0 %v784
    %2231 = vmatpush.msra.mxu0 %v782
    %2232 = vmatpush.msra.mxu0 %v780
    %2233 = vmatpush.msra.mxu0 %v778
    %2234 = vmatpush.msra.mxu0 %v776
    %2235 = vmatpush.msra.mxu0 %v774
    %2236 = vmatmul.f32.gmra.mxu0 %v2198
    %v2237 = vpop.f32.mrf.mxu0
    %v2238 = vadd.f32 0.0, %v2237
    %2239 = vdwg.mxu0
    %v2240 = vadd.f32 %v718, %v2218
    %v2241 = vadd.f32 %v738, %v2238
    %v2242 = vxor.u32 %v2240, 2147483648
    %v2243 = vmul.f32 %v2242, 1.442695
    %v2244 = vpow.pop %v2243
    %v2245 = vadd.f32 %v2244, 1.0
    %v2246 = vrcp.pop %v2245
    %v2247 = vmul.f32 %v2245, %v2246
    %v2248 = vsub.f32 1.0, %v2247
    %v2249 = vmul.f32 %v2246, %v2248
    %v2250 = vadd.f32 %v2246, %v2249
    %vm2251 = vweird.f32 %v2245
    %vm2252 = vweird.f32 %v2246
    %vm2253 = vmor %vm2251, %vm2252
    %v2254 = vsel %vm2253, %v2246, %v2250
    %v2255 = vand.u32 2147483647, %v2245
    %vm2256 = vcmp.eq.f32.partialorder %v2255, 8.507059e+37
    %v2257 = vand.u32 %v2245, 2147483648
    %v2258 = vor.u32 1.1754944e-38, %v2257
    %v2259 = vsel %vm2256, %v2258, %v2254
    %v2260 = vmul.f32 1.0, %v2259
    %v2261 = vtanh.pop %v2240
    %v2262 = vxor.u32 %v2241, 2147483648
    %v2263 = vmul.f32 %v2262, 1.442695
    %v2264 = vpow.pop %v2263
    %v2265 = vadd.f32 %v2264, 1.0
    %v2266 = vrcp.pop %v2265
    %v2267 = vmul.f32 %v2265, %v2266
    %v2268 = vsub.f32 1.0, %v2267
    %v2269 = vmul.f32 %v2266, %v2268
    %v2270 = vadd.f32 %v2266, %v2269
    %vm2271 = vweird.f32 %v2265
    %vm2272 = vweird.f32 %v2266
    %vm2273 = vmor %vm2271, %vm2272
    %v2274 = vsel %vm2273, %v2266, %v2270
    %v2275 = vand.u32 2147483647, %v2265
    %vm2276 = vcmp.eq.f32.partialorder %v2275, 8.507059e+37
    %v2277 = vand.u32 %v2265, 2147483648
    %v2278 = vor.u32 1.1754944e-38, %v2277
    %v2279 = vsel %vm2276, %v2278, %v2274
    %v2280 = vmul.f32 1.0, %v2279
    %v2281 = vtanh.pop %v2241
    %v2282 = vmul.f32 %v2260, %v2164
    %2284 = vrot.lane.b32.xlu0 %v2261, 64
    %v2285 = vpop.permute.xlu0 %2284
    %v2287 = vmul.f32 %v2260, %v2285
    %2289 = vrot.lane.b32.xlu0 %v2287, 32
    %v2290 = vpop.permute.xlu0 %2289
    %v2292 = vadd.f32 %v2282, %v2290
    %v2293 = vtanh.pop %v2292
    %2295 = vrot.lane.b32.xlu0 %v2293, 64
    %v2296 = vpop.permute.xlu0 %2295
    %v2298 = vmul.f32 %v2260, %v2296
    %v2299 = vmul.f32 %v2280, %v2181
    %2301 = vrot.lane.b32.xlu0 %v2281, 64
    %v2302 = vpop.permute.xlu0 %2301
    %v2304 = vmul.f32 %v2280, %v2302
    %2306 = vrot.lane.b32.xlu0 %v2304, 32
    %v2307 = vpop.permute.xlu0 %2306
    %v2309 = vadd.f32 %v2299, %v2307
    %v2310 = vtanh.pop %v2309
    %2312 = vrot.lane.b32.xlu0 %v2310, 64
    %v2313 = vpop.permute.xlu0 %2312
    %v2315 = vmul.f32 %v2280, %v2313
    %2317 = vrot.lane.b32.xlu0 %v2315, 32
    %v2318 = vpop.permute.xlu0 %2317
    %2321 = vrot.lane.b32.xlu0 %v2298, 64
    %v2322 = vpop.permute.xlu0 %2321
    %v2324 = vsel %vm442, %v2318, %v2322
    %2325 = vrot.lane.b32.xlu0 %v2315, 64
    %v2326 = vpop.permute.xlu0 %2325
    %v2328 = vsel %vm442, %v910, %v2326
    %v2329 = vsel %vm442, %v1038, %v2194
    %v2330 = vsel %vm442, %v1166, %v2066
    %v2331 = vsel %vm442, %v1294, %v1938
    %v2332 = vsel %vm442, %v1422, %v1810
    %v2333 = vsel %vm442, %v1550, %v1682
    %v2334 = vsel %vm442, %v1678, %v1554
    %v2335 = vsel %vm442, %v1806, %v1426
    %v2336 = vsel %vm442, %v1934, %v1298
    %v2337 = vsel %vm442, %v2062, %v1170
    %v2338 = vsel %vm442, %v2190, %v1042
    %2339 = vrot.lane.b32.xlu0 %v2298, 32
    %v2340 = vpop.permute.xlu0 %2339
    %v2342 = vsel %vm442, %v2340, %v914
    %v2343 = vmul.f32 %v2328, %v2324
    %v2344 = vsel %vm482, %v2343, 0.0
    %2345 = vadd.xlane.f32.xlu0 %v2344
    %v2346 = vpop.xlane.xlu0 %2345
    %v2347 = vmul.f32 %v2329, %v2324
    %v2348 = vsel %vm482, %v2347, 0.0
    %2349 = vadd.xlane.f32.xlu0 %v2348
    %v2350 = vpop.xlane.xlu0 %2349
    %v2351 = vmul.f32 %v2330, %v2324
    %v2352 = vsel %vm482, %v2351, 0.0
    %2353 = vadd.xlane.f32.xlu0 %v2352
    %v2354 = vpop.xlane.xlu0 %2353
    %v2355 = vmul.f32 %v2331, %v2324
    %v2356 = vsel %vm482, %v2355, 0.0
    %2357 = vadd.xlane.f32.xlu0 %v2356
    %v2358 = vpop.xlane.xlu0 %2357
    %v2359 = vmul.f32 %v2332, %v2324
    %v2360 = vsel %vm482, %v2359, 0.0
    %2361 = vadd.xlane.f32.xlu0 %v2360
    %v2362 = vpop.xlane.xlu0 %2361
    %v2363 = vmul.f32 %v2333, %v2324
    %v2364 = vsel %vm482, %v2363, 0.0
    %2365 = vadd.xlane.f32.xlu0 %v2364
    %v2366 = vpop.xlane.xlu0 %2365
    %v2367 = vmul.f32 %v2334, %v2324
    %v2368 = vsel %vm482, %v2367, 0.0
    %2369 = vadd.xlane.f32.xlu0 %v2368
    %v2370 = vpop.xlane.xlu0 %2369
    %v2371 = vmul.f32 %v2335, %v2324
    %v2372 = vsel %vm482, %v2371, 0.0
    %2373 = vadd.xlane.f32.xlu0 %v2372
    %v2374 = vpop.xlane.xlu0 %2373
    %v2375 = vmul.f32 %v2336, %v2324
    %v2376 = vsel %vm482, %v2375, 0.0
    %2377 = vadd.xlane.f32.xlu0 %v2376
    %v2378 = vpop.xlane.xlu0 %2377
    %v2379 = vmul.f32 %v2337, %v2324
    %v2380 = vsel %vm482, %v2379, 0.0
    %2381 = vadd.xlane.f32.xlu0 %v2380
    %v2382 = vpop.xlane.xlu0 %2381
    %v2383 = vmul.f32 %v2338, %v2324
    %v2384 = vsel %vm482, %v2383, 0.0
    %2385 = vadd.xlane.f32.xlu0 %v2384
    %v2386 = vpop.xlane.xlu0 %2385
    %v2387 = vmul.f32 %v2342, %v2324
    %v2388 = vsel %vm482, %v2387, 0.0
    %2389 = vadd.xlane.f32.xlu0 %v2388
    %v2390 = vpop.xlane.xlu0 %2389
    %vm2391 = vcmask 7168
    %v2392 = vsel %vm2391, %v2346, %v2350
    %vm2393 = vcmask 15360
    %v2394 = vsel %vm2393, %v2392, %v2354
    %vm2395 = vcmask 23552
    %v2396 = vsel %vm2395, %v2394, %v2358
    %vm2397 = vcmask 31744
    %v2398 = vsel %vm2397, %v2396, %v2362
    %vm2399 = vcmask 39936
    %v2400 = vsel %vm2399, %v2398, %v2366
    %vm2401 = vcmask 48128
    %v2402 = vsel %vm2401, %v2400, %v2370
    %vm2403 = vcmask 56320
    %v2404 = vsel %vm2403, %v2402, %v2374
    %vm2405 = vcmask 64512
    %v2406 = vsel %vm2405, %v2404, %v2378
    %vm2407 = vcmask 72704
    %v2408 = vsel %vm2407, %v2406, %v2382
    %vm2409 = vcmask 80896
    %v2410 = vsel %vm2409, %v2408, %v2386
    %vm2411 = vcmask 89088
    %v2412 = vsel %vm2411, %v2410, %v2390
    %vm2413 = vcmask 97280
    %v2414 = vsel %vm2413, %v2412, -inf
    %2415 = vmax.xlane.f32.xlu0 %v2414
    %v2416 = vpop.xlane.xlu0 %2415
    %v2417 = vsub.f32 %v2412, %v2416
    %v2418 = vmul.f32 %v2417, 1.442695
    %v2419 = vpow.pop %v2418
    %v2420 = vsel %vm2413, %v2419, 0.0
    %2421 = vadd.xlane.f32.xlu0 %v2420
    %v2422 = vpop.xlane.xlu0 %2421
    %v2423 = vrcp.pop %v2422
    %v2424 = vmul.f32 %v2419, %v2423
    %2426 = vset.pattern.permute.xlu0 0
    %2427 = vperm.xlu0 %2426, %v2424
    %v2428 = vpop.permute.xlu0 %2427
    %v2430 = vmul.f32 %v2328, %v2428
    %2431 = vset.pattern.permute.xlu0 1
    %2432 = vperm.xlu0 %2431, %v2424
    %v2433 = vpop.permute.xlu0 %2432
    %v2435 = vmul.f32 %v2329, %v2433
    %v2436 = vadd.f32 %v2430, %v2435
    %2437 = vset.pattern.permute.xlu0 2
    %2438 = vperm.xlu0 %2437, %v2424
    %v2439 = vpop.permute.xlu0 %2438
    %v2441 = vmul.f32 %v2330, %v2439
    %v2442 = vadd.f32 %v2436, %v2441
    %2443 = vset.pattern.permute.xlu0 3
    %2444 = vperm.xlu0 %2443, %v2424
    %v2445 = vpop.permute.xlu0 %2444
    %v2447 = vmul.f32 %v2331, %v2445
    %v2448 = vadd.f32 %v2442, %v2447
    %2449 = vset.pattern.permute.xlu0 4
    %2450 = vperm.xlu0 %2449, %v2424
    %v2451 = vpop.permute.xlu0 %2450
    %v2453 = vmul.f32 %v2332, %v2451
    %v2454 = vadd.f32 %v2448, %v2453
    %2455 = vset.pattern.permute.xlu0 5
    %2456 = vperm.xlu0 %2455, %v2424
    %v2457 = vpop.permute.xlu0 %2456
    %v2459 = vmul.f32 %v2333, %v2457
    %v2460 = vadd.f32 %v2454, %v2459
    %2461 = vset.pattern.permute.xlu0 6
    %2462 = vperm.xlu0 %2461, %v2424
    %v2463 = vpop.permute.xlu0 %2462
    %v2465 = vmul.f32 %v2334, %v2463
    %v2466 = vadd.f32 %v2460, %v2465
    %2467 = vset.pattern.permute.xlu0 7
    %2468 = vperm.xlu0 %2467, %v2424
    %v2469 = vpop.permute.xlu0 %2468
    %v2471 = vmul.f32 %v2335, %v2469
    %v2472 = vadd.f32 %v2466, %v2471
    %2473 = vset.pattern.permute.xlu0 8
    %2474 = vperm.xlu0 %2473, %v2424
    %v2475 = vpop.permute.xlu0 %2474
    %v2477 = vmul.f32 %v2336, %v2475
    %v2478 = vadd.f32 %v2472, %v2477
    %2479 = vset.pattern.permute.xlu0 9
    %2480 = vperm.xlu0 %2479, %v2424
    %v2481 = vpop.permute.xlu0 %2480
    %v2483 = vmul.f32 %v2337, %v2481
    %v2484 = vadd.f32 %v2478, %v2483
    %2485 = vset.pattern.permute.xlu0 10
    %2486 = vperm.xlu0 %2485, %v2424
    %v2487 = vpop.permute.xlu0 %2486
    %v2489 = vmul.f32 %v2338, %v2487
    %v2490 = vadd.f32 %v2484, %v2489
    %2491 = vset.pattern.permute.xlu0 11
    %2492 = vperm.xlu0 %2491, %v2424
    %v2493 = vpop.permute.xlu0 %2492
    %v2495 = vmul.f32 %v2342, %v2493
    %v2496 = vadd.f32 %v2490, %v2495
    %2498 = vrot.lane.b32.xlu0 %v2496, 48
    %v2499 = vpop.permute.xlu0 %2498
    %v2501 = vsel %vm458, %v620, %v2499
    %v2502 = vtanh.pop %v2501
    %v2503 = vld [vmem:[%s7] sm:$0xff]
    %v2504 = vld [vmem:[%s7 + $0x8] sm:$0xff]
    %v2505 = vld [vmem:[%s7 + $0x10] sm:$0xff]
    %v2506 = vld [vmem:[%s7 + $0x18] sm:$0xff]
    %v2507 = vld [vmem:[%s7 + $0x20] sm:$0xff]
    %v2508 = vld [vmem:[%s7 + $0x28] sm:$0xff]
    %v2509 = vld [vmem:[%s7 + $0x30] sm:$0xff]
    %v2510 = vld [vmem:[%s7 + $0x38] sm:$0xff]
    %v2511 = vld [vmem:[%s7 + $0x40] sm:$0xff]
    %v2512 = vld [vmem:[%s7 + $0x48] sm:$0xff]
    %v2513 = vld [vmem:[%s7 + $0x50] sm:$0xff]
    %v2514 = vld [vmem:[%s7 + $0x58] sm:$0xff]
    %v2515 = vld [vmem:[%s7 + $0x60] sm:$0xff]
    %v2516 = vld [vmem:[%s7 + $0x68] sm:$0xff]
    %v2517 = vld [vmem:[%s8] sm:$0x1]
    %v2519 = vperm.slane %v2517, 0
    %vm2521 = vcmask 916480
    %v2523 = vsel %vm2521, %v2502, 0
    %2525 = vmatpush.msra.mxu0 0.0
    %2526 = vmatpush.msra.mxu0 0.0
    %2527 = vmatpush.msra.mxu0 %v2516
    %2528 = vmatpush.msra.mxu0 %v2515
    %2529 = vmatpush.msra.mxu0 %v2514
    %2530 = vmatpush.msra.mxu0 %v2513
    %2531 = vmatpush.msra.mxu0 %v2512
    %2532 = vmatpush.msra.mxu0 %v2511
    %2533 = vmatpush.msra.mxu0 %v2510
    %2534 = vmatpush.msra.mxu0 %v2509
    %2535 = vmatpush.msra.mxu0 %v2508
    %2536 = vmatpush.msra.mxu0 %v2507
    %2537 = vmatpush.msra.mxu0 %v2506
    %2538 = vmatpush.msra.mxu0 %v2505
    %2539 = vmatpush.msra.mxu0 %v2504
    %2540 = vmatpush.msra.mxu0 %v2503
    %2541 = vmatmul.f32.gmra.mxu0 %v2523
    %v2542 = vpop.f32.mrf.mxu0
    %v2543 = vadd.f32 %v2519, %v2542
    %2544 = vdwg.mxu0
    %v2545 = vtanh.pop %v2543
    %v2546 = vld [vmem:[%s9] sm:$0xff]
    %v2547 = vld [vmem:[%s9 + $0x8] sm:$0xff]
    %v2548 = vld [vmem:[%s9 + $0x10] sm:$0xff]
    %v2549 = vld [vmem:[%s9 + $0x18] sm:$0xff]
    %v2550 = vld [vmem:[%s9 + $0x20] sm:$0xff]
    %v2551 = vld [vmem:[%s9 + $0x28] sm:$0xff]
    %v2552 = vld [vmem:[%s9 + $0x30] sm:$0xff]
    %v2553 = vld [vmem:[%s10] sm:$0x1]
    %v2555 = vperm.slane %v2553, 0
    %vm2557 = vcmask 457728
    %v2559 = vsel %vm2557, %v2545, 0
    %2561 = vmatpush.msra.mxu0 0.0
    %2562 = vmatpush.msra.mxu0 0.0
    %2563 = vmatpush.msra.mxu0 0.0
    %2564 = vmatpush.msra.mxu0 0.0
    %2565 = vmatpush.msra.mxu0 0.0
    %2566 = vmatpush.msra.mxu0 0.0
    %2567 = vmatpush.msra.mxu0 0.0
    %2568 = vmatpush.msra.mxu0 0.0
    %2569 = vmatpush.msra.mxu0 0.0
    %2570 = vmatpush.msra.mxu0 %v2552
    %2571 = vmatpush.msra.mxu0 %v2551
    %2572 = vmatpush.msra.mxu0 %v2550
    %2573 = vmatpush.msra.mxu0 %v2549
    %2574 = vmatpush.msra.mxu0 %v2548
    %2575 = vmatpush.msra.mxu0 %v2547
    %2576 = vmatpush.msra.mxu0 %v2546
    %2577 = vmatmul.f32.gmra.mxu0 %v2559
    %v2578 = vpop.f32.mrf.mxu0
    %v2579 = vadd.f32 %v2555, %v2578
    %2580 = vdwg.mxu0
    %2581 = vst.msk [vmem:[#allocation3] sm:$0xff] %vm2399, %v2579
    // Predicated region
    $region46: #{tpu_custom_call.1} parent=1 // pred_check
      _
    $region47: #{tpu_custom_call.1} parent=1 // pred_check_branch
      %2583 = sbr.rel (0) target = $region49
    $region48: #{tpu_custom_call.1} parent=1 // pred_region
      %2585 = vsyncadd [#allocation4], 0
      %s2587 = sshll.u32 [#allocation3], 4
      %s2588 = int_to_ptr.vmem [resolvable:$true] %s2587
      %s2589 = sshll.u32 %s11, 4
      %s2590 = int_to_ptr.hbm [resolvable:$true] %s2589
      %2592 = dma.vmem_to_hbm [thread:$0]  %s2588, 128, %s2590, [#allocation4]
    $region49: #{tpu_custom_call.1} parent=1 // pred_fallthru
      _
    // Predicated region
    $region50: #{tpu_custom_call.1} parent=1 // pred_check
      _
    $region51: #{tpu_custom_call.1} parent=1 // pred_check_branch
      %2594 = sbr.rel (0) target = $region53
    $region52: #{tpu_custom_call.1} parent=1 // pred_region
      %2596 = dma.done [#allocation4], 128
    $region53: #{tpu_custom_call.1} parent=1 // pred_fallthru
      _
    %2597 = vsyncpa [#allocation4], 1

</llo_original>
